<compile_context>
chip_gen: v6e
topology: v6e:2x2x1
jax: 0.10.0
libtpu: 0.0.40
codegen_flags: <defaults>
</compile_context>

<pallas_src>
import numpy as np

import jax
import jax.numpy as jnp
from jax.experimental import pallas as pl
from jax.experimental.pallas import tpu as pltpu


# ----------------------------------------------------------------------------
# Fused LeNet kernel: one image per grid step, everything stays on-chip.
# ----------------------------------------------------------------------------
def _lenet_kernel(x_ref, m1_ref, b1_ref, pr1_ref, pc1_ref,
                  m2_ref, b2_ref, pr2_ref, pc2_ref,
                  wfc1_ref, bfc1_ref, wfc2_ref, bfc2_ref,
                  wfc3_ref, bfc3_ref, out_ref, xpad_ref):
    dot = lambda a, b: jnp.dot(a, b, preferred_element_type=jnp.float32)

    # ---- conv1: 5x5, pad=2, 1->6 channels, + ReLU -------------------------
    # Pad columns to 32 in VMEM scratch; row padding is folded into m1.
    xpad_ref[...] = jnp.zeros((28, 32), jnp.float32)
    xpad_ref[:, 2:30] = x_ref[0]
    o1 = dot(m1_ref[0], xpad_ref[:, 0:28])
    for j in range(1, 5):
        o1 = o1 + dot(m1_ref[j], xpad_ref[:, j:j + 28])
    o1 = jnp.maximum(o1 + b1_ref[...], 0.0)                      # (6*28, 28)

    # ---- maxpool 2x2 via exact 0/1 selection matmuls ----------------------
    r1 = jnp.maximum(dot(pr1_ref[0], o1), dot(pr1_ref[1], o1))    # (6*14, 28)
    p1 = jnp.maximum(dot(r1, pc1_ref[0]), dot(r1, pc1_ref[1]))    # (6*14, 14)

    # ---- conv2: 5x5, no pad, 6->16 channels, + ReLU -----------------------
    o2 = dot(m2_ref[0], p1[:, 0:10])
    for j in range(1, 5):
        o2 = o2 + dot(m2_ref[j], p1[:, j:j + 10])
    o2 = jnp.maximum(o2 + b2_ref[...], 0.0)                      # (16*10, 10)

    # ---- maxpool 2x2 -------------------------------------------------------
    r2 = jnp.maximum(dot(pr2_ref[0], o2), dot(pr2_ref[1], o2))    # (16*5, 10)
    p2 = jnp.maximum(dot(r2, pc2_ref[0]), dot(r2, pc2_ref[1]))    # (16*5, 5)

    # ---- fc1 (400->120) + ReLU: torch flatten order folded into wfc1 ------
    p2t = p2.T                                                    # (5, 80)
    h = dot(p2t[0:1, :], wfc1_ref[0])
    for xk in range(1, 5):
        h = h + dot(p2t[xk:xk + 1, :], wfc1_ref[xk])
    h = jnp.maximum(h + bfc1_ref[...], 0.0)                       # (1, 120)

    # ---- fc2 (120->84) + ReLU, fc3 (84->10) --------------------------------
    h = jnp.maximum(dot(h, wfc2_ref[...]) + bfc2_ref[...], 0.0)   # (1, 84)
    out_ref[0] = dot(h, wfc3_ref[...]) + bfc3_ref[...]            # (1, 10)


def lenet_forward(prep, x):
    """Fused LeNet forward. x: (B, 1, 28, 28) f32 -> (B, 10) f32."""
    B = x.shape[0]
    assert x.shape[1:] == (1, 28, 28)
    x2 = x.reshape(B, 28, 28)

    out = pl.pallas_call(
        _lenet_kernel,
        out_shape=jax.ShapeDtypeStruct((B, 1, 10), jnp.float32),
        grid=(B,),
        in_specs=[
            pl.BlockSpec((1, 28, 28), lambda b: (b, 0, 0)),    # image
            pl.BlockSpec((5, 168, 28), lambda b: (0, 0, 0)),   # conv1 banded W
            pl.BlockSpec((168, 1), lambda b: (0, 0)),          # conv1 bias
            pl.BlockSpec((2, 84, 168), lambda b: (0, 0, 0)),   # pool1 row sel
            pl.BlockSpec((2, 28, 14), lambda b: (0, 0, 0)),    # pool1 col sel
            pl.BlockSpec((5, 160, 84), lambda b: (0, 0, 0)),   # conv2 banded W
            pl.BlockSpec((160, 1), lambda b: (0, 0)),          # conv2 bias
            pl.BlockSpec((2, 80, 160), lambda b: (0, 0, 0)),   # pool2 row sel
            pl.BlockSpec((2, 10, 5), lambda b: (0, 0, 0)),     # pool2 col sel
            pl.BlockSpec((5, 80, 120), lambda b: (0, 0, 0)),   # fc1 weight
            pl.BlockSpec((1, 120), lambda b: (0, 0)),          # fc1 bias
            pl.BlockSpec((120, 84), lambda b: (0, 0)),         # fc2 weight
            pl.BlockSpec((1, 84), lambda b: (0, 0)),           # fc2 bias
            pl.BlockSpec((84, 10), lambda b: (0, 0)),          # fc3 weight
            pl.BlockSpec((1, 10), lambda b: (0, 0)),           # fc3 bias
        ],
        out_specs=pl.BlockSpec((1, 1, 10), lambda b: (b, 0, 0)),
        scratch_shapes=[pltpu.VMEM((28, 32), jnp.float32)],
        compiler_params=pltpu.CompilerParams(
            dimension_semantics=("parallel",)),
    )(x2, prep["m1"], prep["b1"], prep["pr1"], prep["pc1"],
      prep["m2"], prep["b2"], prep["pr2"], prep["pc2"],
      prep["wfc1"], prep["bfc1"], prep["wfc2"], prep["bfc2"],
      prep["wfc3"], prep["bfc3"])
    return out.reshape(B, 10)


# ----------------------------------------------------------------------------
# Parameters (PyTorch layout) + one-time host-side repack into kernel operands.
# ----------------------------------------------------------------------------
def init_lenet_params(seed=42):
    keys = jax.random.split(jax.random.PRNGKey(seed), 10)

    def w(k, shape, fan_in):
        return jax.random.normal(k, shape, jnp.float32) / jnp.sqrt(float(fan_in))

    return {
        "conv1_w": w(keys[0], (6, 1, 5, 5), 25),
        "conv1_b": w(keys[1], (6,), 25),
        "conv2_w": w(keys[2], (16, 6, 5, 5), 150),
        "conv2_b": w(keys[3], (16,), 150),
        "fc1_w": w(keys[4], (120, 400), 400),   # PyTorch Linear: (out, in)
        "fc1_b": w(keys[5], (120,), 400),
        "fc2_w": w(keys[6], (84, 120), 120),
        "fc2_b": w(keys[7], (84,), 120),
        "fc3_w": w(keys[8], (10, 84), 84),
        "fc3_b": w(keys[9], (10,), 84),
    }


def prepare_lenet_params(params):
    """Host-side, one-time repack of PyTorch weights into fused-kernel operands."""
    w1 = np.asarray(params["conv1_w"], np.float32)   # (6, 1, 5, 5)
    w2 = np.asarray(params["conv2_w"], np.float32)   # (16, 6, 5, 5)

    # conv1 banded matrices: m1[j][co*28+y, y+i-2] = w1[co, 0, i, j]
    m1 = np.zeros((5, 6 * 28, 28), np.float32)
    for co in range(6):
        for y in range(28):
            for i in range(5):
                r = y + i - 2
                if 0 <= r < 28:
                    m1[:, co * 28 + y, r] = w1[co, 0, i, :]

    # conv2 banded matrices: m2[j][co*10+y, ci*14+y+i] = w2[co, ci, i, j]
    m2 = np.zeros((5, 16 * 10, 6 * 14), np.float32)
    for co in range(16):
        for y in range(10):
            for ci in range(6):
                for i in range(5):
                    m2[:, co * 10 + y, ci * 14 + y + i] = w2[co, ci, i, :]

    def row_sel(n_out):      # (2, n_out, 2*n_out): even / odd row pickers
        s = np.zeros((2, n_out, 2 * n_out), np.float32)
        idx = np.arange(n_out)
        s[0, idx, 2 * idx] = 1.0
        s[1, idx, 2 * idx + 1] = 1.0
        return s

    def col_sel(n_out):      # (2, 2*n_out, n_out): even / odd column pickers
        s = np.zeros((2, 2 * n_out, n_out), np.float32)
        idx = np.arange(n_out)
        s[0, 2 * idx, idx] = 1.0
        s[1, 2 * idx + 1, idx] = 1.0
        return s

    # fc1: wfc1[x, co*5+y, o] = fc1_w[o, co*25 + y*5 + x] (folds torch flatten order)
    fc1_w = np.asarray(params["fc1_w"], np.float32)  # (120, 400)
    wfc1 = np.ascontiguousarray(
        fc1_w.reshape(120, 16, 5, 5).transpose(3, 1, 2, 0).reshape(5, 80, 120))

    return {
        "m1": jnp.asarray(m1),
        "b1": jnp.asarray(np.repeat(np.asarray(params["conv1_b"], np.float32), 28)
                          .reshape(168, 1)),
        "pr1": jnp.asarray(row_sel(84)),
        "pc1": jnp.asarray(col_sel(14)),
        "m2": jnp.asarray(m2),
        "b2": jnp.asarray(np.repeat(np.asarray(params["conv2_b"], np.float32), 10)
                          .reshape(160, 1)),
        "pr2": jnp.asarray(row_sel(80)),
        "pc2": jnp.asarray(col_sel(5)),
        "wfc1": jnp.asarray(wfc1),
        "bfc1": jnp.asarray(params["fc1_b"]).reshape(1, 120),
        "wfc2": jnp.asarray(np.ascontiguousarray(
            np.asarray(params["fc2_w"], np.float32).T)),
        "bfc2": jnp.asarray(params["fc2_b"]).reshape(1, 84),
        "wfc3": jnp.asarray(np.ascontiguousarray(
            np.asarray(params["fc3_w"], np.float32).T)),
        "bfc3": jnp.asarray(params["fc3_b"]).reshape(1, 10),
    }


# ----------------------------------------------------------------------------
# Pure-JAX reference (PyTorch semantics) for validation.
# ----------------------------------------------------------------------------
def reference_forward(params, x):
    hi = jax.lax.Precision.HIGHEST
    B = x.shape[0]
    y = jax.lax.conv_general_dilated(
        x, params["conv1_w"], (1, 1), ((2, 2), (2, 2)),
        dimension_numbers=("NCHW", "OIHW", "NCHW"), precision=hi)
    y = jax.nn.relu(y + params["conv1_b"].reshape(1, 6, 1, 1))
    y = y.reshape(B, 6, 14, 2, 14, 2).max(axis=(3, 5))
    y = jax.lax.conv_general_dilated(
        y, params["conv2_w"], (1, 1), ((0, 0), (0, 0)),
        dimension_numbers=("NCHW", "OIHW", "NCHW"), precision=hi)
    y = jax.nn.relu(y + params["conv2_b"].reshape(1, 16, 1, 1))
    y = y.reshape(B, 16, 5, 2, 5, 2).max(axis=(3, 5))
    y = y.reshape(B, 400)
    y = jax.nn.relu(jnp.dot(y, params["fc1_w"].T, precision=hi) + params["fc1_b"])
    y = jax.nn.relu(jnp.dot(y, params["fc2_w"].T, precision=hi) + params["fc2_b"])
    return jnp.dot(y, params["fc3_w"].T, precision=hi) + params["fc3_b"]


if __name__ == "__main__":
    params = init_lenet_params()
    prep = prepare_lenet_params(params)

    # MNIST-shaped input (fc1 = 16*5*5 requires 28x28 single-channel input).
    x = jax.random.normal(jax.random.PRNGKey(0), (2, 1, 28, 28), jnp.float32)

    fwd = jax.jit(lenet_forward)
    out = fwd(prep, x)
    jax.block_until_ready(out)

    assert out.shape == (2, 10) and out.dtype == jnp.float32

    ref = reference_forward(params, x)
    max_err = float(jnp.max(jnp.abs(out - ref)))
    assert jnp.allclose(out, ref, atol=5e-2, rtol=5e-2), max_err

    print("KERNEL_OK")
</pallas_src>

<mosaic_0001>
module attributes {stable_mosaic.version = 11 : i64} {
  func.func @_lenet_kernel(%arg0: i32, %arg1: memref<1x28x28xf32, #tpu.memory_space<vmem>>, %arg2: memref<5x168x28xf32, #tpu.memory_space<vmem>>, %arg3: memref<168x1xf32, #tpu.memory_space<vmem>>, %arg4: memref<2x84x168xf32, #tpu.memory_space<vmem>>, %arg5: memref<2x28x14xf32, #tpu.memory_space<vmem>>, %arg6: memref<5x160x84xf32, #tpu.memory_space<vmem>>, %arg7: memref<160x1xf32, #tpu.memory_space<vmem>>, %arg8: memref<2x80x160xf32, #tpu.memory_space<vmem>>, %arg9: memref<2x10x5xf32, #tpu.memory_space<vmem>>, %arg10: memref<5x80x120xf32, #tpu.memory_space<vmem>>, %arg11: memref<1x120xf32, #tpu.memory_space<vmem>>, %arg12: memref<120x84xf32, #tpu.memory_space<vmem>>, %arg13: memref<1x84xf32, #tpu.memory_space<vmem>>, %arg14: memref<84x10xf32, #tpu.memory_space<vmem>>, %arg15: memref<1x10xf32, #tpu.memory_space<vmem>>, %arg16: memref<1x1x10xf32, #tpu.memory_space<vmem>>, %arg17: memref<28x32xf32, #tpu.memory_space<vmem>>) attributes {dimension_semantics = [#tpu.dimension_semantics<parallel>], iteration_bounds = array<i64: 2>, scalar_prefetch = 0 : i64, scratch_operands = 1 : i64, tpu.core_type = #tpu.core_type<tc>, window_params = [{transform_indices = @transform_0, window_bounds = array<i64: 1, 28, 28>}, {pipeline_mode = #tpu.pipeline_mode<synchronous>, transform_indices = @transform_1, window_bounds = array<i64: 5, 168, 28>}, {pipeline_mode = #tpu.pipeline_mode<synchronous>, transform_indices = @transform_2, window_bounds = array<i64: 168, 1>}, {pipeline_mode = #tpu.pipeline_mode<synchronous>, transform_indices = @transform_3, window_bounds = array<i64: 2, 84, 168>}, {pipeline_mode = #tpu.pipeline_mode<synchronous>, transform_indices = @transform_4, window_bounds = array<i64: 2, 28, 14>}, {pipeline_mode = #tpu.pipeline_mode<synchronous>, transform_indices = @transform_5, window_bounds = array<i64: 5, 160, 84>}, {pipeline_mode = #tpu.pipeline_mode<synchronous>, transform_indices = @transform_6, window_bounds = array<i64: 160, 1>}, {pipeline_mode = #tpu.pipeline_mode<synchronous>, transform_indices = @transform_7, window_bounds = array<i64: 2, 80, 160>}, {pipeline_mode = #tpu.pipeline_mode<synchronous>, transform_indices = @transform_8, window_bounds = array<i64: 2, 10, 5>}, {pipeline_mode = #tpu.pipeline_mode<synchronous>, transform_indices = @transform_9, window_bounds = array<i64: 5, 80, 120>}, {pipeline_mode = #tpu.pipeline_mode<synchronous>, transform_indices = @transform_10, window_bounds = array<i64: 1, 120>}, {pipeline_mode = #tpu.pipeline_mode<synchronous>, transform_indices = @transform_11, window_bounds = array<i64: 120, 84>}, {pipeline_mode = #tpu.pipeline_mode<synchronous>, transform_indices = @transform_12, window_bounds = array<i64: 1, 84>}, {pipeline_mode = #tpu.pipeline_mode<synchronous>, transform_indices = @transform_13, window_bounds = array<i64: 84, 10>}, {pipeline_mode = #tpu.pipeline_mode<synchronous>, transform_indices = @transform_14, window_bounds = array<i64: 1, 10>}, {transform_indices = @transform_15, window_bounds = array<i64: 1, 1, 10>}]} {
    %cst = arith.constant 0.000000e+00 : f32
    %0 = vector.broadcast %cst : f32 to vector<28x32xf32>
    %c0 = arith.constant 0 : index
    %c0_0 = arith.constant 0 : index
    %1 = vector.load %arg17[%c0, %c0_0] : memref<28x32xf32, #tpu.memory_space<vmem>>, vector<28x32xf32>
    tpu.vector_store %arg17[%c0, %c0_0], %0 {strides = array<i32>} : memref<28x32xf32, #tpu.memory_space<vmem>>, vector<28x32xf32>,
    %c0_1 = arith.constant 0 : index
    %c0_2 = arith.constant 0 : index
    %c0_3 = arith.constant 0 : index
    %2 = vector.load %arg1[%c0_1, %c0_2, %c0_3] : memref<1x28x28xf32, #tpu.memory_space<vmem>>, vector<1x28x28xf32>
    %3 = vector.shape_cast %2 : vector<1x28x28xf32> to vector<28x28xf32>
    %c0_4 = arith.constant 0 : index
    %c2 = arith.constant 2 : index
    %4 = vector.load %arg17[%c0_4, %c2] : memref<28x32xf32, #tpu.memory_space<vmem>>, vector<28x28xf32>
    tpu.vector_store %arg17[%c0_4, %c2], %3 {strides = array<i32>} : memref<28x32xf32, #tpu.memory_space<vmem>>, vector<28x28xf32>,
    %c0_5 = arith.constant 0 : index
    %c0_6 = arith.constant 0 : index
    %c0_7 = arith.constant 0 : index
    %5 = vector.load %arg2[%c0_5, %c0_6, %c0_7] : memref<5x168x28xf32, #tpu.memory_space<vmem>>, vector<1x168x28xf32>
    %6 = vector.shape_cast %5 : vector<1x168x28xf32> to vector<168x28xf32>
    %c0_8 = arith.constant 0 : index
    %c0_9 = arith.constant 0 : index
    %7 = vector.load %arg17[%c0_8, %c0_9] : memref<28x32xf32, #tpu.memory_space<vmem>>, vector<28x28xf32>
    %cst_10 = arith.constant dense<0.000000e+00> : vector<168x28xf32>
    %8 = tpu.matmul %6, %7, %cst_10 {dimension_numbers = #tpu.dot_dimension_numbers<[1], [0], [0], [1], [0, 0, 1, 1], [], []>} : vector<168x28xf32>, vector<28x28xf32>, vector<168x28xf32> -> vector<168x28xf32>
    %c1 = arith.constant 1 : index
    %c0_11 = arith.constant 0 : index
    %c0_12 = arith.constant 0 : index
    %9 = vector.load %arg2[%c1, %c0_11, %c0_12] : memref<5x168x28xf32, #tpu.memory_space<vmem>>, vector<1x168x28xf32>
    %10 = vector.shape_cast %9 : vector<1x168x28xf32> to vector<168x28xf32>
    %c0_13 = arith.constant 0 : index
    %c1_14 = arith.constant 1 : index
    %11 = vector.load %arg17[%c0_13, %c1_14] : memref<28x32xf32, #tpu.memory_space<vmem>>, vector<28x28xf32>
    %cst_15 = arith.constant dense<0.000000e+00> : vector<168x28xf32>
    %12 = tpu.matmul %10, %11, %cst_15 {dimension_numbers = #tpu.dot_dimension_numbers<[1], [0], [0], [1], [0, 0, 1, 1], [], []>} : vector<168x28xf32>, vector<28x28xf32>, vector<168x28xf32> -> vector<168x28xf32>
    %13 = arith.addf %8, %12 : vector<168x28xf32>
    %c2_16 = arith.constant 2 : index
    %c0_17 = arith.constant 0 : index
    %c0_18 = arith.constant 0 : index
    %14 = vector.load %arg2[%c2_16, %c0_17, %c0_18] : memref<5x168x28xf32, #tpu.memory_space<vmem>>, vector<1x168x28xf32>
    %15 = vector.shape_cast %14 : vector<1x168x28xf32> to vector<168x28xf32>
    %c0_19 = arith.constant 0 : index
    %c2_20 = arith.constant 2 : index
    %16 = vector.load %arg17[%c0_19, %c2_20] : memref<28x32xf32, #tpu.memory_space<vmem>>, vector<28x28xf32>
    %cst_21 = arith.constant dense<0.000000e+00> : vector<168x28xf32>
    %17 = tpu.matmul %15, %16, %cst_21 {dimension_numbers = #tpu.dot_dimension_numbers<[1], [0], [0], [1], [0, 0, 1, 1], [], []>} : vector<168x28xf32>, vector<28x28xf32>, vector<168x28xf32> -> vector<168x28xf32>
    %18 = arith.addf %13, %17 : vector<168x28xf32>
    %c3 = arith.constant 3 : index
    %c0_22 = arith.constant 0 : index
    %c0_23 = arith.constant 0 : index
    %19 = vector.load %arg2[%c3, %c0_22, %c0_23] : memref<5x168x28xf32, #tpu.memory_space<vmem>>, vector<1x168x28xf32>
    %20 = vector.shape_cast %19 : vector<1x168x28xf32> to vector<168x28xf32>
    %c0_24 = arith.constant 0 : index
    %c3_25 = arith.constant 3 : index
    %21 = vector.load %arg17[%c0_24, %c3_25] : memref<28x32xf32, #tpu.memory_space<vmem>>, vector<28x28xf32>
    %cst_26 = arith.constant dense<0.000000e+00> : vector<168x28xf32>
    %22 = tpu.matmul %20, %21, %cst_26 {dimension_numbers = #tpu.dot_dimension_numbers<[1], [0], [0], [1], [0, 0, 1, 1], [], []>} : vector<168x28xf32>, vector<28x28xf32>, vector<168x28xf32> -> vector<168x28xf32>
    %23 = arith.addf %18, %22 : vector<168x28xf32>
    %c4 = arith.constant 4 : index
    %c0_27 = arith.constant 0 : index
    %c0_28 = arith.constant 0 : index
    %24 = vector.load %arg2[%c4, %c0_27, %c0_28] : memref<5x168x28xf32, #tpu.memory_space<vmem>>, vector<1x168x28xf32>
    %25 = vector.shape_cast %24 : vector<1x168x28xf32> to vector<168x28xf32>
    %c0_29 = arith.constant 0 : index
    %c4_30 = arith.constant 4 : index
    %26 = vector.load %arg17[%c0_29, %c4_30] : memref<28x32xf32, #tpu.memory_space<vmem>>, vector<28x28xf32>
    %cst_31 = arith.constant dense<0.000000e+00> : vector<168x28xf32>
    %27 = tpu.matmul %25, %26, %cst_31 {dimension_numbers = #tpu.dot_dimension_numbers<[1], [0], [0], [1], [0, 0, 1, 1], [], []>} : vector<168x28xf32>, vector<28x28xf32>, vector<168x28xf32> -> vector<168x28xf32>
    %28 = arith.addf %23, %27 : vector<168x28xf32>
    %c0_32 = arith.constant 0 : index
    %c0_33 = arith.constant 0 : index
    %29 = vector.load %arg3[%c0_32, %c0_33] : memref<168x1xf32, #tpu.memory_space<vmem>>, vector<168x1xf32>
    %30 = vector.broadcast %29 : vector<168x1xf32> to vector<168x28xf32>
    %31 = arith.addf %28, %30 : vector<168x28xf32>
    %cst_34 = arith.constant 0.000000e+00 : f32
    %32 = vector.broadcast %cst_34 : f32 to vector<168x28xf32>
    %33 = arith.maximumf %31, %32 : vector<168x28xf32>
    %c0_35 = arith.constant 0 : index
    %c0_36 = arith.constant 0 : index
    %c0_37 = arith.constant 0 : index
    %34 = vector.load %arg4[%c0_35, %c0_36, %c0_37] : memref<2x84x168xf32, #tpu.memory_space<vmem>>, vector<1x84x168xf32>
    %35 = vector.shape_cast %34 : vector<1x84x168xf32> to vector<84x168xf32>
    %cst_38 = arith.constant dense<0.000000e+00> : vector<84x28xf32>
    %36 = tpu.matmul %35, %33, %cst_38 {dimension_numbers = #tpu.dot_dimension_numbers<[1], [0], [0], [1], [0, 0, 1, 1], [], []>} : vector<84x168xf32>, vector<168x28xf32>, vector<84x28xf32> -> vector<84x28xf32>
    %c1_39 = arith.constant 1 : index
    %c0_40 = arith.constant 0 : index
    %c0_41 = arith.constant 0 : index
    %37 = vector.load %arg4[%c1_39, %c0_40, %c0_41] : memref<2x84x168xf32, #tpu.memory_space<vmem>>, vector<1x84x168xf32>
    %38 = vector.shape_cast %37 : vector<1x84x168xf32> to vector<84x168xf32>
    %cst_42 = arith.constant dense<0.000000e+00> : vector<84x28xf32>
    %39 = tpu.matmul %38, %33, %cst_42 {dimension_numbers = #tpu.dot_dimension_numbers<[1], [0], [0], [1], [0, 0, 1, 1], [], []>} : vector<84x168xf32>, vector<168x28xf32>, vector<84x28xf32> -> vector<84x28xf32>
    %40 = arith.maximumf %36, %39 : vector<84x28xf32>
    %c0_43 = arith.constant 0 : index
    %c0_44 = arith.constant 0 : index
    %c0_45 = arith.constant 0 : index
    %41 = vector.load %arg5[%c0_43, %c0_44, %c0_45] : memref<2x28x14xf32, #tpu.memory_space<vmem>>, vector<1x28x14xf32>
    %42 = vector.shape_cast %41 : vector<1x28x14xf32> to vector<28x14xf32>
    %cst_46 = arith.constant dense<0.000000e+00> : vector<84x14xf32>
    %43 = tpu.matmul %40, %42, %cst_46 {dimension_numbers = #tpu.dot_dimension_numbers<[1], [0], [0], [1], [0, 0, 1, 1], [], []>} : vector<84x28xf32>, vector<28x14xf32>, vector<84x14xf32> -> vector<84x14xf32>
    %c1_47 = arith.constant 1 : index
    %c0_48 = arith.constant 0 : index
    %c0_49 = arith.constant 0 : index
    %44 = vector.load %arg5[%c1_47, %c0_48, %c0_49] : memref<2x28x14xf32, #tpu.memory_space<vmem>>, vector<1x28x14xf32>
    %45 = vector.shape_cast %44 : vector<1x28x14xf32> to vector<28x14xf32>
    %cst_50 = arith.constant dense<0.000000e+00> : vector<84x14xf32>
    %46 = tpu.matmul %40, %45, %cst_50 {dimension_numbers = #tpu.dot_dimension_numbers<[1], [0], [0], [1], [0, 0, 1, 1], [], []>} : vector<84x28xf32>, vector<28x14xf32>, vector<84x14xf32> -> vector<84x14xf32>
    %47 = arith.maximumf %43, %46 : vector<84x14xf32>
    %c0_51 = arith.constant 0 : index
    %c0_52 = arith.constant 0 : index
    %c0_53 = arith.constant 0 : index
    %48 = vector.load %arg6[%c0_51, %c0_52, %c0_53] : memref<5x160x84xf32, #tpu.memory_space<vmem>>, vector<1x160x84xf32>
    %49 = vector.shape_cast %48 : vector<1x160x84xf32> to vector<160x84xf32>
    %50 = vector.extract_strided_slice %47 {offsets = [0, 0], sizes = [84, 10], strides = [1, 1]} : vector<84x14xf32> to vector<84x10xf32>
    %cst_54 = arith.constant dense<0.000000e+00> : vector<160x10xf32>
    %51 = tpu.matmul %49, %50, %cst_54 {dimension_numbers = #tpu.dot_dimension_numbers<[1], [0], [0], [1], [0, 0, 1, 1], [], []>} : vector<160x84xf32>, vector<84x10xf32>, vector<160x10xf32> -> vector<160x10xf32>
    %c1_55 = arith.constant 1 : index
    %c0_56 = arith.constant 0 : index
    %c0_57 = arith.constant 0 : index
    %52 = vector.load %arg6[%c1_55, %c0_56, %c0_57] : memref<5x160x84xf32, #tpu.memory_space<vmem>>, vector<1x160x84xf32>
    %53 = vector.shape_cast %52 : vector<1x160x84xf32> to vector<160x84xf32>
    %54 = vector.extract_strided_slice %47 {offsets = [0, 1], sizes = [84, 10], strides = [1, 1]} : vector<84x14xf32> to vector<84x10xf32>
    %cst_58 = arith.constant dense<0.000000e+00> : vector<160x10xf32>
    %55 = tpu.matmul %53, %54, %cst_58 {dimension_numbers = #tpu.dot_dimension_numbers<[1], [0], [0], [1], [0, 0, 1, 1], [], []>} : vector<160x84xf32>, vector<84x10xf32>, vector<160x10xf32> -> vector<160x10xf32>
    %56 = arith.addf %51, %55 : vector<160x10xf32>
    %c2_59 = arith.constant 2 : index
    %c0_60 = arith.constant 0 : index
    %c0_61 = arith.constant 0 : index
    %57 = vector.load %arg6[%c2_59, %c0_60, %c0_61] : memref<5x160x84xf32, #tpu.memory_space<vmem>>, vector<1x160x84xf32>
    %58 = vector.shape_cast %57 : vector<1x160x84xf32> to vector<160x84xf32>
    %59 = vector.extract_strided_slice %47 {offsets = [0, 2], sizes = [84, 10], strides = [1, 1]} : vector<84x14xf32> to vector<84x10xf32>
    %cst_62 = arith.constant dense<0.000000e+00> : vector<160x10xf32>
    %60 = tpu.matmul %58, %59, %cst_62 {dimension_numbers = #tpu.dot_dimension_numbers<[1], [0], [0], [1], [0, 0, 1, 1], [], []>} : vector<160x84xf32>, vector<84x10xf32>, vector<160x10xf32> -> vector<160x10xf32>
    %61 = arith.addf %56, %60 : vector<160x10xf32>
    %c3_63 = arith.constant 3 : index
    %c0_64 = arith.constant 0 : index
    %c0_65 = arith.constant 0 : index
    %62 = vector.load %arg6[%c3_63, %c0_64, %c0_65] : memref<5x160x84xf32, #tpu.memory_space<vmem>>, vector<1x160x84xf32>
    %63 = vector.shape_cast %62 : vector<1x160x84xf32> to vector<160x84xf32>
    %64 = vector.extract_strided_slice %47 {offsets = [0, 3], sizes = [84, 10], strides = [1, 1]} : vector<84x14xf32> to vector<84x10xf32>
    %cst_66 = arith.constant dense<0.000000e+00> : vector<160x10xf32>
    %65 = tpu.matmul %63, %64, %cst_66 {dimension_numbers = #tpu.dot_dimension_numbers<[1], [0], [0], [1], [0, 0, 1, 1], [], []>} : vector<160x84xf32>, vector<84x10xf32>, vector<160x10xf32> -> vector<160x10xf32>
    %66 = arith.addf %61, %65 : vector<160x10xf32>
    %c4_67 = arith.constant 4 : index
    %c0_68 = arith.constant 0 : index
    %c0_69 = arith.constant 0 : index
    %67 = vector.load %arg6[%c4_67, %c0_68, %c0_69] : memref<5x160x84xf32, #tpu.memory_space<vmem>>, vector<1x160x84xf32>
    %68 = vector.shape_cast %67 : vector<1x160x84xf32> to vector<160x84xf32>
    %69 = vector.extract_strided_slice %47 {offsets = [0, 4], sizes = [84, 10], strides = [1, 1]} : vector<84x14xf32> to vector<84x10xf32>
    %cst_70 = arith.constant dense<0.000000e+00> : vector<160x10xf32>
    %70 = tpu.matmul %68, %69, %cst_70 {dimension_numbers = #tpu.dot_dimension_numbers<[1], [0], [0], [1], [0, 0, 1, 1], [], []>} : vector<160x84xf32>, vector<84x10xf32>, vector<160x10xf32> -> vector<160x10xf32>
    %71 = arith.addf %66, %70 : vector<160x10xf32>
    %c0_71 = arith.constant 0 : index
    %c0_72 = arith.constant 0 : index
    %72 = vector.load %arg7[%c0_71, %c0_72] : memref<160x1xf32, #tpu.memory_space<vmem>>, vector<160x1xf32>
    %73 = vector.broadcast %72 : vector<160x1xf32> to vector<160x10xf32>
    %74 = arith.addf %71, %73 : vector<160x10xf32>
    %cst_73 = arith.constant 0.000000e+00 : f32
    %75 = vector.broadcast %cst_73 : f32 to vector<160x10xf32>
    %76 = arith.maximumf %74, %75 : vector<160x10xf32>
    %c0_74 = arith.constant 0 : index
    %c0_75 = arith.constant 0 : index
    %c0_76 = arith.constant 0 : index
    %77 = vector.load %arg8[%c0_74, %c0_75, %c0_76] : memref<2x80x160xf32, #tpu.memory_space<vmem>>, vector<1x80x160xf32>
    %78 = vector.shape_cast %77 : vector<1x80x160xf32> to vector<80x160xf32>
    %cst_77 = arith.constant dense<0.000000e+00> : vector<80x10xf32>
    %79 = tpu.matmul %78, %76, %cst_77 {dimension_numbers = #tpu.dot_dimension_numbers<[1], [0], [0], [1], [0, 0, 1, 1], [], []>} : vector<80x160xf32>, vector<160x10xf32>, vector<80x10xf32> -> vector<80x10xf32>
    %c1_78 = arith.constant 1 : index
    %c0_79 = arith.constant 0 : index
    %c0_80 = arith.constant 0 : index
    %80 = vector.load %arg8[%c1_78, %c0_79, %c0_80] : memref<2x80x160xf32, #tpu.memory_space<vmem>>, vector<1x80x160xf32>
    %81 = vector.shape_cast %80 : vector<1x80x160xf32> to vector<80x160xf32>
    %cst_81 = arith.constant dense<0.000000e+00> : vector<80x10xf32>
    %82 = tpu.matmul %81, %76, %cst_81 {dimension_numbers = #tpu.dot_dimension_numbers<[1], [0], [0], [1], [0, 0, 1, 1], [], []>} : vector<80x160xf32>, vector<160x10xf32>, vector<80x10xf32> -> vector<80x10xf32>
    %83 = arith.maximumf %79, %82 : vector<80x10xf32>
    %c0_82 = arith.constant 0 : index
    %c0_83 = arith.constant 0 : index
    %c0_84 = arith.constant 0 : index
    %84 = vector.load %arg9[%c0_82, %c0_83, %c0_84] : memref<2x10x5xf32, #tpu.memory_space<vmem>>, vector<1x10x5xf32>
    %85 = vector.shape_cast %84 : vector<1x10x5xf32> to vector<10x5xf32>
    %cst_85 = arith.constant dense<0.000000e+00> : vector<80x5xf32>
    %86 = tpu.matmul %83, %85, %cst_85 {dimension_numbers = #tpu.dot_dimension_numbers<[1], [0], [0], [1], [0, 0, 1, 1], [], []>} : vector<80x10xf32>, vector<10x5xf32>, vector<80x5xf32> -> vector<80x5xf32>
    %c1_86 = arith.constant 1 : index
    %c0_87 = arith.constant 0 : index
    %c0_88 = arith.constant 0 : index
    %87 = vector.load %arg9[%c1_86, %c0_87, %c0_88] : memref<2x10x5xf32, #tpu.memory_space<vmem>>, vector<1x10x5xf32>
    %88 = vector.shape_cast %87 : vector<1x10x5xf32> to vector<10x5xf32>
    %cst_89 = arith.constant dense<0.000000e+00> : vector<80x5xf32>
    %89 = tpu.matmul %83, %88, %cst_89 {dimension_numbers = #tpu.dot_dimension_numbers<[1], [0], [0], [1], [0, 0, 1, 1], [], []>} : vector<80x10xf32>, vector<10x5xf32>, vector<80x5xf32> -> vector<80x5xf32>
    %90 = arith.maximumf %86, %89 : vector<80x5xf32>
    %91 = tpu.transpose %90, [1, 0] : vector<80x5xf32> -> vector<5x80xf32>
    %92 = vector.extract_strided_slice %91 {offsets = [0, 0], sizes = [1, 80], strides = [1, 1]} : vector<5x80xf32> to vector<1x80xf32>
    %c0_90 = arith.constant 0 : index
    %c0_91 = arith.constant 0 : index
    %c0_92 = arith.constant 0 : index
    %93 = vector.load %arg10[%c0_90, %c0_91, %c0_92] : memref<5x80x120xf32, #tpu.memory_space<vmem>>, vector<1x80x120xf32>
    %94 = vector.shape_cast %93 : vector<1x80x120xf32> to vector<80x120xf32>
    %cst_93 = arith.constant dense<0.000000e+00> : vector<1x120xf32>
    %95 = tpu.matmul %92, %94, %cst_93 {dimension_numbers = #tpu.dot_dimension_numbers<[1], [0], [0], [1], [0, 0, 1, 1], [], []>} : vector<1x80xf32>, vector<80x120xf32>, vector<1x120xf32> -> vector<1x120xf32>
    %96 = vector.extract_strided_slice %91 {offsets = [1, 0], sizes = [1, 80], strides = [1, 1]} : vector<5x80xf32> to vector<1x80xf32>
    %c1_94 = arith.constant 1 : index
    %c0_95 = arith.constant 0 : index
    %c0_96 = arith.constant 0 : index
    %97 = vector.load %arg10[%c1_94, %c0_95, %c0_96] : memref<5x80x120xf32, #tpu.memory_space<vmem>>, vector<1x80x120xf32>
    %98 = vector.shape_cast %97 : vector<1x80x120xf32> to vector<80x120xf32>
    %cst_97 = arith.constant dense<0.000000e+00> : vector<1x120xf32>
    %99 = tpu.matmul %96, %98, %cst_97 {dimension_numbers = #tpu.dot_dimension_numbers<[1], [0], [0], [1], [0, 0, 1, 1], [], []>} : vector<1x80xf32>, vector<80x120xf32>, vector<1x120xf32> -> vector<1x120xf32>
    %100 = arith.addf %95, %99 : vector<1x120xf32>
    %101 = vector.extract_strided_slice %91 {offsets = [2, 0], sizes = [1, 80], strides = [1, 1]} : vector<5x80xf32> to vector<1x80xf32>
    %c2_98 = arith.constant 2 : index
    %c0_99 = arith.constant 0 : index
    %c0_100 = arith.constant 0 : index
    %102 = vector.load %arg10[%c2_98, %c0_99, %c0_100] : memref<5x80x120xf32, #tpu.memory_space<vmem>>, vector<1x80x120xf32>
    %103 = vector.shape_cast %102 : vector<1x80x120xf32> to vector<80x120xf32>
    %cst_101 = arith.constant dense<0.000000e+00> : vector<1x120xf32>
    %104 = tpu.matmul %101, %103, %cst_101 {dimension_numbers = #tpu.dot_dimension_numbers<[1], [0], [0], [1], [0, 0, 1, 1], [], []>} : vector<1x80xf32>, vector<80x120xf32>, vector<1x120xf32> -> vector<1x120xf32>
    %105 = arith.addf %100, %104 : vector<1x120xf32>
    %106 = vector.extract_strided_slice %91 {offsets = [3, 0], sizes = [1, 80], strides = [1, 1]} : vector<5x80xf32> to vector<1x80xf32>
    %c3_102 = arith.constant 3 : index
    %c0_103 = arith.constant 0 : index
    %c0_104 = arith.constant 0 : index
    %107 = vector.load %arg10[%c3_102, %c0_103, %c0_104] : memref<5x80x120xf32, #tpu.memory_space<vmem>>, vector<1x80x120xf32>
    %108 = vector.shape_cast %107 : vector<1x80x120xf32> to vector<80x120xf32>
    %cst_105 = arith.constant dense<0.000000e+00> : vector<1x120xf32>
    %109 = tpu.matmul %106, %108, %cst_105 {dimension_numbers = #tpu.dot_dimension_numbers<[1], [0], [0], [1], [0, 0, 1, 1], [], []>} : vector<1x80xf32>, vector<80x120xf32>, vector<1x120xf32> -> vector<1x120xf32>
    %110 = arith.addf %105, %109 : vector<1x120xf32>
    %111 = vector.extract_strided_slice %91 {offsets = [4, 0], sizes = [1, 80], strides = [1, 1]} : vector<5x80xf32> to vector<1x80xf32>
    %c4_106 = arith.constant 4 : index
    %c0_107 = arith.constant 0 : index
    %c0_108 = arith.constant 0 : index
    %112 = vector.load %arg10[%c4_106, %c0_107, %c0_108] : memref<5x80x120xf32, #tpu.memory_space<vmem>>, vector<1x80x120xf32>
    %113 = vector.shape_cast %112 : vector<1x80x120xf32> to vector<80x120xf32>
    %cst_109 = arith.constant dense<0.000000e+00> : vector<1x120xf32>
    %114 = tpu.matmul %111, %113, %cst_109 {dimension_numbers = #tpu.dot_dimension_numbers<[1], [0], [0], [1], [0, 0, 1, 1], [], []>} : vector<1x80xf32>, vector<80x120xf32>, vector<1x120xf32> -> vector<1x120xf32>
    %115 = arith.addf %110, %114 : vector<1x120xf32>
    %c0_110 = arith.constant 0 : index
    %c0_111 = arith.constant 0 : index
    %116 = vector.load %arg11[%c0_110, %c0_111] : memref<1x120xf32, #tpu.memory_space<vmem>>, vector<1x120xf32>
    %117 = arith.addf %115, %116 : vector<1x120xf32>
    %cst_112 = arith.constant 0.000000e+00 : f32
    %118 = vector.broadcast %cst_112 : f32 to vector<1x120xf32>
    %119 = arith.maximumf %117, %118 : vector<1x120xf32>
    %c0_113 = arith.constant 0 : index
    %c0_114 = arith.constant 0 : index
    %120 = vector.load %arg12[%c0_113, %c0_114] : memref<120x84xf32, #tpu.memory_space<vmem>>, vector<120x84xf32>
    %cst_115 = arith.constant dense<0.000000e+00> : vector<1x84xf32>
    %121 = tpu.matmul %119, %120, %cst_115 {dimension_numbers = #tpu.dot_dimension_numbers<[1], [0], [0], [1], [0, 0, 1, 1], [], []>} : vector<1x120xf32>, vector<120x84xf32>, vector<1x84xf32> -> vector<1x84xf32>
    %c0_116 = arith.constant 0 : index
    %c0_117 = arith.constant 0 : index
    %122 = vector.load %arg13[%c0_116, %c0_117] : memref<1x84xf32, #tpu.memory_space<vmem>>, vector<1x84xf32>
    %123 = arith.addf %121, %122 : vector<1x84xf32>
    %cst_118 = arith.constant 0.000000e+00 : f32
    %124 = vector.broadcast %cst_118 : f32 to vector<1x84xf32>
    %125 = arith.maximumf %123, %124 : vector<1x84xf32>
    %c0_119 = arith.constant 0 : index
    %c0_120 = arith.constant 0 : index
    %126 = vector.load %arg14[%c0_119, %c0_120] : memref<84x10xf32, #tpu.memory_space<vmem>>, vector<84x10xf32>
    %cst_121 = arith.constant dense<0.000000e+00> : vector<1x10xf32>
    %127 = tpu.matmul %125, %126, %cst_121 {dimension_numbers = #tpu.dot_dimension_numbers<[1], [0], [0], [1], [0, 0, 1, 1], [], []>} : vector<1x84xf32>, vector<84x10xf32>, vector<1x10xf32> -> vector<1x10xf32>
    %c0_122 = arith.constant 0 : index
    %c0_123 = arith.constant 0 : index
    %128 = vector.load %arg15[%c0_122, %c0_123] : memref<1x10xf32, #tpu.memory_space<vmem>>, vector<1x10xf32>
    %129 = arith.addf %127, %128 : vector<1x10xf32>
    %c0_124 = arith.constant 0 : index
    %c0_125 = arith.constant 0 : index
    %c0_126 = arith.constant 0 : index
    %130 = vector.load %arg16[%c0_124, %c0_125, %c0_126] : memref<1x1x10xf32, #tpu.memory_space<vmem>>, vector<1x1x10xf32>
    %131 = vector.shape_cast %130 : vector<1x1x10xf32> to vector<1x10xf32>
    %132 = vector.shape_cast %129 : vector<1x10xf32> to vector<1x1x10xf32>
    tpu.vector_store %arg16[%c0_124, %c0_125, %c0_126], %132 {strides = array<i32>} : memref<1x1x10xf32, #tpu.memory_space<vmem>>, vector<1x1x10xf32>,
    return
  }
  func.func @transform_0(%arg0: i32) -> (i32, i32, i32) {
    %c0_i32 = arith.constant 0 : i32
    %c0_i32_0 = arith.constant 0 : i32
    %c0_i32_1 = arith.constant 0 : i32
    return %arg0, %c0_i32, %c0_i32_0 : i32, i32, i32
  }
  func.func @transform_1(%arg0: i32) -> (i32, i32, i32) {
    %c0_i32 = arith.constant 0 : i32
    %c0_i32_0 = arith.constant 0 : i32
    %c0_i32_1 = arith.constant 0 : i32
    %c0_i32_2 = arith.constant 0 : i32
    return %c0_i32, %c0_i32_0, %c0_i32_1 : i32, i32, i32
  }
  func.func @transform_2(%arg0: i32) -> (i32, i32) {
    %c0_i32 = arith.constant 0 : i32
    %c0_i32_0 = arith.constant 0 : i32
    %c0_i32_1 = arith.constant 0 : i32
    return %c0_i32, %c0_i32_0 : i32, i32
  }
  func.func @transform_3(%arg0: i32) -> (i32, i32, i32) {
    %c0_i32 = arith.constant 0 : i32
    %c0_i32_0 = arith.constant 0 : i32
    %c0_i32_1 = arith.constant 0 : i32
    %c0_i32_2 = arith.constant 0 : i32
    return %c0_i32, %c0_i32_0, %c0_i32_1 : i32, i32, i32
  }
  func.func @transform_4(%arg0: i32) -> (i32, i32, i32) {
    %c0_i32 = arith.constant 0 : i32
    %c0_i32_0 = arith.constant 0 : i32
    %c0_i32_1 = arith.constant 0 : i32
    %c0_i32_2 = arith.constant 0 : i32
    return %c0_i32, %c0_i32_0, %c0_i32_1 : i32, i32, i32
  }
  func.func @transform_5(%arg0: i32) -> (i32, i32, i32) {
    %c0_i32 = arith.constant 0 : i32
    %c0_i32_0 = arith.constant 0 : i32
    %c0_i32_1 = arith.constant 0 : i32
    %c0_i32_2 = arith.constant 0 : i32
    return %c0_i32, %c0_i32_0, %c0_i32_1 : i32, i32, i32
  }
  func.func @transform_6(%arg0: i32) -> (i32, i32) {
    %c0_i32 = arith.constant 0 : i32
    %c0_i32_0 = arith.constant 0 : i32
    %c0_i32_1 = arith.constant 0 : i32
    return %c0_i32, %c0_i32_0 : i32, i32
  }
  func.func @transform_7(%arg0: i32) -> (i32, i32, i32) {
    %c0_i32 = arith.constant 0 : i32
    %c0_i32_0 = arith.constant 0 : i32
    %c0_i32_1 = arith.constant 0 : i32
    %c0_i32_2 = arith.constant 0 : i32
    return %c0_i32, %c0_i32_0, %c0_i32_1 : i32, i32, i32
  }
  func.func @transform_8(%arg0: i32) -> (i32, i32, i32) {
    %c0_i32 = arith.constant 0 : i32
    %c0_i32_0 = arith.constant 0 : i32
    %c0_i32_1 = arith.constant 0 : i32
    %c0_i32_2 = arith.constant 0 : i32
    return %c0_i32, %c0_i32_0, %c0_i32_1 : i32, i32, i32
  }
  func.func @transform_9(%arg0: i32) -> (i32, i32, i32) {
    %c0_i32 = arith.constant 0 : i32
    %c0_i32_0 = arith.constant 0 : i32
    %c0_i32_1 = arith.constant 0 : i32
    %c0_i32_2 = arith.constant 0 : i32
    return %c0_i32, %c0_i32_0, %c0_i32_1 : i32, i32, i32
  }
  func.func @transform_10(%arg0: i32) -> (i32, i32) {
    %c0_i32 = arith.constant 0 : i32
    %c0_i32_0 = arith.constant 0 : i32
    %c0_i32_1 = arith.constant 0 : i32
    return %c0_i32, %c0_i32_0 : i32, i32
  }
  func.func @transform_11(%arg0: i32) -> (i32, i32) {
    %c0_i32 = arith.constant 0 : i32
    %c0_i32_0 = arith.constant 0 : i32
    %c0_i32_1 = arith.constant 0 : i32
    return %c0_i32, %c0_i32_0 : i32, i32
  }
  func.func @transform_12(%arg0: i32) -> (i32, i32) {
    %c0_i32 = arith.constant 0 : i32
    %c0_i32_0 = arith.constant 0 : i32
    %c0_i32_1 = arith.constant 0 : i32
    return %c0_i32, %c0_i32_0 : i32, i32
  }
  func.func @transform_13(%arg0: i32) -> (i32, i32) {
    %c0_i32 = arith.constant 0 : i32
    %c0_i32_0 = arith.constant 0 : i32
    %c0_i32_1 = arith.constant 0 : i32
    return %c0_i32, %c0_i32_0 : i32, i32
  }
  func.func @transform_14(%arg0: i32) -> (i32, i32) {
    %c0_i32 = arith.constant 0 : i32
    %c0_i32_0 = arith.constant 0 : i32
    %c0_i32_1 = arith.constant 0 : i32
    return %c0_i32, %c0_i32_0 : i32, i32
  }
  func.func @transform_15(%arg0: i32) -> (i32, i32, i32) {
    %c0_i32 = arith.constant 0 : i32
    %c0_i32_0 = arith.constant 0 : i32
    %c0_i32_1 = arith.constant 0 : i32
    return %arg0, %c0_i32, %c0_i32_0 : i32, i32, i32
  }
}

</mosaic_0001>

<llo_original>
// kernel: lenet_forward.1
$region0: #{lenet_forward.1}
  #allocation0 [shape = 'u32[]', space=smem, size = 0x4, offset = 0x4, fixed_abs, tag = 'smem constant byte address 0x4 - core index']
  #allocation1 [shape = 'u32[144,128]{1,0:T(1,128)}', space=vmem, size = 0x12000, scoped, tag = 'internal scratch']
  #allocation2 [shape = 'f32[28,32]{1,0:T(8,128)}', space=vmem, size = 0x4000, scoped, tag = 'scratch operand']
  %s0 = inlined_call_operand.vmem [shape: f32[2,28,28], index: 0, kind: input, shape index: {}]
  %s1 = inlined_call_operand.vmem [shape: f32[5,168,28], index: 1, kind: input, shape index: {}]
  %s2 = inlined_call_operand.vmem [shape: f32[168,1], index: 2, kind: input, shape index: {}]
  %s3 = inlined_call_operand.vmem [shape: f32[2,84,168], index: 3, kind: input, shape index: {}]
  %s4 = inlined_call_operand.vmem [shape: f32[2,28,14], index: 4, kind: input, shape index: {}]
  %s5 = inlined_call_operand.vmem [shape: f32[5,160,84], index: 5, kind: input, shape index: {}]
  %s6 = inlined_call_operand.vmem [shape: f32[160,1], index: 6, kind: input, shape index: {}]
  %s7 = inlined_call_operand.vmem [shape: f32[2,80,160], index: 7, kind: input, shape index: {}]
  %s8 = inlined_call_operand.vmem [shape: f32[2,10,5], index: 8, kind: input, shape index: {}]
  %s9 = inlined_call_operand.vmem [shape: f32[5,80,120], index: 9, kind: input, shape index: {}]
  %s10 = inlined_call_operand.vmem [shape: f32[1,120], index: 10, kind: input, shape index: {}]
  %s11 = inlined_call_operand.vmem [shape: f32[120,84], index: 11, kind: input, shape index: {}]
  %s12 = inlined_call_operand.vmem [shape: f32[1,84], index: 12, kind: input, shape index: {}]
  %s13 = inlined_call_operand.vmem [shape: f32[84,10], index: 13, kind: input, shape index: {}]
  %s14 = inlined_call_operand.vmem [shape: f32[1,10], index: 14, kind: input, shape index: {}]
  %s15 = inlined_call_operand.hbm [shape: f32[2,1,10], index: 15, kind: output, shape index: {}]
  %s16 = sld [smem:[#allocation0]]
  $region93: #{lenet_forward.1} parent=0
    _
  %s18 = ssub.s32 1, %s16
  %s19 = scalar_select 0, %s18, %s16
  $region1: #{lenet_forward.1} parent=0
    #allocation3 [shape = 'u8[1024]{0}', space=vmem, size = 0x400, scoped, tag = 'output window, operand 0']
    #allocation4 [shape = 's32[2]{0}', space=sflag, size = 0x8, scoped, tag = 'scoped memory for lenet_forward.1']
    %20 = vsyncpa [#allocation4], 0
    %s21 = scalar_lea.sflag [#allocation4], 1
    %22 = vsyncpa %s21, 0
    loop: start=0, step=1, limit=4
    $region2: #{lenet_forward.1} parent=1 // loop_pre_header
      _
    $region3: #{lenet_forward.1} parent=1 // loop_header
      %s24 = sphi 0, %s28
      %p25 = scmp.ge.s32.totalorder %s24, 4
      %s34 = sphi 0, %s36
      %s37 = sphi 0, %s34
      %s38 = sphi 0, %s37
      %s54 = sphi 0, %s38
      %s58 = sphi 0, %s58
      %s60 = sphi 0, %s58
      %s61 = sphi 0, %s60
      %s75 = sphi 0, %s61
      %s79 = sphi 0, %s79
      %s81 = sphi 0, %s79
      %s82 = sphi 0, %s81
      %s96 = sphi 0, %s82
      %s100 = sphi 0, %s100
      %s102 = sphi 0, %s100
      %s103 = sphi 0, %s102
      %s117 = sphi 0, %s103
      %s121 = sphi 0, %s121
      %s123 = sphi 0, %s121
      %s124 = sphi 0, %s123
      %s138 = sphi 0, %s124
      %s142 = sphi 0, %s142
      %s144 = sphi 0, %s142
      %s145 = sphi 0, %s144
      %s159 = sphi 0, %s145
      %s163 = sphi 0, %s163
      %s165 = sphi 0, %s163
      %s166 = sphi 0, %s165
      %s180 = sphi 0, %s166
      %s184 = sphi 0, %s184
      %s186 = sphi 0, %s184
      %s187 = sphi 0, %s186
      %s201 = sphi 0, %s187
      %s205 = sphi 0, %s205
      %s207 = sphi 0, %s205
      %s208 = sphi 0, %s207
      %s222 = sphi 0, %s208
      %s226 = sphi 0, %s226
      %s228 = sphi 0, %s226
      %s229 = sphi 0, %s228
      %s243 = sphi 0, %s229
      %s247 = sphi 0, %s247
      %s249 = sphi 0, %s247
      %s250 = sphi 0, %s249
      %s264 = sphi 0, %s250
      %s268 = sphi 0, %s268
      %s270 = sphi 0, %s268
      %s271 = sphi 0, %s270
      %s285 = sphi 0, %s271
      %s289 = sphi 0, %s289
      %s291 = sphi 0, %s289
      %s292 = sphi 0, %s291
      %s306 = sphi 0, %s292
      %s310 = sphi 0, %s310
      %s312 = sphi 0, %s310
      %s313 = sphi 0, %s312
      %s327 = sphi 0, %s313
      %s331 = sphi 0, %s331
      %s333 = sphi 0, %s331
      %s334 = sphi 0, %s333
      %s348 = sphi 0, %s334
      %s354 = sphi 0, %s356
      %s357 = sphi 0, %s354
      %s358 = sphi 0, %s357
      %s374 = sphi 0, %s358
    $region4: #{lenet_forward.1} parent=1 // loop_header_branch
      %27 = sbr.rel (%p25) target = $region8
    $region5: #{lenet_forward.1} parent=1 // loop_body
      %s29 = ssub.s32 %s24, 1
      %s30 = ssub.s32 %s24, 2
      %s31 = sadd.s32 %s24, 1
      %s32 = ssub.s32 %s24, %s31
      %p33 = scmp.eq.s32.totalorder %s32, 0
      %s35 = sadd.s32 %s34, 1
      %s36 = scalar_select %p33, %s34, %s35
      %p39 = pneg %p33
      %p40 = scmp.eq.s32.totalorder %s24, 1
      %p41 = por %p39, %p40
      %p42 = scmp.ne.s32.totalorder %s34, %s37
      %p43 = scmp.eq.s32.totalorder %s24, 0
      %p44 = por %p42, %p43
      %p45 = scmp.ne.s32.totalorder %s34, %s37
      %p46 = scmp.eq.s32.totalorder %s29, 1
      %p47 = por %p45, %p46
      %p48 = scmp.ne.s32.totalorder %s37, %s38
      %p49 = scmp.eq.s32.totalorder %s29, 0
      %p50 = por %p48, %p49
      %p51 = scmp.ne.s32.totalorder %s37, %s38
      %p52 = scmp.eq.s32.totalorder %s30, 1
      %p53 = por %p51, %p52
      %p55 = scmp.ne.s32.totalorder %s38, %s54
      %p56 = scmp.eq.s32.totalorder %s30, 0
      %p57 = por %p55, %p56
      %s59 = sadd.s32 %s58, 1
      %p62 = scmp.eq.s32.totalorder %s24, 1
      %p63 = scmp.ne.s32.totalorder %s58, %s60
      %p64 = scmp.eq.s32.totalorder %s24, 0
      %p65 = por %p63, %p64
      %p66 = scmp.ne.s32.totalorder %s58, %s60
      %p67 = scmp.eq.s32.totalorder %s29, 1
      %p68 = por %p66, %p67
      %p69 = scmp.ne.s32.totalorder %s60, %s61
      %p70 = scmp.eq.s32.totalorder %s29, 0
      %p71 = por %p69, %p70
      %p72 = scmp.ne.s32.totalorder %s60, %s61
      %p73 = scmp.eq.s32.totalorder %s30, 1
      %p74 = por %p72, %p73
      %p76 = scmp.ne.s32.totalorder %s61, %s75
      %p77 = scmp.eq.s32.totalorder %s30, 0
      %p78 = por %p76, %p77
      %s80 = sadd.s32 %s79, 1
      %p83 = scmp.eq.s32.totalorder %s24, 1
      %p84 = scmp.ne.s32.totalorder %s79, %s81
      %p85 = scmp.eq.s32.totalorder %s24, 0
      %p86 = por %p84, %p85
      %p87 = scmp.ne.s32.totalorder %s79, %s81
      %p88 = scmp.eq.s32.totalorder %s29, 1
      %p89 = por %p87, %p88
      %p90 = scmp.ne.s32.totalorder %s81, %s82
      %p91 = scmp.eq.s32.totalorder %s29, 0
      %p92 = por %p90, %p91
      %p93 = scmp.ne.s32.totalorder %s81, %s82
      %p94 = scmp.eq.s32.totalorder %s30, 1
      %p95 = por %p93, %p94
      %p97 = scmp.ne.s32.totalorder %s82, %s96
      %p98 = scmp.eq.s32.totalorder %s30, 0
      %p99 = por %p97, %p98
      %s101 = sadd.s32 %s100, 1
      %p104 = scmp.eq.s32.totalorder %s24, 1
      %p105 = scmp.ne.s32.totalorder %s100, %s102
      %p106 = scmp.eq.s32.totalorder %s24, 0
      %p107 = por %p105, %p106
      %p108 = scmp.ne.s32.totalorder %s100, %s102
      %p109 = scmp.eq.s32.totalorder %s29, 1
      %p110 = por %p108, %p109
      %p111 = scmp.ne.s32.totalorder %s102, %s103
      %p112 = scmp.eq.s32.totalorder %s29, 0
      %p113 = por %p111, %p112
      %p114 = scmp.ne.s32.totalorder %s102, %s103
      %p115 = scmp.eq.s32.totalorder %s30, 1
      %p116 = por %p114, %p115
      %p118 = scmp.ne.s32.totalorder %s103, %s117
      %p119 = scmp.eq.s32.totalorder %s30, 0
      %p120 = por %p118, %p119
      %s122 = sadd.s32 %s121, 1
      %p125 = scmp.eq.s32.totalorder %s24, 1
      %p126 = scmp.ne.s32.totalorder %s121, %s123
      %p127 = scmp.eq.s32.totalorder %s24, 0
      %p128 = por %p126, %p127
      %p129 = scmp.ne.s32.totalorder %s121, %s123
      %p130 = scmp.eq.s32.totalorder %s29, 1
      %p131 = por %p129, %p130
      %p132 = scmp.ne.s32.totalorder %s123, %s124
      %p133 = scmp.eq.s32.totalorder %s29, 0
      %p134 = por %p132, %p133
      %p135 = scmp.ne.s32.totalorder %s123, %s124
      %p136 = scmp.eq.s32.totalorder %s30, 1
      %p137 = por %p135, %p136
      %p139 = scmp.ne.s32.totalorder %s124, %s138
      %p140 = scmp.eq.s32.totalorder %s30, 0
      %p141 = por %p139, %p140
      %s143 = sadd.s32 %s142, 1
      %p146 = scmp.eq.s32.totalorder %s24, 1
      %p147 = scmp.ne.s32.totalorder %s142, %s144
      %p148 = scmp.eq.s32.totalorder %s24, 0
      %p149 = por %p147, %p148
      %p150 = scmp.ne.s32.totalorder %s142, %s144
      %p151 = scmp.eq.s32.totalorder %s29, 1
      %p152 = por %p150, %p151
      %p153 = scmp.ne.s32.totalorder %s144, %s145
      %p154 = scmp.eq.s32.totalorder %s29, 0
      %p155 = por %p153, %p154
      %p156 = scmp.ne.s32.totalorder %s144, %s145
      %p157 = scmp.eq.s32.totalorder %s30, 1
      %p158 = por %p156, %p157
      %p160 = scmp.ne.s32.totalorder %s145, %s159
      %p161 = scmp.eq.s32.totalorder %s30, 0
      %p162 = por %p160, %p161
      %s164 = sadd.s32 %s163, 1
      %p167 = scmp.eq.s32.totalorder %s24, 1
      %p168 = scmp.ne.s32.totalorder %s163, %s165
      %p169 = scmp.eq.s32.totalorder %s24, 0
      %p170 = por %p168, %p169
      %p171 = scmp.ne.s32.totalorder %s163, %s165
      %p172 = scmp.eq.s32.totalorder %s29, 1
      %p173 = por %p171, %p172
      %p174 = scmp.ne.s32.totalorder %s165, %s166
      %p175 = scmp.eq.s32.totalorder %s29, 0
      %p176 = por %p174, %p175
      %p177 = scmp.ne.s32.totalorder %s165, %s166
      %p178 = scmp.eq.s32.totalorder %s30, 1
      %p179 = por %p177, %p178
      %p181 = scmp.ne.s32.totalorder %s166, %s180
      %p182 = scmp.eq.s32.totalorder %s30, 0
      %p183 = por %p181, %p182
      %s185 = sadd.s32 %s184, 1
      %p188 = scmp.eq.s32.totalorder %s24, 1
      %p189 = scmp.ne.s32.totalorder %s184, %s186
      %p190 = scmp.eq.s32.totalorder %s24, 0
      %p191 = por %p189, %p190
      %p192 = scmp.ne.s32.totalorder %s184, %s186
      %p193 = scmp.eq.s32.totalorder %s29, 1
      %p194 = por %p192, %p193
      %p195 = scmp.ne.s32.totalorder %s186, %s187
      %p196 = scmp.eq.s32.totalorder %s29, 0
      %p197 = por %p195, %p196
      %p198 = scmp.ne.s32.totalorder %s186, %s187
      %p199 = scmp.eq.s32.totalorder %s30, 1
      %p200 = por %p198, %p199
      %p202 = scmp.ne.s32.totalorder %s187, %s201
      %p203 = scmp.eq.s32.totalorder %s30, 0
      %p204 = por %p202, %p203
      %s206 = sadd.s32 %s205, 1
      %p209 = scmp.eq.s32.totalorder %s24, 1
      %p210 = scmp.ne.s32.totalorder %s205, %s207
      %p211 = scmp.eq.s32.totalorder %s24, 0
      %p212 = por %p210, %p211
      %p213 = scmp.ne.s32.totalorder %s205, %s207
      %p214 = scmp.eq.s32.totalorder %s29, 1
      %p215 = por %p213, %p214
      %p216 = scmp.ne.s32.totalorder %s207, %s208
      %p217 = scmp.eq.s32.totalorder %s29, 0
      %p218 = por %p216, %p217
      %p219 = scmp.ne.s32.totalorder %s207, %s208
      %p220 = scmp.eq.s32.totalorder %s30, 1
      %p221 = por %p219, %p220
      %p223 = scmp.ne.s32.totalorder %s208, %s222
      %p224 = scmp.eq.s32.totalorder %s30, 0
      %p225 = por %p223, %p224
      %s227 = sadd.s32 %s226, 1
      %p230 = scmp.eq.s32.totalorder %s24, 1
      %p231 = scmp.ne.s32.totalorder %s226, %s228
      %p232 = scmp.eq.s32.totalorder %s24, 0
      %p233 = por %p231, %p232
      %p234 = scmp.ne.s32.totalorder %s226, %s228
      %p235 = scmp.eq.s32.totalorder %s29, 1
      %p236 = por %p234, %p235
      %p237 = scmp.ne.s32.totalorder %s228, %s229
      %p238 = scmp.eq.s32.totalorder %s29, 0
      %p239 = por %p237, %p238
      %p240 = scmp.ne.s32.totalorder %s228, %s229
      %p241 = scmp.eq.s32.totalorder %s30, 1
      %p242 = por %p240, %p241
      %p244 = scmp.ne.s32.totalorder %s229, %s243
      %p245 = scmp.eq.s32.totalorder %s30, 0
      %p246 = por %p244, %p245
      %s248 = sadd.s32 %s247, 1
      %p251 = scmp.eq.s32.totalorder %s24, 1
      %p252 = scmp.ne.s32.totalorder %s247, %s249
      %p253 = scmp.eq.s32.totalorder %s24, 0
      %p254 = por %p252, %p253
      %p255 = scmp.ne.s32.totalorder %s247, %s249
      %p256 = scmp.eq.s32.totalorder %s29, 1
      %p257 = por %p255, %p256
      %p258 = scmp.ne.s32.totalorder %s249, %s250
      %p259 = scmp.eq.s32.totalorder %s29, 0
      %p260 = por %p258, %p259
      %p261 = scmp.ne.s32.totalorder %s249, %s250
      %p262 = scmp.eq.s32.totalorder %s30, 1
      %p263 = por %p261, %p262
      %p265 = scmp.ne.s32.totalorder %s250, %s264
      %p266 = scmp.eq.s32.totalorder %s30, 0
      %p267 = por %p265, %p266
      %s269 = sadd.s32 %s268, 1
      %p272 = scmp.eq.s32.totalorder %s24, 1
      %p273 = scmp.ne.s32.totalorder %s268, %s270
      %p274 = scmp.eq.s32.totalorder %s24, 0
      %p275 = por %p273, %p274
      %p276 = scmp.ne.s32.totalorder %s268, %s270
      %p277 = scmp.eq.s32.totalorder %s29, 1
      %p278 = por %p276, %p277
      %p279 = scmp.ne.s32.totalorder %s270, %s271
      %p280 = scmp.eq.s32.totalorder %s29, 0
      %p281 = por %p279, %p280
      %p282 = scmp.ne.s32.totalorder %s270, %s271
      %p283 = scmp.eq.s32.totalorder %s30, 1
      %p284 = por %p282, %p283
      %p286 = scmp.ne.s32.totalorder %s271, %s285
      %p287 = scmp.eq.s32.totalorder %s30, 0
      %p288 = por %p286, %p287
      %s290 = sadd.s32 %s289, 1
      %p293 = scmp.eq.s32.totalorder %s24, 1
      %p294 = scmp.ne.s32.totalorder %s289, %s291
      %p295 = scmp.eq.s32.totalorder %s24, 0
      %p296 = por %p294, %p295
      %p297 = scmp.ne.s32.totalorder %s289, %s291
      %p298 = scmp.eq.s32.totalorder %s29, 1
      %p299 = por %p297, %p298
      %p300 = scmp.ne.s32.totalorder %s291, %s292
      %p301 = scmp.eq.s32.totalorder %s29, 0
      %p302 = por %p300, %p301
      %p303 = scmp.ne.s32.totalorder %s291, %s292
      %p304 = scmp.eq.s32.totalorder %s30, 1
      %p305 = por %p303, %p304
      %p307 = scmp.ne.s32.totalorder %s292, %s306
      %p308 = scmp.eq.s32.totalorder %s30, 0
      %p309 = por %p307, %p308
      %s311 = sadd.s32 %s310, 1
      %p314 = scmp.eq.s32.totalorder %s24, 1
      %p315 = scmp.ne.s32.totalorder %s310, %s312
      %p316 = scmp.eq.s32.totalorder %s24, 0
      %p317 = por %p315, %p316
      %p318 = scmp.ne.s32.totalorder %s310, %s312
      %p319 = scmp.eq.s32.totalorder %s29, 1
      %p320 = por %p318, %p319
      %p321 = scmp.ne.s32.totalorder %s312, %s313
      %p322 = scmp.eq.s32.totalorder %s29, 0
      %p323 = por %p321, %p322
      %p324 = scmp.ne.s32.totalorder %s312, %s313
      %p325 = scmp.eq.s32.totalorder %s30, 1
      %p326 = por %p324, %p325
      %p328 = scmp.ne.s32.totalorder %s313, %s327
      %p329 = scmp.eq.s32.totalorder %s30, 0
      %p330 = por %p328, %p329
      %s332 = sadd.s32 %s331, 1
      %p335 = scmp.eq.s32.totalorder %s24, 1
      %p336 = scmp.ne.s32.totalorder %s331, %s333
      %p337 = scmp.eq.s32.totalorder %s24, 0
      %p338 = por %p336, %p337
      %p339 = scmp.ne.s32.totalorder %s331, %s333
      %p340 = scmp.eq.s32.totalorder %s29, 1
      %p341 = por %p339, %p340
      %p342 = scmp.ne.s32.totalorder %s333, %s334
      %p343 = scmp.eq.s32.totalorder %s29, 0
      %p344 = por %p342, %p343
      %p345 = scmp.ne.s32.totalorder %s333, %s334
      %p346 = scmp.eq.s32.totalorder %s30, 1
      %p347 = por %p345, %p346
      %p349 = scmp.ne.s32.totalorder %s334, %s348
      %p350 = scmp.eq.s32.totalorder %s30, 0
      %p351 = por %p349, %p350
      %s352 = ssub.s32 %s24, %s31
      %p353 = scmp.eq.s32.totalorder %s352, 0
      %s355 = sadd.s32 %s354, 1
      %s356 = scalar_select %p353, %s354, %s355
      %p359 = pneg %p353
      %p360 = scmp.eq.s32.totalorder %s24, 1
      %p361 = por %p359, %p360
      %p362 = scmp.ne.s32.totalorder %s354, %s357
      %p363 = scmp.eq.s32.totalorder %s24, 0
      %p364 = por %p362, %p363
      %p365 = scmp.ne.s32.totalorder %s354, %s357
      %p366 = scmp.eq.s32.totalorder %s29, 1
      %p367 = por %p365, %p366
      %p368 = scmp.ne.s32.totalorder %s357, %s358
      %p369 = scmp.eq.s32.totalorder %s29, 0
      %p370 = por %p368, %p369
      %p371 = scmp.ne.s32.totalorder %s357, %s358
      %p372 = scmp.eq.s32.totalorder %s30, 1
      %p373 = por %p371, %p372
      %p375 = scmp.ne.s32.totalorder %s358, %s374
      %p376 = scmp.eq.s32.totalorder %s30, 0
      %p377 = por %p375, %p376
      %p378 = scmp.le.s32.totalorder 1, %s24
      %p379 = scmp.lt.s32.totalorder %s24, 3
      %p380 = pnand %p378, %p379
      %p381 = pneg %p380
      // Predicated region
      $region9: #{lenet_forward.1} parent=5 // pred_check
        _
      $region10: #{lenet_forward.1} parent=5 // pred_check_branch
        %383 = sbr.rel (%p380) target = $region12
      $region11: #{lenet_forward.1} parent=5 // pred_region
        %s384 = ssub.s32 %s24, 1
        // Predicated region
        $region13: #{lenet_forward.1} parent=11 // pred_check
          %p385 = pneg %p71
        $region14: #{lenet_forward.1} parent=11 // pred_check_branch
          %387 = sbr.rel (%p385) target = $region16
        $region15: #{lenet_forward.1} parent=11 // pred_region
          _
        $region16: #{lenet_forward.1} parent=11 // pred_fallthru
          _
        // Predicated region
        $region17: #{lenet_forward.1} parent=11 // pred_check
          %p388 = pneg %p92
        $region18: #{lenet_forward.1} parent=11 // pred_check_branch
          %390 = sbr.rel (%p388) target = $region20
        $region19: #{lenet_forward.1} parent=11 // pred_region
          _
        $region20: #{lenet_forward.1} parent=11 // pred_fallthru
          _
        // Predicated region
        $region21: #{lenet_forward.1} parent=11 // pred_check
          %p391 = pneg %p113
        $region22: #{lenet_forward.1} parent=11 // pred_check_branch
          %393 = sbr.rel (%p391) target = $region24
        $region23: #{lenet_forward.1} parent=11 // pred_region
          _
        $region24: #{lenet_forward.1} parent=11 // pred_fallthru
          _
        // Predicated region
        $region25: #{lenet_forward.1} parent=11 // pred_check
          %p394 = pneg %p134
        $region26: #{lenet_forward.1} parent=11 // pred_check_branch
          %396 = sbr.rel (%p394) target = $region28
        $region27: #{lenet_forward.1} parent=11 // pred_region
          _
        $region28: #{lenet_forward.1} parent=11 // pred_fallthru
          _
        // Predicated region
        $region29: #{lenet_forward.1} parent=11 // pred_check
          %p397 = pneg %p155
        $region30: #{lenet_forward.1} parent=11 // pred_check_branch
          %399 = sbr.rel (%p397) target = $region32
        $region31: #{lenet_forward.1} parent=11 // pred_region
          _
        $region32: #{lenet_forward.1} parent=11 // pred_fallthru
          _
        // Predicated region
        $region33: #{lenet_forward.1} parent=11 // pred_check
          %p400 = pneg %p176
        $region34: #{lenet_forward.1} parent=11 // pred_check_branch
          %402 = sbr.rel (%p400) target = $region36
        $region35: #{lenet_forward.1} parent=11 // pred_region
          _
        $region36: #{lenet_forward.1} parent=11 // pred_fallthru
          _
        // Predicated region
        $region37: #{lenet_forward.1} parent=11 // pred_check
          %p403 = pneg %p197
        $region38: #{lenet_forward.1} parent=11 // pred_check_branch
          %405 = sbr.rel (%p403) target = $region40
        $region39: #{lenet_forward.1} parent=11 // pred_region
          _
        $region40: #{lenet_forward.1} parent=11 // pred_fallthru
          _
        // Predicated region
        $region41: #{lenet_forward.1} parent=11 // pred_check
          %p406 = pneg %p218
        $region42: #{lenet_forward.1} parent=11 // pred_check_branch
          %408 = sbr.rel (%p406) target = $region44
        $region43: #{lenet_forward.1} parent=11 // pred_region
          _
        $region44: #{lenet_forward.1} parent=11 // pred_fallthru
          _
        // Predicated region
        $region45: #{lenet_forward.1} parent=11 // pred_check
          %p409 = pneg %p239
        $region46: #{lenet_forward.1} parent=11 // pred_check_branch
          %411 = sbr.rel (%p409) target = $region48
        $region47: #{lenet_forward.1} parent=11 // pred_region
          _
        $region48: #{lenet_forward.1} parent=11 // pred_fallthru
          _
        // Predicated region
        $region49: #{lenet_forward.1} parent=11 // pred_check
          %p412 = pneg %p260
        $region50: #{lenet_forward.1} parent=11 // pred_check_branch
          %414 = sbr.rel (%p412) target = $region52
        $region51: #{lenet_forward.1} parent=11 // pred_region
          _
        $region52: #{lenet_forward.1} parent=11 // pred_fallthru
          _
        // Predicated region
        $region53: #{lenet_forward.1} parent=11 // pred_check
          %p415 = pneg %p281
        $region54: #{lenet_forward.1} parent=11 // pred_check_branch
          %417 = sbr.rel (%p415) target = $region56
        $region55: #{lenet_forward.1} parent=11 // pred_region
          _
        $region56: #{lenet_forward.1} parent=11 // pred_fallthru
          _
        // Predicated region
        $region57: #{lenet_forward.1} parent=11 // pred_check
          %p418 = pneg %p302
        $region58: #{lenet_forward.1} parent=11 // pred_check_branch
          %420 = sbr.rel (%p418) target = $region60
        $region59: #{lenet_forward.1} parent=11 // pred_region
          _
        $region60: #{lenet_forward.1} parent=11 // pred_fallthru
          _
        // Predicated region
        $region61: #{lenet_forward.1} parent=11 // pred_check
          %p421 = pneg %p323
        $region62: #{lenet_forward.1} parent=11 // pred_check_branch
          %423 = sbr.rel (%p421) target = $region64
        $region63: #{lenet_forward.1} parent=11 // pred_region
          _
        $region64: #{lenet_forward.1} parent=11 // pred_fallthru
          _
        // Predicated region
        $region65: #{lenet_forward.1} parent=11 // pred_check
          %p424 = pneg %p344
        $region66: #{lenet_forward.1} parent=11 // pred_check_branch
          %426 = sbr.rel (%p424) target = $region68
        $region67: #{lenet_forward.1} parent=11 // pred_region
          _
        $region68: #{lenet_forward.1} parent=11 // pred_fallthru
          _
      $region12: #{lenet_forward.1} parent=5 // pred_fallthru
        _
      %p427 = scmp.lt.s32.totalorder %s24, 2
      // Predicated region
      $region69: #{lenet_forward.1} parent=5 // pred_check
        %p428 = pneg %p427
      $region70: #{lenet_forward.1} parent=5 // pred_check_branch
        %430 = sbr.rel (%p428) target = $region72
      $region71: #{lenet_forward.1} parent=5 // pred_region
        // Predicated region
        $region73: #{lenet_forward.1} parent=71 // pred_check
          %p431 = pneg %p44
        $region74: #{lenet_forward.1} parent=71 // pred_check_branch
          %433 = sbr.rel (%p431) target = $region76
        $region75: #{lenet_forward.1} parent=71 // pred_region
          %p434 = scmp.lt.s32.totalorder %s24, 1
          %s435 = scalar_select %p434, %s24, 1
          %s436 = smul.addr %s435, 4
          %s437 = smul.addr %s436, 8
          %s438 = scalar_lea.vmem %s0, %s437
        $region76: #{lenet_forward.1} parent=71 // pred_fallthru
          _
      $region72: #{lenet_forward.1} parent=5 // pred_fallthru
        _
      %p439 = scmp.le.s32.totalorder 1, %s24
      %p440 = scmp.lt.s32.totalorder %s24, 3
      %p441 = pnand %p439, %p440
      %p442 = pneg %p441
      // Predicated region
      $region77: #{lenet_forward.1} parent=5 // pred_check
        _
      $region78: #{lenet_forward.1} parent=5 // pred_check_branch
        %444 = sbr.rel (%p441) target = $region80
      $region79: #{lenet_forward.1} parent=5 // pred_region
        %s445 = ssub.s32 %s24, 1
        %p446 = scmp.lt.s32.totalorder %s29, 1
        %s447 = scalar_select %p446, %s29, 1
        %s448 = smul.addr %s447, 4
        %s449 = smul.addr %s448, 8
        %s450 = scalar_lea.vmem %s0, %s449
        %p451 = pneg %p50
        %p452 = pneg %p47
        %p453 = pneg %p71
        %p454 = pneg %p68
        %p455 = pneg %p92
        %p456 = pneg %p89
        %p457 = pneg %p113
        %p458 = pneg %p110
        %p459 = pneg %p134
        %p460 = pneg %p131
        %p461 = pneg %p155
        %p462 = pneg %p152
        %p463 = pneg %p176
        %p464 = pneg %p173
        %p465 = pneg %p197
        %p466 = pneg %p194
        %p467 = pneg %p218
        %p468 = pneg %p215
        %p469 = pneg %p239
        %p470 = pneg %p236
        %p471 = pneg %p260
        %p472 = pneg %p257
        %p473 = pneg %p281
        %p474 = pneg %p278
        %p475 = pneg %p302
        %p476 = pneg %p299
        %p477 = pneg %p323
        %p478 = pneg %p320
        %p479 = pneg %p344
        %p480 = pneg %p341
        %p481 = pneg %p370
        %p482 = pneg %p367
        %s483 = sand.u32 %s357, 1
        %s484 = scalar_lea.sflag [#allocation4], %s483
        %s485 = sand.u32 %s357, 1
        %s486 = scalar_lea.vmem [#allocation3], %s485
        %p487 = scmp.lt.s32.totalorder %s29, 1
        %s488 = scalar_select %p487, %s29, 1
        %s489 = smul.addr %s488, 4
        %s490 = smul.addr %s489, 8
        %s491 = scalar_lea.vmem %s0, %s490
        %vm492 = vcmask 261120
        %493 = vst.msk [vmem:[#allocation2] sm:$0xff] %vm492, 0.0
        %494 = vst.msk [vmem:[#allocation2 + $0x8] sm:$0xff] %vm492, 0.0
        %495 = vst.msk [vmem:[#allocation2 + $0x10] sm:$0xff] %vm492, 0.0
        %vm496 = vcmask 257024
        %497 = vst.msk [vmem:[#allocation2 + $0x18] sm:$0xf] %vm496, 0.0
        %v498 = vld [vmem:[%s491] sm:$0xff]
        %v499 = vld [vmem:[%s491 + $0x8] sm:$0xff]
        %v500 = vld [vmem:[%s491 + $0x10] sm:$0xff]
        %v501 = vld [vmem:[%s491 + $0x18] sm:$0xf]
        %506 = vrot.lane.b32.xlu0 %v498, 2
        %v507 = vpop.permute.xlu0 %506
        %508 = vrot.lane.b32.xlu0 %v499, 2
        %v509 = vpop.permute.xlu0 %508
        %510 = vrot.lane.b32.xlu0 %v500, 2
        %v511 = vpop.permute.xlu0 %510
        %512 = vrot.lane.b32.xlu0 %v501, 2
        %v513 = vpop.permute.xlu0 %512
        %vm518 = vcmask 244752
        %519 = vst.msk [vmem:[#allocation2] sm:$0xff] %vm518, %v507
        %520 = vst.msk [vmem:[#allocation2 + $0x8] sm:$0xff] %vm518, %v509
        %521 = vst.msk [vmem:[#allocation2 + $0x10] sm:$0xff] %vm518, %v511
        %vm522 = vcmask 240656
        %523 = vst.msk [vmem:[#allocation2 + $0x18] sm:$0xf] %vm522, %v513
        %v524 = vld [vmem:[%s1] sm:$0xff]
        %v525 = vld [vmem:[%s1 + $0x8] sm:$0xff]
        %v526 = vld [vmem:[%s1 + $0x10] sm:$0xff]
        %v527 = vld [vmem:[%s1 + $0x18] sm:$0xff]
        %v528 = vld [vmem:[%s1 + $0x20] sm:$0xff]
        %v529 = vld [vmem:[%s1 + $0x28] sm:$0xff]
        %v530 = vld [vmem:[%s1 + $0x30] sm:$0xff]
        %v531 = vld [vmem:[%s1 + $0x38] sm:$0xff]
        %v532 = vld [vmem:[%s1 + $0x40] sm:$0xff]
        %v533 = vld [vmem:[%s1 + $0x48] sm:$0xff]
        %v534 = vld [vmem:[%s1 + $0x50] sm:$0xff]
        %v535 = vld [vmem:[%s1 + $0x58] sm:$0xff]
        %v536 = vld [vmem:[%s1 + $0x60] sm:$0xff]
        %v537 = vld [vmem:[%s1 + $0x68] sm:$0xff]
        %v538 = vld [vmem:[%s1 + $0x70] sm:$0xff]
        %v539 = vld [vmem:[%s1 + $0x78] sm:$0xff]
        %v540 = vld [vmem:[%s1 + $0x80] sm:$0xff]
        %v541 = vld [vmem:[%s1 + $0x88] sm:$0xff]
        %v542 = vld [vmem:[%s1 + $0x90] sm:$0xff]
        %v543 = vld [vmem:[%s1 + $0x98] sm:$0xff]
        %v544 = vld [vmem:[%s1 + $0xa0] sm:$0xff]
        %v545 = vld [vmem:[#allocation2] sm:$0xff]
        %v546 = vld [vmem:[#allocation2 + $0x8] sm:$0xff]
        %v547 = vld [vmem:[#allocation2 + $0x10] sm:$0xff]
        %v548 = vld [vmem:[#allocation2 + $0x18] sm:$0xf]
        %s549 = scalar_lea.vmem %s1, 168
        %v550 = vld [vmem:[%s549] sm:$0xff]
        %v551 = vld [vmem:[%s549 + $0x8] sm:$0xff]
        %v552 = vld [vmem:[%s549 + $0x10] sm:$0xff]
        %v553 = vld [vmem:[%s549 + $0x18] sm:$0xff]
        %v554 = vld [vmem:[%s549 + $0x20] sm:$0xff]
        %v555 = vld [vmem:[%s549 + $0x28] sm:$0xff]
        %v556 = vld [vmem:[%s549 + $0x30] sm:$0xff]
        %v557 = vld [vmem:[%s549 + $0x38] sm:$0xff]
        %v558 = vld [vmem:[%s549 + $0x40] sm:$0xff]
        %v559 = vld [vmem:[%s549 + $0x48] sm:$0xff]
        %v560 = vld [vmem:[%s549 + $0x50] sm:$0xff]
        %v561 = vld [vmem:[%s549 + $0x58] sm:$0xff]
        %v562 = vld [vmem:[%s549 + $0x60] sm:$0xff]
        %v563 = vld [vmem:[%s549 + $0x68] sm:$0xff]
        %v564 = vld [vmem:[%s549 + $0x70] sm:$0xff]
        %v565 = vld [vmem:[%s549 + $0x78] sm:$0xff]
        %v566 = vld [vmem:[%s549 + $0x80] sm:$0xff]
        %v567 = vld [vmem:[%s549 + $0x88] sm:$0xff]
        %v568 = vld [vmem:[%s549 + $0x90] sm:$0xff]
        %v569 = vld [vmem:[%s549 + $0x98] sm:$0xff]
        %v570 = vld [vmem:[%s549 + $0xa0] sm:$0xff]
        %575 = vrot.lane.b32.xlu0 %v545, 127
        %v576 = vpop.permute.xlu0 %575
        %577 = vrot.lane.b32.xlu0 %v546, 127
        %v578 = vpop.permute.xlu0 %577
        %579 = vrot.lane.b32.xlu0 %v547, 127
        %v580 = vpop.permute.xlu0 %579
        %581 = vrot.lane.b32.xlu0 %v548, 127
        %v582 = vpop.permute.xlu0 %581
        %vm586 = vcmask 228352
        %v588 = vsel %vm586, %v550, 0
        %v591 = vsel %vm586, %v551, 0
        %v594 = vsel %vm586, %v552, 0
        %v597 = vsel %vm586, %v553, 0
        %v600 = vsel %vm586, %v554, 0
        %v603 = vsel %vm586, %v555, 0
        %v606 = vsel %vm586, %v556, 0
        %v609 = vsel %vm586, %v557, 0
        %v612 = vsel %vm586, %v558, 0
        %v615 = vsel %vm586, %v559, 0
        %v618 = vsel %vm586, %v560, 0
        %v621 = vsel %vm586, %v561, 0
        %v624 = vsel %vm586, %v562, 0
        %v627 = vsel %vm586, %v563, 0
        %v630 = vsel %vm586, %v564, 0
        %v633 = vsel %vm586, %v565, 0
        %v636 = vsel %vm586, %v566, 0
        %v639 = vsel %vm586, %v567, 0
        %v642 = vsel %vm586, %v568, 0
        %v645 = vsel %vm586, %v569, 0
        %v648 = vsel %vm586, %v570, 0
        %vm650 = vcmask 1043456
        %v651 = vsel %vm650, %v582, 0
        %653 = vmatprep.subr.mxu0 0.0
        %654 = vmatpush1.msra.mxu0 0.0
        %655 = vmatprep.subr.mxu0 0.0
        %656 = vmatpush1.msra.mxu0 0.0
        %657 = vmatprep.subr.mxu0 0.0
        %658 = vmatpush1.msra.mxu0 0.0
        %659 = vmatprep.subr.mxu0 0.0
        %660 = vmatpush1.msra.mxu0 0.0
        %661 = vmatprep.subr.mxu0 0.0
        %662 = vmatpush1.msra.mxu0 0.0
        %663 = vmatprep.subr.mxu0 0.0
        %664 = vmatpush1.msra.mxu0 0.0
        %665 = vmatprep.subr.mxu0 0.0
        %666 = vmatpush1.msra.mxu0 0.0
        %667 = vmatprep.subr.mxu0 0.0
        %668 = vmatpush1.msra.mxu0 0.0
        %669 = vmatprep.subr.mxu0 0.0
        %670 = vmatpush1.msra.mxu0 0.0
        %671 = vmatprep.subr.mxu0 0.0
        %672 = vmatpush1.msra.mxu0 0.0
        %673 = vmatprep.subr.mxu0 0.0
        %674 = vmatpush1.msra.mxu0 0.0
        %675 = vmatprep.subr.mxu0 0.0
        %676 = vmatpush1.msra.mxu0 0.0
        %677 = vmatprep.subr.mxu0 0.0
        %678 = vmatpush1.msra.mxu0 %v651
        %679 = vmatprep.subr.mxu0 0.0
        %680 = vmatpush1.msra.mxu0 %v580
        %681 = vmatprep.subr.mxu0 0.0
        %682 = vmatpush1.msra.mxu0 %v578
        %683 = vmatprep.subr.mxu0 0.0
        %684 = vmatpush1.msra.mxu0 %v576
        %685 = vmatprep.subr.mxu0 0.0
        %686 = vmatpush2.msra.mxu0 0.0
        %687 = vmatprep.subr.mxu0 0.0
        %688 = vmatpush2.msra.mxu0 0.0
        %689 = vmatprep.subr.mxu0 0.0
        %690 = vmatpush2.msra.mxu0 0.0
        %691 = vmatprep.subr.mxu0 0.0
        %692 = vmatpush2.msra.mxu0 0.0
        %693 = vmatprep.subr.mxu0 0.0
        %694 = vmatpush2.msra.mxu0 0.0
        %695 = vmatprep.subr.mxu0 0.0
        %696 = vmatpush2.msra.mxu0 0.0
        %697 = vmatprep.subr.mxu0 0.0
        %698 = vmatpush2.msra.mxu0 0.0
        %699 = vmatprep.subr.mxu0 0.0
        %700 = vmatpush2.msra.mxu0 0.0
        %701 = vmatprep.subr.mxu0 0.0
        %702 = vmatpush2.msra.mxu0 0.0
        %703 = vmatprep.subr.mxu0 0.0
        %704 = vmatpush2.msra.mxu0 0.0
        %705 = vmatprep.subr.mxu0 0.0
        %706 = vmatpush2.msra.mxu0 0.0
        %707 = vmatprep.subr.mxu0 0.0
        %708 = vmatpush2.msra.mxu0 0.0
        %709 = vmatprep.subr.mxu0 0.0
        %710 = vmatpush2.msra.mxu0 0.0
        %711 = vmatprep.subr.mxu0 0.0
        %712 = vmatpush2.msra.mxu0 0.0
        %713 = vmatprep.subr.mxu0 0.0
        %714 = vmatpush2.msra.mxu0 0.0
        %715 = vmatprep.subr.mxu0 0.0
        %716 = vmatpush2.msra.mxu0 0.0
        %717 = vmatprep.mubr.f32.mxu0 0.0
        %718 = vmatmul.mubr.f32.gmra.mxu0 %v588
        %v719 = vpop.f32.mrf.mxu0
        %v720 = vadd.f32 0.0, %v719
        %v721 = vpop.f32.mrf.mxu0
        %722 = vmatprep.mubr.f32.mxu0 0.0
        %723 = vmatmul.mubr.f32.gmra.mxu0 %v591
        %v724 = vpop.f32.mrf.mxu0
        %v725 = vadd.f32 0.0, %v724
        %v726 = vpop.f32.mrf.mxu0
        %727 = vmatprep.mubr.f32.mxu0 0.0
        %728 = vmatmul.mubr.f32.gmra.mxu0 %v594
        %v729 = vpop.f32.mrf.mxu0
        %v730 = vadd.f32 0.0, %v729
        %v731 = vpop.f32.mrf.mxu0
        %732 = vmatprep.mubr.f32.mxu0 0.0
        %733 = vmatmul.mubr.f32.gmra.mxu0 %v597
        %v734 = vpop.f32.mrf.mxu0
        %v735 = vadd.f32 0.0, %v734
        %v736 = vpop.f32.mrf.mxu0
        %737 = vmatprep.mubr.f32.mxu0 0.0
        %738 = vmatmul.mubr.f32.gmra.mxu0 %v600
        %v739 = vpop.f32.mrf.mxu0
        %v740 = vadd.f32 0.0, %v739
        %v741 = vpop.f32.mrf.mxu0
        %742 = vmatprep.mubr.f32.mxu0 0.0
        %743 = vmatmul.mubr.f32.gmra.mxu0 %v603
        %v744 = vpop.f32.mrf.mxu0
        %v745 = vadd.f32 0.0, %v744
        %v746 = vpop.f32.mrf.mxu0
        %747 = vmatprep.mubr.f32.mxu0 0.0
        %748 = vmatmul.mubr.f32.gmra.mxu0 %v606
        %v749 = vpop.f32.mrf.mxu0
        %v750 = vadd.f32 0.0, %v749
        %v751 = vpop.f32.mrf.mxu0
        %752 = vmatprep.mubr.f32.mxu0 0.0
        %753 = vmatmul.mubr.f32.gmra.mxu0 %v609
        %v754 = vpop.f32.mrf.mxu0
        %v755 = vadd.f32 0.0, %v754
        %v756 = vpop.f32.mrf.mxu0
        %757 = vmatprep.mubr.f32.mxu0 0.0
        %758 = vmatmul.mubr.f32.gmra.mxu0 %v612
        %v759 = vpop.f32.mrf.mxu0
        %v760 = vadd.f32 0.0, %v759
        %v761 = vpop.f32.mrf.mxu0
        %762 = vmatprep.mubr.f32.mxu0 0.0
        %763 = vmatmul.mubr.f32.gmra.mxu0 %v615
        %v764 = vpop.f32.mrf.mxu0
        %v765 = vadd.f32 0.0, %v764
        %v766 = vpop.f32.mrf.mxu0
        %767 = vmatprep.mubr.f32.mxu0 0.0
        %768 = vmatmul.mubr.f32.gmra.mxu0 %v618
        %v769 = vpop.f32.mrf.mxu0
        %v770 = vadd.f32 0.0, %v769
        %v771 = vpop.f32.mrf.mxu0
        %772 = vmatprep.mubr.f32.mxu0 0.0
        %773 = vmatmul.mubr.f32.gmra.mxu0 %v621
        %v774 = vpop.f32.mrf.mxu0
        %v775 = vadd.f32 0.0, %v774
        %v776 = vpop.f32.mrf.mxu0
        %777 = vmatprep.mubr.f32.mxu0 0.0
        %778 = vmatmul.mubr.f32.gmra.mxu0 %v624
        %v779 = vpop.f32.mrf.mxu0
        %v780 = vadd.f32 0.0, %v779
        %v781 = vpop.f32.mrf.mxu0
        %782 = vmatprep.mubr.f32.mxu0 0.0
        %783 = vmatmul.mubr.f32.gmra.mxu0 %v627
        %v784 = vpop.f32.mrf.mxu0
        %v785 = vadd.f32 0.0, %v784
        %v786 = vpop.f32.mrf.mxu0
        %787 = vmatprep.mubr.f32.mxu0 0.0
        %788 = vmatmul.mubr.f32.gmra.mxu0 %v630
        %v789 = vpop.f32.mrf.mxu0
        %v790 = vadd.f32 0.0, %v789
        %v791 = vpop.f32.mrf.mxu0
        %792 = vmatprep.mubr.f32.mxu0 0.0
        %793 = vmatmul.mubr.f32.gmra.mxu0 %v633
        %v794 = vpop.f32.mrf.mxu0
        %v795 = vadd.f32 0.0, %v794
        %v796 = vpop.f32.mrf.mxu0
        %797 = vmatprep.mubr.f32.mxu0 0.0
        %798 = vmatmul.mubr.f32.gmra.mxu0 %v636
        %v799 = vpop.f32.mrf.mxu0
        %v800 = vadd.f32 0.0, %v799
        %v801 = vpop.f32.mrf.mxu0
        %802 = vmatprep.mubr.f32.mxu0 0.0
        %803 = vmatmul.mubr.f32.gmra.mxu0 %v639
        %v804 = vpop.f32.mrf.mxu0
        %v805 = vadd.f32 0.0, %v804
        %v806 = vpop.f32.mrf.mxu0
        %807 = vmatprep.mubr.f32.mxu0 0.0
        %808 = vmatmul.mubr.f32.gmra.mxu0 %v642
        %v809 = vpop.f32.mrf.mxu0
        %v810 = vadd.f32 0.0, %v809
        %v811 = vpop.f32.mrf.mxu0
        %812 = vmatprep.mubr.f32.mxu0 0.0
        %813 = vmatmul.mubr.f32.gmra.mxu0 %v645
        %v814 = vpop.f32.mrf.mxu0
        %v815 = vadd.f32 0.0, %v814
        %v816 = vpop.f32.mrf.mxu0
        %817 = vmatprep.mubr.f32.mxu0 0.0
        %818 = vmatmul.mubr.f32.gmra.mxu0 %v648
        %v819 = vpop.f32.mrf.mxu0
        %v820 = vadd.f32 0.0, %v819
        %v821 = vpop.f32.mrf.mxu0
        %822 = vdwg.mxu0
        %v824 = vsel %vm586, %v524, 0
        %v827 = vsel %vm586, %v525, 0
        %v830 = vsel %vm586, %v526, 0
        %v833 = vsel %vm586, %v527, 0
        %v836 = vsel %vm586, %v528, 0
        %v839 = vsel %vm586, %v529, 0
        %v842 = vsel %vm586, %v530, 0
        %v845 = vsel %vm586, %v531, 0
        %v848 = vsel %vm586, %v532, 0
        %v851 = vsel %vm586, %v533, 0
        %v854 = vsel %vm586, %v534, 0
        %v857 = vsel %vm586, %v535, 0
        %v860 = vsel %vm586, %v536, 0
        %v863 = vsel %vm586, %v537, 0
        %v866 = vsel %vm586, %v538, 0
        %v869 = vsel %vm586, %v539, 0
        %v872 = vsel %vm586, %v540, 0
        %v875 = vsel %vm586, %v541, 0
        %v878 = vsel %vm586, %v542, 0
        %v881 = vsel %vm586, %v543, 0
        %v884 = vsel %vm586, %v544, 0
        %v886 = vsel %vm650, %v548, 0
        %888 = vmatprep.subr.mxu0 0.0
        %889 = vmatpush1.msra.mxu0 0.0
        %890 = vmatprep.subr.mxu0 0.0
        %891 = vmatpush1.msra.mxu0 0.0
        %892 = vmatprep.subr.mxu0 0.0
        %893 = vmatpush1.msra.mxu0 0.0
        %894 = vmatprep.subr.mxu0 0.0
        %895 = vmatpush1.msra.mxu0 0.0
        %896 = vmatprep.subr.mxu0 0.0
        %897 = vmatpush1.msra.mxu0 0.0
        %898 = vmatprep.subr.mxu0 0.0
        %899 = vmatpush1.msra.mxu0 0.0
        %900 = vmatprep.subr.mxu0 0.0
        %901 = vmatpush1.msra.mxu0 0.0
        %902 = vmatprep.subr.mxu0 0.0
        %903 = vmatpush1.msra.mxu0 0.0
        %904 = vmatprep.subr.mxu0 0.0
        %905 = vmatpush1.msra.mxu0 0.0
        %906 = vmatprep.subr.mxu0 0.0
        %907 = vmatpush1.msra.mxu0 0.0
        %908 = vmatprep.subr.mxu0 0.0
        %909 = vmatpush1.msra.mxu0 0.0
        %910 = vmatprep.subr.mxu0 0.0
        %911 = vmatpush1.msra.mxu0 0.0
        %912 = vmatprep.subr.mxu0 0.0
        %913 = vmatpush1.msra.mxu0 %v886
        %914 = vmatprep.subr.mxu0 0.0
        %915 = vmatpush1.msra.mxu0 %v547
        %916 = vmatprep.subr.mxu0 0.0
        %917 = vmatpush1.msra.mxu0 %v546
        %918 = vmatprep.subr.mxu0 0.0
        %919 = vmatpush1.msra.mxu0 %v545
        %920 = vmatprep.subr.mxu0 0.0
        %921 = vmatpush2.msra.mxu0 0.0
        %922 = vmatprep.subr.mxu0 0.0
        %923 = vmatpush2.msra.mxu0 0.0
        %924 = vmatprep.subr.mxu0 0.0
        %925 = vmatpush2.msra.mxu0 0.0
        %926 = vmatprep.subr.mxu0 0.0
        %927 = vmatpush2.msra.mxu0 0.0
        %928 = vmatprep.subr.mxu0 0.0
        %929 = vmatpush2.msra.mxu0 0.0
        %930 = vmatprep.subr.mxu0 0.0
        %931 = vmatpush2.msra.mxu0 0.0
        %932 = vmatprep.subr.mxu0 0.0
        %933 = vmatpush2.msra.mxu0 0.0
        %934 = vmatprep.subr.mxu0 0.0
        %935 = vmatpush2.msra.mxu0 0.0
        %936 = vmatprep.subr.mxu0 0.0
        %937 = vmatpush2.msra.mxu0 0.0
        %938 = vmatprep.subr.mxu0 0.0
        %939 = vmatpush2.msra.mxu0 0.0
        %940 = vmatprep.subr.mxu0 0.0
        %941 = vmatpush2.msra.mxu0 0.0
        %942 = vmatprep.subr.mxu0 0.0
        %943 = vmatpush2.msra.mxu0 0.0
        %944 = vmatprep.subr.mxu0 0.0
        %945 = vmatpush2.msra.mxu0 0.0
        %946 = vmatprep.subr.mxu0 0.0
        %947 = vmatpush2.msra.mxu0 0.0
        %948 = vmatprep.subr.mxu0 0.0
        %949 = vmatpush2.msra.mxu0 0.0
        %950 = vmatprep.subr.mxu0 0.0
        %951 = vmatpush2.msra.mxu0 0.0
        %952 = vmatprep.mubr.f32.mxu0 0.0
        %953 = vmatmul.mubr.f32.gmra.mxu0 %v824
        %v954 = vpop.f32.mrf.mxu0
        %v955 = vadd.f32 %v720, %v954
        %v956 = vpop.f32.mrf.mxu0
        %957 = vmatprep.mubr.f32.mxu0 0.0
        %958 = vmatmul.mubr.f32.gmra.mxu0 %v827
        %v959 = vpop.f32.mrf.mxu0
        %v960 = vadd.f32 %v725, %v959
        %v961 = vpop.f32.mrf.mxu0
        %962 = vmatprep.mubr.f32.mxu0 0.0
        %963 = vmatmul.mubr.f32.gmra.mxu0 %v830
        %v964 = vpop.f32.mrf.mxu0
        %v965 = vadd.f32 %v730, %v964
        %v966 = vpop.f32.mrf.mxu0
        %967 = vmatprep.mubr.f32.mxu0 0.0
        %968 = vmatmul.mubr.f32.gmra.mxu0 %v833
        %v969 = vpop.f32.mrf.mxu0
        %v970 = vadd.f32 %v735, %v969
        %v971 = vpop.f32.mrf.mxu0
        %972 = vmatprep.mubr.f32.mxu0 0.0
        %973 = vmatmul.mubr.f32.gmra.mxu0 %v836
        %v974 = vpop.f32.mrf.mxu0
        %v975 = vadd.f32 %v740, %v974
        %v976 = vpop.f32.mrf.mxu0
        %977 = vmatprep.mubr.f32.mxu0 0.0
        %978 = vmatmul.mubr.f32.gmra.mxu0 %v839
        %v979 = vpop.f32.mrf.mxu0
        %v980 = vadd.f32 %v745, %v979
        %v981 = vpop.f32.mrf.mxu0
        %982 = vmatprep.mubr.f32.mxu0 0.0
        %983 = vmatmul.mubr.f32.gmra.mxu0 %v842
        %v984 = vpop.f32.mrf.mxu0
        %v985 = vadd.f32 %v750, %v984
        %v986 = vpop.f32.mrf.mxu0
        %987 = vmatprep.mubr.f32.mxu0 0.0
        %988 = vmatmul.mubr.f32.gmra.mxu0 %v845
        %v989 = vpop.f32.mrf.mxu0
        %v990 = vadd.f32 %v755, %v989
        %v991 = vpop.f32.mrf.mxu0
        %992 = vmatprep.mubr.f32.mxu0 0.0
        %993 = vmatmul.mubr.f32.gmra.mxu0 %v848
        %v994 = vpop.f32.mrf.mxu0
        %v995 = vadd.f32 %v760, %v994
        %v996 = vpop.f32.mrf.mxu0
        %997 = vmatprep.mubr.f32.mxu0 0.0
        %998 = vmatmul.mubr.f32.gmra.mxu0 %v851
        %v999 = vpop.f32.mrf.mxu0
        %v1000 = vadd.f32 %v765, %v999
        %v1001 = vpop.f32.mrf.mxu0
        %1002 = vmatprep.mubr.f32.mxu0 0.0
        %1003 = vmatmul.mubr.f32.gmra.mxu0 %v854
        %v1004 = vpop.f32.mrf.mxu0
        %v1005 = vadd.f32 %v770, %v1004
        %v1006 = vpop.f32.mrf.mxu0
        %1007 = vmatprep.mubr.f32.mxu0 0.0
        %1008 = vmatmul.mubr.f32.gmra.mxu0 %v857
        %v1009 = vpop.f32.mrf.mxu0
        %v1010 = vadd.f32 %v775, %v1009
        %v1011 = vpop.f32.mrf.mxu0
        %1012 = vmatprep.mubr.f32.mxu0 0.0
        %1013 = vmatmul.mubr.f32.gmra.mxu0 %v860
        %v1014 = vpop.f32.mrf.mxu0
        %v1015 = vadd.f32 %v780, %v1014
        %v1016 = vpop.f32.mrf.mxu0
        %1017 = vmatprep.mubr.f32.mxu0 0.0
        %1018 = vmatmul.mubr.f32.gmra.mxu0 %v863
        %v1019 = vpop.f32.mrf.mxu0
        %v1020 = vadd.f32 %v785, %v1019
        %v1021 = vpop.f32.mrf.mxu0
        %1022 = vmatprep.mubr.f32.mxu0 0.0
        %1023 = vmatmul.mubr.f32.gmra.mxu0 %v866
        %v1024 = vpop.f32.mrf.mxu0
        %v1025 = vadd.f32 %v790, %v1024
        %v1026 = vpop.f32.mrf.mxu0
        %1027 = vmatprep.mubr.f32.mxu0 0.0
        %1028 = vmatmul.mubr.f32.gmra.mxu0 %v869
        %v1029 = vpop.f32.mrf.mxu0
        %v1030 = vadd.f32 %v795, %v1029
        %v1031 = vpop.f32.mrf.mxu0
        %1032 = vmatprep.mubr.f32.mxu0 0.0
        %1033 = vmatmul.mubr.f32.gmra.mxu0 %v872
        %v1034 = vpop.f32.mrf.mxu0
        %v1035 = vadd.f32 %v800, %v1034
        %v1036 = vpop.f32.mrf.mxu0
        %1037 = vmatprep.mubr.f32.mxu0 0.0
        %1038 = vmatmul.mubr.f32.gmra.mxu0 %v875
        %v1039 = vpop.f32.mrf.mxu0
        %v1040 = vadd.f32 %v805, %v1039
        %v1041 = vpop.f32.mrf.mxu0
        %1042 = vmatprep.mubr.f32.mxu0 0.0
        %1043 = vmatmul.mubr.f32.gmra.mxu0 %v878
        %v1044 = vpop.f32.mrf.mxu0
        %v1045 = vadd.f32 %v810, %v1044
        %v1046 = vpop.f32.mrf.mxu0
        %1047 = vmatprep.mubr.f32.mxu0 0.0
        %1048 = vmatmul.mubr.f32.gmra.mxu0 %v881
        %v1049 = vpop.f32.mrf.mxu0
        %v1050 = vadd.f32 %v815, %v1049
        %v1051 = vpop.f32.mrf.mxu0
        %1052 = vmatprep.mubr.f32.mxu0 0.0
        %1053 = vmatmul.mubr.f32.gmra.mxu0 %v884
        %v1054 = vpop.f32.mrf.mxu0
        %v1055 = vadd.f32 %v820, %v1054
        %v1056 = vpop.f32.mrf.mxu0
        %1057 = vdwg.mxu0
        %s1058 = scalar_lea.vmem %s1, 336
        %v1059 = vld [vmem:[%s1058] sm:$0xff]
        %v1060 = vld [vmem:[%s1058 + $0x8] sm:$0xff]
        %v1061 = vld [vmem:[%s1058 + $0x10] sm:$0xff]
        %v1062 = vld [vmem:[%s1058 + $0x18] sm:$0xff]
        %v1063 = vld [vmem:[%s1058 + $0x20] sm:$0xff]
        %v1064 = vld [vmem:[%s1058 + $0x28] sm:$0xff]
        %v1065 = vld [vmem:[%s1058 + $0x30] sm:$0xff]
        %v1066 = vld [vmem:[%s1058 + $0x38] sm:$0xff]
        %v1067 = vld [vmem:[%s1058 + $0x40] sm:$0xff]
        %v1068 = vld [vmem:[%s1058 + $0x48] sm:$0xff]
        %v1069 = vld [vmem:[%s1058 + $0x50] sm:$0xff]
        %v1070 = vld [vmem:[%s1058 + $0x58] sm:$0xff]
        %v1071 = vld [vmem:[%s1058 + $0x60] sm:$0xff]
        %v1072 = vld [vmem:[%s1058 + $0x68] sm:$0xff]
        %v1073 = vld [vmem:[%s1058 + $0x70] sm:$0xff]
        %v1074 = vld [vmem:[%s1058 + $0x78] sm:$0xff]
        %v1075 = vld [vmem:[%s1058 + $0x80] sm:$0xff]
        %v1076 = vld [vmem:[%s1058 + $0x88] sm:$0xff]
        %v1077 = vld [vmem:[%s1058 + $0x90] sm:$0xff]
        %v1078 = vld [vmem:[%s1058 + $0x98] sm:$0xff]
        %v1079 = vld [vmem:[%s1058 + $0xa0] sm:$0xff]
        %1080 = vrot.lane.b32.xlu0 %v545, 126
        %v1081 = vpop.permute.xlu0 %1080
        %1082 = vrot.lane.b32.xlu0 %v546, 126
        %v1083 = vpop.permute.xlu0 %1082
        %1084 = vrot.lane.b32.xlu0 %v547, 126
        %v1085 = vpop.permute.xlu0 %1084
        %1086 = vrot.lane.b32.xlu0 %v548, 126
        %v1087 = vpop.permute.xlu0 %1086
        %v1092 = vsel %vm586, %v1059, 0
        %v1095 = vsel %vm586, %v1060, 0
        %v1098 = vsel %vm586, %v1061, 0
        %v1101 = vsel %vm586, %v1062, 0
        %v1104 = vsel %vm586, %v1063, 0
        %v1107 = vsel %vm586, %v1064, 0
        %v1110 = vsel %vm586, %v1065, 0
        %v1113 = vsel %vm586, %v1066, 0
        %v1116 = vsel %vm586, %v1067, 0
        %v1119 = vsel %vm586, %v1068, 0
        %v1122 = vsel %vm586, %v1069, 0
        %v1125 = vsel %vm586, %v1070, 0
        %v1128 = vsel %vm586, %v1071, 0
        %v1131 = vsel %vm586, %v1072, 0
        %v1134 = vsel %vm586, %v1073, 0
        %v1137 = vsel %vm586, %v1074, 0
        %v1140 = vsel %vm586, %v1075, 0
        %v1143 = vsel %vm586, %v1076, 0
        %v1146 = vsel %vm586, %v1077, 0
        %v1149 = vsel %vm586, %v1078, 0
        %v1152 = vsel %vm586, %v1079, 0
        %v1154 = vsel %vm650, %v1087, 0
        %1156 = vmatprep.subr.mxu0 0.0
        %1157 = vmatpush1.msra.mxu0 0.0
        %1158 = vmatprep.subr.mxu0 0.0
        %1159 = vmatpush1.msra.mxu0 0.0
        %1160 = vmatprep.subr.mxu0 0.0
        %1161 = vmatpush1.msra.mxu0 0.0
        %1162 = vmatprep.subr.mxu0 0.0
        %1163 = vmatpush1.msra.mxu0 0.0
        %1164 = vmatprep.subr.mxu0 0.0
        %1165 = vmatpush1.msra.mxu0 0.0
        %1166 = vmatprep.subr.mxu0 0.0
        %1167 = vmatpush1.msra.mxu0 0.0
        %1168 = vmatprep.subr.mxu0 0.0
        %1169 = vmatpush1.msra.mxu0 0.0
        %1170 = vmatprep.subr.mxu0 0.0
        %1171 = vmatpush1.msra.mxu0 0.0
        %1172 = vmatprep.subr.mxu0 0.0
        %1173 = vmatpush1.msra.mxu0 0.0
        %1174 = vmatprep.subr.mxu0 0.0
        %1175 = vmatpush1.msra.mxu0 0.0
        %1176 = vmatprep.subr.mxu0 0.0
        %1177 = vmatpush1.msra.mxu0 0.0
        %1178 = vmatprep.subr.mxu0 0.0
        %1179 = vmatpush1.msra.mxu0 0.0
        %1180 = vmatprep.subr.mxu0 0.0
        %1181 = vmatpush1.msra.mxu0 %v1154
        %1182 = vmatprep.subr.mxu0 0.0
        %1183 = vmatpush1.msra.mxu0 %v1085
        %1184 = vmatprep.subr.mxu0 0.0
        %1185 = vmatpush1.msra.mxu0 %v1083
        %1186 = vmatprep.subr.mxu0 0.0
        %1187 = vmatpush1.msra.mxu0 %v1081
        %1188 = vmatprep.subr.mxu0 0.0
        %1189 = vmatpush2.msra.mxu0 0.0
        %1190 = vmatprep.subr.mxu0 0.0
        %1191 = vmatpush2.msra.mxu0 0.0
        %1192 = vmatprep.subr.mxu0 0.0
        %1193 = vmatpush2.msra.mxu0 0.0
        %1194 = vmatprep.subr.mxu0 0.0
        %1195 = vmatpush2.msra.mxu0 0.0
        %1196 = vmatprep.subr.mxu0 0.0
        %1197 = vmatpush2.msra.mxu0 0.0
        %1198 = vmatprep.subr.mxu0 0.0
        %1199 = vmatpush2.msra.mxu0 0.0
        %1200 = vmatprep.subr.mxu0 0.0
        %1201 = vmatpush2.msra.mxu0 0.0
        %1202 = vmatprep.subr.mxu0 0.0
        %1203 = vmatpush2.msra.mxu0 0.0
        %1204 = vmatprep.subr.mxu0 0.0
        %1205 = vmatpush2.msra.mxu0 0.0
        %1206 = vmatprep.subr.mxu0 0.0
        %1207 = vmatpush2.msra.mxu0 0.0
        %1208 = vmatprep.subr.mxu0 0.0
        %1209 = vmatpush2.msra.mxu0 0.0
        %1210 = vmatprep.subr.mxu0 0.0
        %1211 = vmatpush2.msra.mxu0 0.0
        %1212 = vmatprep.subr.mxu0 0.0
        %1213 = vmatpush2.msra.mxu0 0.0
        %1214 = vmatprep.subr.mxu0 0.0
        %1215 = vmatpush2.msra.mxu0 0.0
        %1216 = vmatprep.subr.mxu0 0.0
        %1217 = vmatpush2.msra.mxu0 0.0
        %1218 = vmatprep.subr.mxu0 0.0
        %1219 = vmatpush2.msra.mxu0 0.0
        %1220 = vmatprep.mubr.f32.mxu0 0.0
        %1221 = vmatmul.mubr.f32.gmra.mxu0 %v1092
        %v1222 = vpop.f32.mrf.mxu0
        %v1223 = vadd.f32 0.0, %v1222
        %v1224 = vpop.f32.mrf.mxu0
        %1225 = vmatprep.mubr.f32.mxu0 0.0
        %1226 = vmatmul.mubr.f32.gmra.mxu0 %v1095
        %v1227 = vpop.f32.mrf.mxu0
        %v1228 = vadd.f32 0.0, %v1227
        %v1229 = vpop.f32.mrf.mxu0
        %1230 = vmatprep.mubr.f32.mxu0 0.0
        %1231 = vmatmul.mubr.f32.gmra.mxu0 %v1098
        %v1232 = vpop.f32.mrf.mxu0
        %v1233 = vadd.f32 0.0, %v1232
        %v1234 = vpop.f32.mrf.mxu0
        %1235 = vmatprep.mubr.f32.mxu0 0.0
        %1236 = vmatmul.mubr.f32.gmra.mxu0 %v1101
        %v1237 = vpop.f32.mrf.mxu0
        %v1238 = vadd.f32 0.0, %v1237
        %v1239 = vpop.f32.mrf.mxu0
        %1240 = vmatprep.mubr.f32.mxu0 0.0
        %1241 = vmatmul.mubr.f32.gmra.mxu0 %v1104
        %v1242 = vpop.f32.mrf.mxu0
        %v1243 = vadd.f32 0.0, %v1242
        %v1244 = vpop.f32.mrf.mxu0
        %1245 = vmatprep.mubr.f32.mxu0 0.0
        %1246 = vmatmul.mubr.f32.gmra.mxu0 %v1107
        %v1247 = vpop.f32.mrf.mxu0
        %v1248 = vadd.f32 0.0, %v1247
        %v1249 = vpop.f32.mrf.mxu0
        %1250 = vmatprep.mubr.f32.mxu0 0.0
        %1251 = vmatmul.mubr.f32.gmra.mxu0 %v1110
        %v1252 = vpop.f32.mrf.mxu0
        %v1253 = vadd.f32 0.0, %v1252
        %v1254 = vpop.f32.mrf.mxu0
        %1255 = vmatprep.mubr.f32.mxu0 0.0
        %1256 = vmatmul.mubr.f32.gmra.mxu0 %v1113
        %v1257 = vpop.f32.mrf.mxu0
        %v1258 = vadd.f32 0.0, %v1257
        %v1259 = vpop.f32.mrf.mxu0
        %1260 = vmatprep.mubr.f32.mxu0 0.0
        %1261 = vmatmul.mubr.f32.gmra.mxu0 %v1116
        %v1262 = vpop.f32.mrf.mxu0
        %v1263 = vadd.f32 0.0, %v1262
        %v1264 = vpop.f32.mrf.mxu0
        %1265 = vmatprep.mubr.f32.mxu0 0.0
        %1266 = vmatmul.mubr.f32.gmra.mxu0 %v1119
        %v1267 = vpop.f32.mrf.mxu0
        %v1268 = vadd.f32 0.0, %v1267
        %v1269 = vpop.f32.mrf.mxu0
        %1270 = vmatprep.mubr.f32.mxu0 0.0
        %1271 = vmatmul.mubr.f32.gmra.mxu0 %v1122
        %v1272 = vpop.f32.mrf.mxu0
        %v1273 = vadd.f32 0.0, %v1272
        %v1274 = vpop.f32.mrf.mxu0
        %1275 = vmatprep.mubr.f32.mxu0 0.0
        %1276 = vmatmul.mubr.f32.gmra.mxu0 %v1125
        %v1277 = vpop.f32.mrf.mxu0
        %v1278 = vadd.f32 0.0, %v1277
        %v1279 = vpop.f32.mrf.mxu0
        %1280 = vmatprep.mubr.f32.mxu0 0.0
        %1281 = vmatmul.mubr.f32.gmra.mxu0 %v1128
        %v1282 = vpop.f32.mrf.mxu0
        %v1283 = vadd.f32 0.0, %v1282
        %v1284 = vpop.f32.mrf.mxu0
        %1285 = vmatprep.mubr.f32.mxu0 0.0
        %1286 = vmatmul.mubr.f32.gmra.mxu0 %v1131
        %v1287 = vpop.f32.mrf.mxu0
        %v1288 = vadd.f32 0.0, %v1287
        %v1289 = vpop.f32.mrf.mxu0
        %1290 = vmatprep.mubr.f32.mxu0 0.0
        %1291 = vmatmul.mubr.f32.gmra.mxu0 %v1134
        %v1292 = vpop.f32.mrf.mxu0
        %v1293 = vadd.f32 0.0, %v1292
        %v1294 = vpop.f32.mrf.mxu0
        %1295 = vmatprep.mubr.f32.mxu0 0.0
        %1296 = vmatmul.mubr.f32.gmra.mxu0 %v1137
        %v1297 = vpop.f32.mrf.mxu0
        %v1298 = vadd.f32 0.0, %v1297
        %v1299 = vpop.f32.mrf.mxu0
        %1300 = vmatprep.mubr.f32.mxu0 0.0
        %1301 = vmatmul.mubr.f32.gmra.mxu0 %v1140
        %v1302 = vpop.f32.mrf.mxu0
        %v1303 = vadd.f32 0.0, %v1302
        %v1304 = vpop.f32.mrf.mxu0
        %1305 = vmatprep.mubr.f32.mxu0 0.0
        %1306 = vmatmul.mubr.f32.gmra.mxu0 %v1143
        %v1307 = vpop.f32.mrf.mxu0
        %v1308 = vadd.f32 0.0, %v1307
        %v1309 = vpop.f32.mrf.mxu0
        %1310 = vmatprep.mubr.f32.mxu0 0.0
        %1311 = vmatmul.mubr.f32.gmra.mxu0 %v1146
        %v1312 = vpop.f32.mrf.mxu0
        %v1313 = vadd.f32 0.0, %v1312
        %v1314 = vpop.f32.mrf.mxu0
        %1315 = vmatprep.mubr.f32.mxu0 0.0
        %1316 = vmatmul.mubr.f32.gmra.mxu0 %v1149
        %v1317 = vpop.f32.mrf.mxu0
        %v1318 = vadd.f32 0.0, %v1317
        %v1319 = vpop.f32.mrf.mxu0
        %1320 = vmatprep.mubr.f32.mxu0 0.0
        %1321 = vmatmul.mubr.f32.gmra.mxu0 %v1152
        %v1322 = vpop.f32.mrf.mxu0
        %v1323 = vadd.f32 0.0, %v1322
        %v1324 = vpop.f32.mrf.mxu0
        %1325 = vdwg.mxu0
        %v1326 = vadd.f32 %v955, %v1223
        %v1327 = vadd.f32 %v960, %v1228
        %v1328 = vadd.f32 %v965, %v1233
        %v1329 = vadd.f32 %v970, %v1238
        %v1330 = vadd.f32 %v975, %v1243
        %v1331 = vadd.f32 %v980, %v1248
        %v1332 = vadd.f32 %v985, %v1253
        %v1333 = vadd.f32 %v990, %v1258
        %v1334 = vadd.f32 %v995, %v1263
        %v1335 = vadd.f32 %v1000, %v1268
        %v1336 = vadd.f32 %v1005, %v1273
        %v1337 = vadd.f32 %v1010, %v1278
        %v1338 = vadd.f32 %v1015, %v1283
        %v1339 = vadd.f32 %v1020, %v1288
        %v1340 = vadd.f32 %v1025, %v1293
        %v1341 = vadd.f32 %v1030, %v1298
        %v1342 = vadd.f32 %v1035, %v1303
        %v1343 = vadd.f32 %v1040, %v1308
        %v1344 = vadd.f32 %v1045, %v1313
        %v1345 = vadd.f32 %v1050, %v1318
        %v1346 = vadd.f32 %v1055, %v1323
        %s1347 = scalar_lea.vmem %s1, 504
        %v1348 = vld [vmem:[%s1347] sm:$0xff]
        %v1349 = vld [vmem:[%s1347 + $0x8] sm:$0xff]
        %v1350 = vld [vmem:[%s1347 + $0x10] sm:$0xff]
        %v1351 = vld [vmem:[%s1347 + $0x18] sm:$0xff]
        %v1352 = vld [vmem:[%s1347 + $0x20] sm:$0xff]
        %v1353 = vld [vmem:[%s1347 + $0x28] sm:$0xff]
        %v1354 = vld [vmem:[%s1347 + $0x30] sm:$0xff]
        %v1355 = vld [vmem:[%s1347 + $0x38] sm:$0xff]
        %v1356 = vld [vmem:[%s1347 + $0x40] sm:$0xff]
        %v1357 = vld [vmem:[%s1347 + $0x48] sm:$0xff]
        %v1358 = vld [vmem:[%s1347 + $0x50] sm:$0xff]
        %v1359 = vld [vmem:[%s1347 + $0x58] sm:$0xff]
        %v1360 = vld [vmem:[%s1347 + $0x60] sm:$0xff]
        %v1361 = vld [vmem:[%s1347 + $0x68] sm:$0xff]
        %v1362 = vld [vmem:[%s1347 + $0x70] sm:$0xff]
        %v1363 = vld [vmem:[%s1347 + $0x78] sm:$0xff]
        %v1364 = vld [vmem:[%s1347 + $0x80] sm:$0xff]
        %v1365 = vld [vmem:[%s1347 + $0x88] sm:$0xff]
        %v1366 = vld [vmem:[%s1347 + $0x90] sm:$0xff]
        %v1367 = vld [vmem:[%s1347 + $0x98] sm:$0xff]
        %v1368 = vld [vmem:[%s1347 + $0xa0] sm:$0xff]
        %1369 = vrot.lane.b32.xlu0 %v545, 125
        %v1370 = vpop.permute.xlu0 %1369
        %1371 = vrot.lane.b32.xlu0 %v546, 125
        %v1372 = vpop.permute.xlu0 %1371
        %1373 = vrot.lane.b32.xlu0 %v547, 125
        %v1374 = vpop.permute.xlu0 %1373
        %1375 = vrot.lane.b32.xlu0 %v548, 125
        %v1376 = vpop.permute.xlu0 %1375
        %v1381 = vsel %vm586, %v1348, 0
        %v1384 = vsel %vm586, %v1349, 0
        %v1387 = vsel %vm586, %v1350, 0
        %v1390 = vsel %vm586, %v1351, 0
        %v1393 = vsel %vm586, %v1352, 0
        %v1396 = vsel %vm586, %v1353, 0
        %v1399 = vsel %vm586, %v1354, 0
        %v1402 = vsel %vm586, %v1355, 0
        %v1405 = vsel %vm586, %v1356, 0
        %v1408 = vsel %vm586, %v1357, 0
        %v1411 = vsel %vm586, %v1358, 0
        %v1414 = vsel %vm586, %v1359, 0
        %v1417 = vsel %vm586, %v1360, 0
        %v1420 = vsel %vm586, %v1361, 0
        %v1423 = vsel %vm586, %v1362, 0
        %v1426 = vsel %vm586, %v1363, 0
        %v1429 = vsel %vm586, %v1364, 0
        %v1432 = vsel %vm586, %v1365, 0
        %v1435 = vsel %vm586, %v1366, 0
        %v1438 = vsel %vm586, %v1367, 0
        %v1441 = vsel %vm586, %v1368, 0
        %v1443 = vsel %vm650, %v1376, 0
        %1445 = vmatprep.subr.mxu0 0.0
        %1446 = vmatpush1.msra.mxu0 0.0
        %1447 = vmatprep.subr.mxu0 0.0
        %1448 = vmatpush1.msra.mxu0 0.0
        %1449 = vmatprep.subr.mxu0 0.0
        %1450 = vmatpush1.msra.mxu0 0.0
        %1451 = vmatprep.subr.mxu0 0.0
        %1452 = vmatpush1.msra.mxu0 0.0
        %1453 = vmatprep.subr.mxu0 0.0
        %1454 = vmatpush1.msra.mxu0 0.0
        %1455 = vmatprep.subr.mxu0 0.0
        %1456 = vmatpush1.msra.mxu0 0.0
        %1457 = vmatprep.subr.mxu0 0.0
        %1458 = vmatpush1.msra.mxu0 0.0
        %1459 = vmatprep.subr.mxu0 0.0
        %1460 = vmatpush1.msra.mxu0 0.0
        %1461 = vmatprep.subr.mxu0 0.0
        %1462 = vmatpush1.msra.mxu0 0.0
        %1463 = vmatprep.subr.mxu0 0.0
        %1464 = vmatpush1.msra.mxu0 0.0
        %1465 = vmatprep.subr.mxu0 0.0
        %1466 = vmatpush1.msra.mxu0 0.0
        %1467 = vmatprep.subr.mxu0 0.0
        %1468 = vmatpush1.msra.mxu0 0.0
        %1469 = vmatprep.subr.mxu0 0.0
        %1470 = vmatpush1.msra.mxu0 %v1443
        %1471 = vmatprep.subr.mxu0 0.0
        %1472 = vmatpush1.msra.mxu0 %v1374
        %1473 = vmatprep.subr.mxu0 0.0
        %1474 = vmatpush1.msra.mxu0 %v1372
        %1475 = vmatprep.subr.mxu0 0.0
        %1476 = vmatpush1.msra.mxu0 %v1370
        %1477 = vmatprep.subr.mxu0 0.0
        %1478 = vmatpush2.msra.mxu0 0.0
        %1479 = vmatprep.subr.mxu0 0.0
        %1480 = vmatpush2.msra.mxu0 0.0
        %1481 = vmatprep.subr.mxu0 0.0
        %1482 = vmatpush2.msra.mxu0 0.0
        %1483 = vmatprep.subr.mxu0 0.0
        %1484 = vmatpush2.msra.mxu0 0.0
        %1485 = vmatprep.subr.mxu0 0.0
        %1486 = vmatpush2.msra.mxu0 0.0
        %1487 = vmatprep.subr.mxu0 0.0
        %1488 = vmatpush2.msra.mxu0 0.0
        %1489 = vmatprep.subr.mxu0 0.0
        %1490 = vmatpush2.msra.mxu0 0.0
        %1491 = vmatprep.subr.mxu0 0.0
        %1492 = vmatpush2.msra.mxu0 0.0
        %1493 = vmatprep.subr.mxu0 0.0
        %1494 = vmatpush2.msra.mxu0 0.0
        %1495 = vmatprep.subr.mxu0 0.0
        %1496 = vmatpush2.msra.mxu0 0.0
        %1497 = vmatprep.subr.mxu0 0.0
        %1498 = vmatpush2.msra.mxu0 0.0
        %1499 = vmatprep.subr.mxu0 0.0
        %1500 = vmatpush2.msra.mxu0 0.0
        %1501 = vmatprep.subr.mxu0 0.0
        %1502 = vmatpush2.msra.mxu0 0.0
        %1503 = vmatprep.subr.mxu0 0.0
        %1504 = vmatpush2.msra.mxu0 0.0
        %1505 = vmatprep.subr.mxu0 0.0
        %1506 = vmatpush2.msra.mxu0 0.0
        %1507 = vmatprep.subr.mxu0 0.0
        %1508 = vmatpush2.msra.mxu0 0.0
        %1509 = vmatprep.mubr.f32.mxu0 0.0
        %1510 = vmatmul.mubr.f32.gmra.mxu0 %v1381
        %v1511 = vpop.f32.mrf.mxu0
        %v1512 = vadd.f32 0.0, %v1511
        %v1513 = vpop.f32.mrf.mxu0
        %1514 = vmatprep.mubr.f32.mxu0 0.0
        %1515 = vmatmul.mubr.f32.gmra.mxu0 %v1384
        %v1516 = vpop.f32.mrf.mxu0
        %v1517 = vadd.f32 0.0, %v1516
        %v1518 = vpop.f32.mrf.mxu0
        %1519 = vmatprep.mubr.f32.mxu0 0.0
        %1520 = vmatmul.mubr.f32.gmra.mxu0 %v1387
        %v1521 = vpop.f32.mrf.mxu0
        %v1522 = vadd.f32 0.0, %v1521
        %v1523 = vpop.f32.mrf.mxu0
        %1524 = vmatprep.mubr.f32.mxu0 0.0
        %1525 = vmatmul.mubr.f32.gmra.mxu0 %v1390
        %v1526 = vpop.f32.mrf.mxu0
        %v1527 = vadd.f32 0.0, %v1526
        %v1528 = vpop.f32.mrf.mxu0
        %1529 = vmatprep.mubr.f32.mxu0 0.0
        %1530 = vmatmul.mubr.f32.gmra.mxu0 %v1393
        %v1531 = vpop.f32.mrf.mxu0
        %v1532 = vadd.f32 0.0, %v1531
        %v1533 = vpop.f32.mrf.mxu0
        %1534 = vmatprep.mubr.f32.mxu0 0.0
        %1535 = vmatmul.mubr.f32.gmra.mxu0 %v1396
        %v1536 = vpop.f32.mrf.mxu0
        %v1537 = vadd.f32 0.0, %v1536
        %v1538 = vpop.f32.mrf.mxu0
        %1539 = vmatprep.mubr.f32.mxu0 0.0
        %1540 = vmatmul.mubr.f32.gmra.mxu0 %v1399
        %v1541 = vpop.f32.mrf.mxu0
        %v1542 = vadd.f32 0.0, %v1541
        %v1543 = vpop.f32.mrf.mxu0
        %1544 = vmatprep.mubr.f32.mxu0 0.0
        %1545 = vmatmul.mubr.f32.gmra.mxu0 %v1402
        %v1546 = vpop.f32.mrf.mxu0
        %v1547 = vadd.f32 0.0, %v1546
        %v1548 = vpop.f32.mrf.mxu0
        %1549 = vmatprep.mubr.f32.mxu0 0.0
        %1550 = vmatmul.mubr.f32.gmra.mxu0 %v1405
        %v1551 = vpop.f32.mrf.mxu0
        %v1552 = vadd.f32 0.0, %v1551
        %v1553 = vpop.f32.mrf.mxu0
        %1554 = vmatprep.mubr.f32.mxu0 0.0
        %1555 = vmatmul.mubr.f32.gmra.mxu0 %v1408
        %v1556 = vpop.f32.mrf.mxu0
        %v1557 = vadd.f32 0.0, %v1556
        %v1558 = vpop.f32.mrf.mxu0
        %1559 = vmatprep.mubr.f32.mxu0 0.0
        %1560 = vmatmul.mubr.f32.gmra.mxu0 %v1411
        %v1561 = vpop.f32.mrf.mxu0
        %v1562 = vadd.f32 0.0, %v1561
        %v1563 = vpop.f32.mrf.mxu0
        %1564 = vmatprep.mubr.f32.mxu0 0.0
        %1565 = vmatmul.mubr.f32.gmra.mxu0 %v1414
        %v1566 = vpop.f32.mrf.mxu0
        %v1567 = vadd.f32 0.0, %v1566
        %v1568 = vpop.f32.mrf.mxu0
        %1569 = vmatprep.mubr.f32.mxu0 0.0
        %1570 = vmatmul.mubr.f32.gmra.mxu0 %v1417
        %v1571 = vpop.f32.mrf.mxu0
        %v1572 = vadd.f32 0.0, %v1571
        %v1573 = vpop.f32.mrf.mxu0
        %1574 = vmatprep.mubr.f32.mxu0 0.0
        %1575 = vmatmul.mubr.f32.gmra.mxu0 %v1420
        %v1576 = vpop.f32.mrf.mxu0
        %v1577 = vadd.f32 0.0, %v1576
        %v1578 = vpop.f32.mrf.mxu0
        %1579 = vmatprep.mubr.f32.mxu0 0.0
        %1580 = vmatmul.mubr.f32.gmra.mxu0 %v1423
        %v1581 = vpop.f32.mrf.mxu0
        %v1582 = vadd.f32 0.0, %v1581
        %v1583 = vpop.f32.mrf.mxu0
        %1584 = vmatprep.mubr.f32.mxu0 0.0
        %1585 = vmatmul.mubr.f32.gmra.mxu0 %v1426
        %v1586 = vpop.f32.mrf.mxu0
        %v1587 = vadd.f32 0.0, %v1586
        %v1588 = vpop.f32.mrf.mxu0
        %1589 = vmatprep.mubr.f32.mxu0 0.0
        %1590 = vmatmul.mubr.f32.gmra.mxu0 %v1429
        %v1591 = vpop.f32.mrf.mxu0
        %v1592 = vadd.f32 0.0, %v1591
        %v1593 = vpop.f32.mrf.mxu0
        %1594 = vmatprep.mubr.f32.mxu0 0.0
        %1595 = vmatmul.mubr.f32.gmra.mxu0 %v1432
        %v1596 = vpop.f32.mrf.mxu0
        %v1597 = vadd.f32 0.0, %v1596
        %v1598 = vpop.f32.mrf.mxu0
        %1599 = vmatprep.mubr.f32.mxu0 0.0
        %1600 = vmatmul.mubr.f32.gmra.mxu0 %v1435
        %v1601 = vpop.f32.mrf.mxu0
        %v1602 = vadd.f32 0.0, %v1601
        %v1603 = vpop.f32.mrf.mxu0
        %1604 = vmatprep.mubr.f32.mxu0 0.0
        %1605 = vmatmul.mubr.f32.gmra.mxu0 %v1438
        %v1606 = vpop.f32.mrf.mxu0
        %v1607 = vadd.f32 0.0, %v1606
        %v1608 = vpop.f32.mrf.mxu0
        %1609 = vmatprep.mubr.f32.mxu0 0.0
        %1610 = vmatmul.mubr.f32.gmra.mxu0 %v1441
        %v1611 = vpop.f32.mrf.mxu0
        %v1612 = vadd.f32 0.0, %v1611
        %v1613 = vpop.f32.mrf.mxu0
        %1614 = vdwg.mxu0
        %v1615 = vadd.f32 %v1326, %v1512
        %v1616 = vadd.f32 %v1327, %v1517
        %v1617 = vadd.f32 %v1328, %v1522
        %v1618 = vadd.f32 %v1329, %v1527
        %v1619 = vadd.f32 %v1330, %v1532
        %v1620 = vadd.f32 %v1331, %v1537
        %v1621 = vadd.f32 %v1332, %v1542
        %v1622 = vadd.f32 %v1333, %v1547
        %v1623 = vadd.f32 %v1334, %v1552
        %v1624 = vadd.f32 %v1335, %v1557
        %v1625 = vadd.f32 %v1336, %v1562
        %v1626 = vadd.f32 %v1337, %v1567
        %v1627 = vadd.f32 %v1338, %v1572
        %v1628 = vadd.f32 %v1339, %v1577
        %v1629 = vadd.f32 %v1340, %v1582
        %v1630 = vadd.f32 %v1341, %v1587
        %v1631 = vadd.f32 %v1342, %v1592
        %v1632 = vadd.f32 %v1343, %v1597
        %v1633 = vadd.f32 %v1344, %v1602
        %v1634 = vadd.f32 %v1345, %v1607
        %v1635 = vadd.f32 %v1346, %v1612
        %s1636 = scalar_lea.vmem %s1, 672
        %v1637 = vld [vmem:[%s1636] sm:$0xff]
        %v1638 = vld [vmem:[%s1636 + $0x8] sm:$0xff]
        %v1639 = vld [vmem:[%s1636 + $0x10] sm:$0xff]
        %v1640 = vld [vmem:[%s1636 + $0x18] sm:$0xff]
        %v1641 = vld [vmem:[%s1636 + $0x20] sm:$0xff]
        %v1642 = vld [vmem:[%s1636 + $0x28] sm:$0xff]
        %v1643 = vld [vmem:[%s1636 + $0x30] sm:$0xff]
        %v1644 = vld [vmem:[%s1636 + $0x38] sm:$0xff]
        %v1645 = vld [vmem:[%s1636 + $0x40] sm:$0xff]
        %v1646 = vld [vmem:[%s1636 + $0x48] sm:$0xff]
        %v1647 = vld [vmem:[%s1636 + $0x50] sm:$0xff]
        %v1648 = vld [vmem:[%s1636 + $0x58] sm:$0xff]
        %v1649 = vld [vmem:[%s1636 + $0x60] sm:$0xff]
        %v1650 = vld [vmem:[%s1636 + $0x68] sm:$0xff]
        %v1651 = vld [vmem:[%s1636 + $0x70] sm:$0xff]
        %v1652 = vld [vmem:[%s1636 + $0x78] sm:$0xff]
        %v1653 = vld [vmem:[%s1636 + $0x80] sm:$0xff]
        %v1654 = vld [vmem:[%s1636 + $0x88] sm:$0xff]
        %v1655 = vld [vmem:[%s1636 + $0x90] sm:$0xff]
        %v1656 = vld [vmem:[%s1636 + $0x98] sm:$0xff]
        %v1657 = vld [vmem:[%s1636 + $0xa0] sm:$0xff]
        %1658 = vrot.lane.b32.xlu0 %v545, 124
        %v1659 = vpop.permute.xlu0 %1658
        %1660 = vrot.lane.b32.xlu0 %v546, 124
        %v1661 = vpop.permute.xlu0 %1660
        %1662 = vrot.lane.b32.xlu0 %v547, 124
        %v1663 = vpop.permute.xlu0 %1662
        %1664 = vrot.lane.b32.xlu0 %v548, 124
        %v1665 = vpop.permute.xlu0 %1664
        %v1670 = vsel %vm586, %v1637, 0
        %v1673 = vsel %vm586, %v1638, 0
        %v1676 = vsel %vm586, %v1639, 0
        %v1679 = vsel %vm586, %v1640, 0
        %v1682 = vsel %vm586, %v1641, 0
        %v1685 = vsel %vm586, %v1642, 0
        %v1688 = vsel %vm586, %v1643, 0
        %v1691 = vsel %vm586, %v1644, 0
        %v1694 = vsel %vm586, %v1645, 0
        %v1697 = vsel %vm586, %v1646, 0
        %v1700 = vsel %vm586, %v1647, 0
        %v1703 = vsel %vm586, %v1648, 0
        %v1706 = vsel %vm586, %v1649, 0
        %v1709 = vsel %vm586, %v1650, 0
        %v1712 = vsel %vm586, %v1651, 0
        %v1715 = vsel %vm586, %v1652, 0
        %v1718 = vsel %vm586, %v1653, 0
        %v1721 = vsel %vm586, %v1654, 0
        %v1724 = vsel %vm586, %v1655, 0
        %v1727 = vsel %vm586, %v1656, 0
        %v1730 = vsel %vm586, %v1657, 0
        %v1732 = vsel %vm650, %v1665, 0
        %1734 = vmatprep.subr.mxu0 0.0
        %1735 = vmatpush1.msra.mxu0 0.0
        %1736 = vmatprep.subr.mxu0 0.0
        %1737 = vmatpush1.msra.mxu0 0.0
        %1738 = vmatprep.subr.mxu0 0.0
        %1739 = vmatpush1.msra.mxu0 0.0
        %1740 = vmatprep.subr.mxu0 0.0
        %1741 = vmatpush1.msra.mxu0 0.0
        %1742 = vmatprep.subr.mxu0 0.0
        %1743 = vmatpush1.msra.mxu0 0.0
        %1744 = vmatprep.subr.mxu0 0.0
        %1745 = vmatpush1.msra.mxu0 0.0
        %1746 = vmatprep.subr.mxu0 0.0
        %1747 = vmatpush1.msra.mxu0 0.0
        %1748 = vmatprep.subr.mxu0 0.0
        %1749 = vmatpush1.msra.mxu0 0.0
        %1750 = vmatprep.subr.mxu0 0.0
        %1751 = vmatpush1.msra.mxu0 0.0
        %1752 = vmatprep.subr.mxu0 0.0
        %1753 = vmatpush1.msra.mxu0 0.0
        %1754 = vmatprep.subr.mxu0 0.0
        %1755 = vmatpush1.msra.mxu0 0.0
        %1756 = vmatprep.subr.mxu0 0.0
        %1757 = vmatpush1.msra.mxu0 0.0
        %1758 = vmatprep.subr.mxu0 0.0
        %1759 = vmatpush1.msra.mxu0 %v1732
        %1760 = vmatprep.subr.mxu0 0.0
        %1761 = vmatpush1.msra.mxu0 %v1663
        %1762 = vmatprep.subr.mxu0 0.0
        %1763 = vmatpush1.msra.mxu0 %v1661
        %1764 = vmatprep.subr.mxu0 0.0
        %1765 = vmatpush1.msra.mxu0 %v1659
        %1766 = vmatprep.subr.mxu0 0.0
        %1767 = vmatpush2.msra.mxu0 0.0
        %1768 = vmatprep.subr.mxu0 0.0
        %1769 = vmatpush2.msra.mxu0 0.0
        %1770 = vmatprep.subr.mxu0 0.0
        %1771 = vmatpush2.msra.mxu0 0.0
        %1772 = vmatprep.subr.mxu0 0.0
        %1773 = vmatpush2.msra.mxu0 0.0
        %1774 = vmatprep.subr.mxu0 0.0
        %1775 = vmatpush2.msra.mxu0 0.0
        %1776 = vmatprep.subr.mxu0 0.0
        %1777 = vmatpush2.msra.mxu0 0.0
        %1778 = vmatprep.subr.mxu0 0.0
        %1779 = vmatpush2.msra.mxu0 0.0
        %1780 = vmatprep.subr.mxu0 0.0
        %1781 = vmatpush2.msra.mxu0 0.0
        %1782 = vmatprep.subr.mxu0 0.0
        %1783 = vmatpush2.msra.mxu0 0.0
        %1784 = vmatprep.subr.mxu0 0.0
        %1785 = vmatpush2.msra.mxu0 0.0
        %1786 = vmatprep.subr.mxu0 0.0
        %1787 = vmatpush2.msra.mxu0 0.0
        %1788 = vmatprep.subr.mxu0 0.0
        %1789 = vmatpush2.msra.mxu0 0.0
        %1790 = vmatprep.subr.mxu0 0.0
        %1791 = vmatpush2.msra.mxu0 0.0
        %1792 = vmatprep.subr.mxu0 0.0
        %1793 = vmatpush2.msra.mxu0 0.0
        %1794 = vmatprep.subr.mxu0 0.0
        %1795 = vmatpush2.msra.mxu0 0.0
        %1796 = vmatprep.subr.mxu0 0.0
        %1797 = vmatpush2.msra.mxu0 0.0
        %1798 = vmatprep.mubr.f32.mxu0 0.0
        %1799 = vmatmul.mubr.f32.gmra.mxu0 %v1670
        %v1800 = vpop.f32.mrf.mxu0
        %v1801 = vadd.f32 0.0, %v1800
        %v1802 = vpop.f32.mrf.mxu0
        %1803 = vmatprep.mubr.f32.mxu0 0.0
        %1804 = vmatmul.mubr.f32.gmra.mxu0 %v1673
        %v1805 = vpop.f32.mrf.mxu0
        %v1806 = vadd.f32 0.0, %v1805
        %v1807 = vpop.f32.mrf.mxu0
        %1808 = vmatprep.mubr.f32.mxu0 0.0
        %1809 = vmatmul.mubr.f32.gmra.mxu0 %v1676
        %v1810 = vpop.f32.mrf.mxu0
        %v1811 = vadd.f32 0.0, %v1810
        %v1812 = vpop.f32.mrf.mxu0
        %1813 = vmatprep.mubr.f32.mxu0 0.0
        %1814 = vmatmul.mubr.f32.gmra.mxu0 %v1679
        %v1815 = vpop.f32.mrf.mxu0
        %v1816 = vadd.f32 0.0, %v1815
        %v1817 = vpop.f32.mrf.mxu0
        %1818 = vmatprep.mubr.f32.mxu0 0.0
        %1819 = vmatmul.mubr.f32.gmra.mxu0 %v1682
        %v1820 = vpop.f32.mrf.mxu0
        %v1821 = vadd.f32 0.0, %v1820
        %v1822 = vpop.f32.mrf.mxu0
        %1823 = vmatprep.mubr.f32.mxu0 0.0
        %1824 = vmatmul.mubr.f32.gmra.mxu0 %v1685
        %v1825 = vpop.f32.mrf.mxu0
        %v1826 = vadd.f32 0.0, %v1825
        %v1827 = vpop.f32.mrf.mxu0
        %1828 = vmatprep.mubr.f32.mxu0 0.0
        %1829 = vmatmul.mubr.f32.gmra.mxu0 %v1688
        %v1830 = vpop.f32.mrf.mxu0
        %v1831 = vadd.f32 0.0, %v1830
        %v1832 = vpop.f32.mrf.mxu0
        %1833 = vmatprep.mubr.f32.mxu0 0.0
        %1834 = vmatmul.mubr.f32.gmra.mxu0 %v1691
        %v1835 = vpop.f32.mrf.mxu0
        %v1836 = vadd.f32 0.0, %v1835
        %v1837 = vpop.f32.mrf.mxu0
        %1838 = vmatprep.mubr.f32.mxu0 0.0
        %1839 = vmatmul.mubr.f32.gmra.mxu0 %v1694
        %v1840 = vpop.f32.mrf.mxu0
        %v1841 = vadd.f32 0.0, %v1840
        %v1842 = vpop.f32.mrf.mxu0
        %1843 = vmatprep.mubr.f32.mxu0 0.0
        %1844 = vmatmul.mubr.f32.gmra.mxu0 %v1697
        %v1845 = vpop.f32.mrf.mxu0
        %v1846 = vadd.f32 0.0, %v1845
        %v1847 = vpop.f32.mrf.mxu0
        %1848 = vmatprep.mubr.f32.mxu0 0.0
        %1849 = vmatmul.mubr.f32.gmra.mxu0 %v1700
        %v1850 = vpop.f32.mrf.mxu0
        %v1851 = vadd.f32 0.0, %v1850
        %v1852 = vpop.f32.mrf.mxu0
        %1853 = vmatprep.mubr.f32.mxu0 0.0
        %1854 = vmatmul.mubr.f32.gmra.mxu0 %v1703
        %v1855 = vpop.f32.mrf.mxu0
        %v1856 = vadd.f32 0.0, %v1855
        %v1857 = vpop.f32.mrf.mxu0
        %1858 = vmatprep.mubr.f32.mxu0 0.0
        %1859 = vmatmul.mubr.f32.gmra.mxu0 %v1706
        %v1860 = vpop.f32.mrf.mxu0
        %v1861 = vadd.f32 0.0, %v1860
        %v1862 = vpop.f32.mrf.mxu0
        %1863 = vmatprep.mubr.f32.mxu0 0.0
        %1864 = vmatmul.mubr.f32.gmra.mxu0 %v1709
        %v1865 = vpop.f32.mrf.mxu0
        %v1866 = vadd.f32 0.0, %v1865
        %v1867 = vpop.f32.mrf.mxu0
        %1868 = vmatprep.mubr.f32.mxu0 0.0
        %1869 = vmatmul.mubr.f32.gmra.mxu0 %v1712
        %v1870 = vpop.f32.mrf.mxu0
        %v1871 = vadd.f32 0.0, %v1870
        %v1872 = vpop.f32.mrf.mxu0
        %1873 = vmatprep.mubr.f32.mxu0 0.0
        %1874 = vmatmul.mubr.f32.gmra.mxu0 %v1715
        %v1875 = vpop.f32.mrf.mxu0
        %v1876 = vadd.f32 0.0, %v1875
        %v1877 = vpop.f32.mrf.mxu0
        %1878 = vmatprep.mubr.f32.mxu0 0.0
        %1879 = vmatmul.mubr.f32.gmra.mxu0 %v1718
        %v1880 = vpop.f32.mrf.mxu0
        %v1881 = vadd.f32 0.0, %v1880
        %v1882 = vpop.f32.mrf.mxu0
        %1883 = vmatprep.mubr.f32.mxu0 0.0
        %1884 = vmatmul.mubr.f32.gmra.mxu0 %v1721
        %v1885 = vpop.f32.mrf.mxu0
        %v1886 = vadd.f32 0.0, %v1885
        %v1887 = vpop.f32.mrf.mxu0
        %1888 = vmatprep.mubr.f32.mxu0 0.0
        %1889 = vmatmul.mubr.f32.gmra.mxu0 %v1724
        %v1890 = vpop.f32.mrf.mxu0
        %v1891 = vadd.f32 0.0, %v1890
        %v1892 = vpop.f32.mrf.mxu0
        %1893 = vmatprep.mubr.f32.mxu0 0.0
        %1894 = vmatmul.mubr.f32.gmra.mxu0 %v1727
        %v1895 = vpop.f32.mrf.mxu0
        %v1896 = vadd.f32 0.0, %v1895
        %v1897 = vpop.f32.mrf.mxu0
        %1898 = vmatprep.mubr.f32.mxu0 0.0
        %1899 = vmatmul.mubr.f32.gmra.mxu0 %v1730
        %v1900 = vpop.f32.mrf.mxu0
        %v1901 = vadd.f32 0.0, %v1900
        %v1902 = vpop.f32.mrf.mxu0
        %1903 = vdwg.mxu0
        %v1904 = vadd.f32 %v1615, %v1801
        %v1905 = vadd.f32 %v1616, %v1806
        %v1906 = vadd.f32 %v1617, %v1811
        %v1907 = vadd.f32 %v1618, %v1816
        %v1908 = vadd.f32 %v1619, %v1821
        %v1909 = vadd.f32 %v1620, %v1826
        %v1910 = vadd.f32 %v1621, %v1831
        %v1911 = vadd.f32 %v1622, %v1836
        %v1912 = vadd.f32 %v1623, %v1841
        %v1913 = vadd.f32 %v1624, %v1846
        %v1914 = vadd.f32 %v1625, %v1851
        %v1915 = vadd.f32 %v1626, %v1856
        %v1916 = vadd.f32 %v1627, %v1861
        %v1917 = vadd.f32 %v1628, %v1866
        %v1918 = vadd.f32 %v1629, %v1871
        %v1919 = vadd.f32 %v1630, %v1876
        %v1920 = vadd.f32 %v1631, %v1881
        %v1921 = vadd.f32 %v1632, %v1886
        %v1922 = vadd.f32 %v1633, %v1891
        %v1923 = vadd.f32 %v1634, %v1896
        %v1924 = vadd.f32 %v1635, %v1901
        %v1925 = vld [vmem:[%s2] sm:$0xff]
        %v1926 = vld [vmem:[%s2 + $0x8] sm:$0xff]
        %v1927 = vld [vmem:[%s2 + $0x10] sm:$0xff]
        %v1928 = vld [vmem:[%s2 + $0x18] sm:$0xff]
        %v1929 = vld [vmem:[%s2 + $0x20] sm:$0xff]
        %v1930 = vld [vmem:[%s2 + $0x28] sm:$0xff]
        %v1931 = vld [vmem:[%s2 + $0x30] sm:$0xff]
        %v1932 = vld [vmem:[%s2 + $0x38] sm:$0xff]
        %v1933 = vld [vmem:[%s2 + $0x40] sm:$0xff]
        %v1934 = vld [vmem:[%s2 + $0x48] sm:$0xff]
        %v1935 = vld [vmem:[%s2 + $0x50] sm:$0xff]
        %v1936 = vld [vmem:[%s2 + $0x58] sm:$0xff]
        %v1937 = vld [vmem:[%s2 + $0x60] sm:$0xff]
        %v1938 = vld [vmem:[%s2 + $0x68] sm:$0xff]
        %v1939 = vld [vmem:[%s2 + $0x70] sm:$0xff]
        %v1940 = vld [vmem:[%s2 + $0x78] sm:$0xff]
        %v1941 = vld [vmem:[%s2 + $0x80] sm:$0xff]
        %v1942 = vld [vmem:[%s2 + $0x88] sm:$0xff]
        %v1943 = vld [vmem:[%s2 + $0x90] sm:$0xff]
        %v1944 = vld [vmem:[%s2 + $0x98] sm:$0xff]
        %v1945 = vld [vmem:[%s2 + $0xa0] sm:$0xff]
        %1947 = vset.pattern.permute.xlu0 0
        %1948 = vperm.xlu0 %1947, %v1925
        %v1949 = vpop.permute.xlu0 %1948
        %1952 = vset.pattern.permute.xlu0 0
        %1953 = vperm.xlu0 %1952, %v1926
        %v1954 = vpop.permute.xlu0 %1953
        %1957 = vset.pattern.permute.xlu0 0
        %1958 = vperm.xlu0 %1957, %v1927
        %v1959 = vpop.permute.xlu0 %1958
        %1962 = vset.pattern.permute.xlu0 0
        %1963 = vperm.xlu0 %1962, %v1928
        %v1964 = vpop.permute.xlu0 %1963
        %1967 = vset.pattern.permute.xlu0 0
        %1968 = vperm.xlu0 %1967, %v1929
        %v1969 = vpop.permute.xlu0 %1968
        %1972 = vset.pattern.permute.xlu0 0
        %1973 = vperm.xlu0 %1972, %v1930
        %v1974 = vpop.permute.xlu0 %1973
        %1977 = vset.pattern.permute.xlu0 0
        %1978 = vperm.xlu0 %1977, %v1931
        %v1979 = vpop.permute.xlu0 %1978
        %1982 = vset.pattern.permute.xlu0 0
        %1983 = vperm.xlu0 %1982, %v1932
        %v1984 = vpop.permute.xlu0 %1983
        %1987 = vset.pattern.permute.xlu0 0
        %1988 = vperm.xlu0 %1987, %v1933
        %v1989 = vpop.permute.xlu0 %1988
        %1992 = vset.pattern.permute.xlu0 0
        %1993 = vperm.xlu0 %1992, %v1934
        %v1994 = vpop.permute.xlu0 %1993
        %1997 = vset.pattern.permute.xlu0 0
        %1998 = vperm.xlu0 %1997, %v1935
        %v1999 = vpop.permute.xlu0 %1998
        %2002 = vset.pattern.permute.xlu0 0
        %2003 = vperm.xlu0 %2002, %v1936
        %v2004 = vpop.permute.xlu0 %2003
        %2007 = vset.pattern.permute.xlu0 0
        %2008 = vperm.xlu0 %2007, %v1937
        %v2009 = vpop.permute.xlu0 %2008
        %2012 = vset.pattern.permute.xlu0 0
        %2013 = vperm.xlu0 %2012, %v1938
        %v2014 = vpop.permute.xlu0 %2013
        %2017 = vset.pattern.permute.xlu0 0
        %2018 = vperm.xlu0 %2017, %v1939
        %v2019 = vpop.permute.xlu0 %2018
        %2022 = vset.pattern.permute.xlu0 0
        %2023 = vperm.xlu0 %2022, %v1940
        %v2024 = vpop.permute.xlu0 %2023
        %2027 = vset.pattern.permute.xlu0 0
        %2028 = vperm.xlu0 %2027, %v1941
        %v2029 = vpop.permute.xlu0 %2028
        %2032 = vset.pattern.permute.xlu0 0
        %2033 = vperm.xlu0 %2032, %v1942
        %v2034 = vpop.permute.xlu0 %2033
        %2037 = vset.pattern.permute.xlu0 0
        %2038 = vperm.xlu0 %2037, %v1943
        %v2039 = vpop.permute.xlu0 %2038
        %2042 = vset.pattern.permute.xlu0 0
        %2043 = vperm.xlu0 %2042, %v1944
        %v2044 = vpop.permute.xlu0 %2043
        %2047 = vset.pattern.permute.xlu0 0
        %2048 = vperm.xlu0 %2047, %v1945
        %v2049 = vpop.permute.xlu0 %2048
        %v2051 = vadd.f32 %v1904, %v1949
        %v2052 = vadd.f32 %v1905, %v1954
        %v2053 = vadd.f32 %v1906, %v1959
        %v2054 = vadd.f32 %v1907, %v1964
        %v2055 = vadd.f32 %v1908, %v1969
        %v2056 = vadd.f32 %v1909, %v1974
        %v2057 = vadd.f32 %v1910, %v1979
        %v2058 = vadd.f32 %v1911, %v1984
        %v2059 = vadd.f32 %v1912, %v1989
        %v2060 = vadd.f32 %v1913, %v1994
        %v2061 = vadd.f32 %v1914, %v1999
        %v2062 = vadd.f32 %v1915, %v2004
        %v2063 = vadd.f32 %v1916, %v2009
        %v2064 = vadd.f32 %v1917, %v2014
        %v2065 = vadd.f32 %v1918, %v2019
        %v2066 = vadd.f32 %v1919, %v2024
        %v2067 = vadd.f32 %v1920, %v2029
        %v2068 = vadd.f32 %v1921, %v2034
        %v2069 = vadd.f32 %v1922, %v2039
        %v2070 = vadd.f32 %v1923, %v2044
        %v2071 = vadd.f32 %v1924, %v2049
        %v2072 = vmax.f32 %v2051, 0.0
        %v2073 = vmax.f32 %v2052, 0.0
        %v2074 = vmax.f32 %v2053, 0.0
        %v2075 = vmax.f32 %v2054, 0.0
        %v2076 = vmax.f32 %v2055, 0.0
        %v2077 = vmax.f32 %v2056, 0.0
        %v2078 = vmax.f32 %v2057, 0.0
        %v2079 = vmax.f32 %v2058, 0.0
        %v2080 = vmax.f32 %v2059, 0.0
        %v2081 = vmax.f32 %v2060, 0.0
        %v2082 = vmax.f32 %v2061, 0.0
        %v2083 = vmax.f32 %v2062, 0.0
        %v2084 = vmax.f32 %v2063, 0.0
        %v2085 = vmax.f32 %v2064, 0.0
        %v2086 = vmax.f32 %v2065, 0.0
        %v2087 = vmax.f32 %v2066, 0.0
        %v2088 = vmax.f32 %v2067, 0.0
        %v2089 = vmax.f32 %v2068, 0.0
        %v2090 = vmax.f32 %v2069, 0.0
        %v2091 = vmax.f32 %v2070, 0.0
        %v2092 = vmax.f32 %v2071, 0.0
        %v2093 = vld [vmem:[%s3] sm:$0xff]
        %v2094 = vld [vmem:[%s3 + $0x8] sm:$0xff]
        %v2095 = vld [vmem:[%s3 + $0x10] sm:$0xff]
        %v2096 = vld [vmem:[%s3 + $0x18] sm:$0xff]
        %v2097 = vld [vmem:[%s3 + $0x20] sm:$0xff]
        %v2098 = vld [vmem:[%s3 + $0x28] sm:$0xff]
        %v2099 = vld [vmem:[%s3 + $0x30] sm:$0xff]
        %v2100 = vld [vmem:[%s3 + $0x38] sm:$0xff]
        %v2101 = vld [vmem:[%s3 + $0x40] sm:$0xff]
        %v2102 = vld [vmem:[%s3 + $0x48] sm:$0xff]
        %v2103 = vld [vmem:[%s3 + $0x50] sm:$0xff]
        %v2104 = vld [vmem:[%s3 + $0x58] sm:$0xff]
        %v2105 = vld [vmem:[%s3 + $0x60] sm:$0xff]
        %v2106 = vld [vmem:[%s3 + $0x68] sm:$0xff]
        %v2107 = vld [vmem:[%s3 + $0x70] sm:$0xff]
        %v2108 = vld [vmem:[%s3 + $0x78] sm:$0xff]
        %v2109 = vld [vmem:[%s3 + $0x80] sm:$0xff]
        %v2110 = vld [vmem:[%s3 + $0x88] sm:$0xff]
        %v2111 = vld [vmem:[%s3 + $0x90] sm:$0xff]
        %v2112 = vld [vmem:[%s3 + $0x98] sm:$0xff]
        %v2113 = vld [vmem:[%s3 + $0xa0] sm:$0xf]
        %v2114 = vld [vmem:[%s3 + $0xa8] sm:$0xf]
        %vm2115 = vcmask 326656
        %v2117 = vsel %vm2115, %v2094, 0
        %v2120 = vsel %vm2115, %v2096, 0
        %v2123 = vsel %vm2115, %v2098, 0
        %v2126 = vsel %vm2115, %v2100, 0
        %v2129 = vsel %vm2115, %v2102, 0
        %v2132 = vsel %vm2115, %v2104, 0
        %v2135 = vsel %vm2115, %v2106, 0
        %v2138 = vsel %vm2115, %v2108, 0
        %v2141 = vsel %vm2115, %v2110, 0
        %v2144 = vsel %vm2115, %v2112, 0
        %v2147 = vsel %vm2115, %v2114, 0
        %2149 = vmatprep.subr.mxu0 0.0
        %2150 = vmatpush1.msra.mxu0 %v2087
        %2151 = vmatprep.subr.mxu0 0.0
        %2152 = vmatpush1.msra.mxu0 %v2086
        %2153 = vmatprep.subr.mxu0 0.0
        %2154 = vmatpush1.msra.mxu0 %v2085
        %2155 = vmatprep.subr.mxu0 0.0
        %2156 = vmatpush1.msra.mxu0 %v2084
        %2157 = vmatprep.subr.mxu0 0.0
        %2158 = vmatpush1.msra.mxu0 %v2083
        %2159 = vmatprep.subr.mxu0 0.0
        %2160 = vmatpush1.msra.mxu0 %v2082
        %2161 = vmatprep.subr.mxu0 0.0
        %2162 = vmatpush1.msra.mxu0 %v2081
        %2163 = vmatprep.subr.mxu0 0.0
        %2164 = vmatpush1.msra.mxu0 %v2080
        %2165 = vmatprep.subr.mxu0 0.0
        %2166 = vmatpush1.msra.mxu0 %v2079
        %2167 = vmatprep.subr.mxu0 0.0
        %2168 = vmatpush1.msra.mxu0 %v2078
        %2169 = vmatprep.subr.mxu0 0.0
        %2170 = vmatpush1.msra.mxu0 %v2077
        %2171 = vmatprep.subr.mxu0 0.0
        %2172 = vmatpush1.msra.mxu0 %v2076
        %2173 = vmatprep.subr.mxu0 0.0
        %2174 = vmatpush1.msra.mxu0 %v2075
        %2175 = vmatprep.subr.mxu0 0.0
        %2176 = vmatpush1.msra.mxu0 %v2074
        %2177 = vmatprep.subr.mxu0 0.0
        %2178 = vmatpush1.msra.mxu0 %v2073
        %2179 = vmatprep.subr.mxu0 0.0
        %2180 = vmatpush1.msra.mxu0 %v2072
        %2181 = vmatprep.subr.mxu0 0.0
        %2182 = vmatpush2.msra.mxu0 0.0
        %2183 = vmatprep.subr.mxu0 0.0
        %2184 = vmatpush2.msra.mxu0 0.0
        %2185 = vmatprep.subr.mxu0 0.0
        %2186 = vmatpush2.msra.mxu0 0.0
        %2187 = vmatprep.subr.mxu0 0.0
        %2188 = vmatpush2.msra.mxu0 0.0
        %2189 = vmatprep.subr.mxu0 0.0
        %2190 = vmatpush2.msra.mxu0 0.0
        %2191 = vmatprep.subr.mxu0 0.0
        %2192 = vmatpush2.msra.mxu0 0.0
        %2193 = vmatprep.subr.mxu0 0.0
        %2194 = vmatpush2.msra.mxu0 0.0
        %2195 = vmatprep.subr.mxu0 0.0
        %2196 = vmatpush2.msra.mxu0 0.0
        %2197 = vmatprep.subr.mxu0 0.0
        %2198 = vmatpush2.msra.mxu0 0.0
        %2199 = vmatprep.subr.mxu0 0.0
        %2200 = vmatpush2.msra.mxu0 0.0
        %2201 = vmatprep.subr.mxu0 0.0
        %2202 = vmatpush2.msra.mxu0 0.0
        %2203 = vmatprep.subr.mxu0 0.0
        %2204 = vmatpush2.msra.mxu0 %v2092
        %2205 = vmatprep.subr.mxu0 0.0
        %2206 = vmatpush2.msra.mxu0 %v2091
        %2207 = vmatprep.subr.mxu0 0.0
        %2208 = vmatpush2.msra.mxu0 %v2090
        %2209 = vmatprep.subr.mxu0 0.0
        %2210 = vmatpush2.msra.mxu0 %v2089
        %2211 = vmatprep.subr.mxu0 0.0
        %2212 = vmatpush2.msra.mxu0 %v2088
        %2213 = vmatprep.mubr.f32.mxu0 %v2117
        %2214 = vmatmul.mubr.f32.gmra.mxu0 %v2093
        %v2215 = vpop.f32.mrf.mxu0
        %v2216 = vadd.f32 0.0, %v2215
        %v2217 = vpop.f32.mrf.mxu0
        %2218 = vmatprep.mubr.f32.mxu0 %v2120
        %2219 = vmatmul.mubr.f32.gmra.mxu0 %v2095
        %v2220 = vpop.f32.mrf.mxu0
        %v2221 = vadd.f32 0.0, %v2220
        %v2222 = vpop.f32.mrf.mxu0
        %2223 = vmatprep.mubr.f32.mxu0 %v2123
        %2224 = vmatmul.mubr.f32.gmra.mxu0 %v2097
        %v2225 = vpop.f32.mrf.mxu0
        %v2226 = vadd.f32 0.0, %v2225
        %v2227 = vpop.f32.mrf.mxu0
        %2228 = vmatprep.mubr.f32.mxu0 %v2126
        %2229 = vmatmul.mubr.f32.gmra.mxu0 %v2099
        %v2230 = vpop.f32.mrf.mxu0
        %v2231 = vadd.f32 0.0, %v2230
        %v2232 = vpop.f32.mrf.mxu0
        %2233 = vmatprep.mubr.f32.mxu0 %v2129
        %2234 = vmatmul.mubr.f32.gmra.mxu0 %v2101
        %v2235 = vpop.f32.mrf.mxu0
        %v2236 = vadd.f32 0.0, %v2235
        %v2237 = vpop.f32.mrf.mxu0
        %2238 = vmatprep.mubr.f32.mxu0 %v2132
        %2239 = vmatmul.mubr.f32.gmra.mxu0 %v2103
        %v2240 = vpop.f32.mrf.mxu0
        %v2241 = vadd.f32 0.0, %v2240
        %v2242 = vpop.f32.mrf.mxu0
        %2243 = vmatprep.mubr.f32.mxu0 %v2135
        %2244 = vmatmul.mubr.f32.gmra.mxu0 %v2105
        %v2245 = vpop.f32.mrf.mxu0
        %v2246 = vadd.f32 0.0, %v2245
        %v2247 = vpop.f32.mrf.mxu0
        %2248 = vmatprep.mubr.f32.mxu0 %v2138
        %2249 = vmatmul.mubr.f32.gmra.mxu0 %v2107
        %v2250 = vpop.f32.mrf.mxu0
        %v2251 = vadd.f32 0.0, %v2250
        %v2252 = vpop.f32.mrf.mxu0
        %2253 = vmatprep.mubr.f32.mxu0 %v2141
        %2254 = vmatmul.mubr.f32.gmra.mxu0 %v2109
        %v2255 = vpop.f32.mrf.mxu0
        %v2256 = vadd.f32 0.0, %v2255
        %v2257 = vpop.f32.mrf.mxu0
        %2258 = vmatprep.mubr.f32.mxu0 %v2144
        %2259 = vmatmul.mubr.f32.gmra.mxu0 %v2111
        %v2260 = vpop.f32.mrf.mxu0
        %v2261 = vadd.f32 0.0, %v2260
        %v2262 = vpop.f32.mrf.mxu0
        %2263 = vmatprep.mubr.f32.mxu0 %v2147
        %2264 = vmatmul.mubr.f32.gmra.mxu0 %v2113
        %v2265 = vpop.f32.mrf.mxu0
        %v2266 = vadd.f32 0.0, %v2265
        %v2267 = vpop.f32.mrf.mxu0
        %2268 = vdwg.mxu0
        %s2269 = scalar_lea.vmem %s3, 176
        %v2270 = vld [vmem:[%s2269] sm:$0xff]
        %v2271 = vld [vmem:[%s2269 + $0x8] sm:$0xff]
        %v2272 = vld [vmem:[%s2269 + $0x10] sm:$0xff]
        %v2273 = vld [vmem:[%s2269 + $0x18] sm:$0xff]
        %v2274 = vld [vmem:[%s2269 + $0x20] sm:$0xff]
        %v2275 = vld [vmem:[%s2269 + $0x28] sm:$0xff]
        %v2276 = vld [vmem:[%s2269 + $0x30] sm:$0xff]
        %v2277 = vld [vmem:[%s2269 + $0x38] sm:$0xff]
        %v2278 = vld [vmem:[%s2269 + $0x40] sm:$0xff]
        %v2279 = vld [vmem:[%s2269 + $0x48] sm:$0xff]
        %v2280 = vld [vmem:[%s2269 + $0x50] sm:$0xff]
        %v2281 = vld [vmem:[%s2269 + $0x58] sm:$0xff]
        %v2282 = vld [vmem:[%s2269 + $0x60] sm:$0xff]
        %v2283 = vld [vmem:[%s2269 + $0x68] sm:$0xff]
        %v2284 = vld [vmem:[%s2269 + $0x70] sm:$0xff]
        %v2285 = vld [vmem:[%s2269 + $0x78] sm:$0xff]
        %v2286 = vld [vmem:[%s2269 + $0x80] sm:$0xff]
        %v2287 = vld [vmem:[%s2269 + $0x88] sm:$0xff]
        %v2288 = vld [vmem:[%s2269 + $0x90] sm:$0xff]
        %v2289 = vld [vmem:[%s2269 + $0x98] sm:$0xff]
        %v2290 = vld [vmem:[%s2269 + $0xa0] sm:$0xf]
        %v2291 = vld [vmem:[%s2269 + $0xa8] sm:$0xf]
        %v2293 = vsel %vm2115, %v2271, 0
        %v2296 = vsel %vm2115, %v2273, 0
        %v2299 = vsel %vm2115, %v2275, 0
        %v2302 = vsel %vm2115, %v2277, 0
        %v2305 = vsel %vm2115, %v2279, 0
        %v2308 = vsel %vm2115, %v2281, 0
        %v2311 = vsel %vm2115, %v2283, 0
        %v2314 = vsel %vm2115, %v2285, 0
        %v2317 = vsel %vm2115, %v2287, 0
        %v2320 = vsel %vm2115, %v2289, 0
        %v2323 = vsel %vm2115, %v2291, 0
        %2325 = vmatprep.subr.mxu0 0.0
        %2326 = vmatpush1.msra.mxu0 %v2087
        %2327 = vmatprep.subr.mxu0 0.0
        %2328 = vmatpush1.msra.mxu0 %v2086
        %2329 = vmatprep.subr.mxu0 0.0
        %2330 = vmatpush1.msra.mxu0 %v2085
        %2331 = vmatprep.subr.mxu0 0.0
        %2332 = vmatpush1.msra.mxu0 %v2084
        %2333 = vmatprep.subr.mxu0 0.0
        %2334 = vmatpush1.msra.mxu0 %v2083
        %2335 = vmatprep.subr.mxu0 0.0
        %2336 = vmatpush1.msra.mxu0 %v2082
        %2337 = vmatprep.subr.mxu0 0.0
        %2338 = vmatpush1.msra.mxu0 %v2081
        %2339 = vmatprep.subr.mxu0 0.0
        %2340 = vmatpush1.msra.mxu0 %v2080
        %2341 = vmatprep.subr.mxu0 0.0
        %2342 = vmatpush1.msra.mxu0 %v2079
        %2343 = vmatprep.subr.mxu0 0.0
        %2344 = vmatpush1.msra.mxu0 %v2078
        %2345 = vmatprep.subr.mxu0 0.0
        %2346 = vmatpush1.msra.mxu0 %v2077
        %2347 = vmatprep.subr.mxu0 0.0
        %2348 = vmatpush1.msra.mxu0 %v2076
        %2349 = vmatprep.subr.mxu0 0.0
        %2350 = vmatpush1.msra.mxu0 %v2075
        %2351 = vmatprep.subr.mxu0 0.0
        %2352 = vmatpush1.msra.mxu0 %v2074
        %2353 = vmatprep.subr.mxu0 0.0
        %2354 = vmatpush1.msra.mxu0 %v2073
        %2355 = vmatprep.subr.mxu0 0.0
        %2356 = vmatpush1.msra.mxu0 %v2072
        %2357 = vmatprep.subr.mxu0 0.0
        %2358 = vmatpush2.msra.mxu0 0.0
        %2359 = vmatprep.subr.mxu0 0.0
        %2360 = vmatpush2.msra.mxu0 0.0
        %2361 = vmatprep.subr.mxu0 0.0
        %2362 = vmatpush2.msra.mxu0 0.0
        %2363 = vmatprep.subr.mxu0 0.0
        %2364 = vmatpush2.msra.mxu0 0.0
        %2365 = vmatprep.subr.mxu0 0.0
        %2366 = vmatpush2.msra.mxu0 0.0
        %2367 = vmatprep.subr.mxu0 0.0
        %2368 = vmatpush2.msra.mxu0 0.0
        %2369 = vmatprep.subr.mxu0 0.0
        %2370 = vmatpush2.msra.mxu0 0.0
        %2371 = vmatprep.subr.mxu0 0.0
        %2372 = vmatpush2.msra.mxu0 0.0
        %2373 = vmatprep.subr.mxu0 0.0
        %2374 = vmatpush2.msra.mxu0 0.0
        %2375 = vmatprep.subr.mxu0 0.0
        %2376 = vmatpush2.msra.mxu0 0.0
        %2377 = vmatprep.subr.mxu0 0.0
        %2378 = vmatpush2.msra.mxu0 0.0
        %2379 = vmatprep.subr.mxu0 0.0
        %2380 = vmatpush2.msra.mxu0 %v2092
        %2381 = vmatprep.subr.mxu0 0.0
        %2382 = vmatpush2.msra.mxu0 %v2091
        %2383 = vmatprep.subr.mxu0 0.0
        %2384 = vmatpush2.msra.mxu0 %v2090
        %2385 = vmatprep.subr.mxu0 0.0
        %2386 = vmatpush2.msra.mxu0 %v2089
        %2387 = vmatprep.subr.mxu0 0.0
        %2388 = vmatpush2.msra.mxu0 %v2088
        %2389 = vmatprep.mubr.f32.mxu0 %v2293
        %2390 = vmatmul.mubr.f32.gmra.mxu0 %v2270
        %v2391 = vpop.f32.mrf.mxu0
        %v2392 = vadd.f32 0.0, %v2391
        %v2393 = vpop.f32.mrf.mxu0
        %2394 = vmatprep.mubr.f32.mxu0 %v2296
        %2395 = vmatmul.mubr.f32.gmra.mxu0 %v2272
        %v2396 = vpop.f32.mrf.mxu0
        %v2397 = vadd.f32 0.0, %v2396
        %v2398 = vpop.f32.mrf.mxu0
        %2399 = vmatprep.mubr.f32.mxu0 %v2299
        %2400 = vmatmul.mubr.f32.gmra.mxu0 %v2274
        %v2401 = vpop.f32.mrf.mxu0
        %v2402 = vadd.f32 0.0, %v2401
        %v2403 = vpop.f32.mrf.mxu0
        %2404 = vmatprep.mubr.f32.mxu0 %v2302
        %2405 = vmatmul.mubr.f32.gmra.mxu0 %v2276
        %v2406 = vpop.f32.mrf.mxu0
        %v2407 = vadd.f32 0.0, %v2406
        %v2408 = vpop.f32.mrf.mxu0
        %2409 = vmatprep.mubr.f32.mxu0 %v2305
        %2410 = vmatmul.mubr.f32.gmra.mxu0 %v2278
        %v2411 = vpop.f32.mrf.mxu0
        %v2412 = vadd.f32 0.0, %v2411
        %v2413 = vpop.f32.mrf.mxu0
        %2414 = vmatprep.mubr.f32.mxu0 %v2308
        %2415 = vmatmul.mubr.f32.gmra.mxu0 %v2280
        %v2416 = vpop.f32.mrf.mxu0
        %v2417 = vadd.f32 0.0, %v2416
        %v2418 = vpop.f32.mrf.mxu0
        %2419 = vmatprep.mubr.f32.mxu0 %v2311
        %2420 = vmatmul.mubr.f32.gmra.mxu0 %v2282
        %v2421 = vpop.f32.mrf.mxu0
        %v2422 = vadd.f32 0.0, %v2421
        %v2423 = vpop.f32.mrf.mxu0
        %2424 = vmatprep.mubr.f32.mxu0 %v2314
        %2425 = vmatmul.mubr.f32.gmra.mxu0 %v2284
        %v2426 = vpop.f32.mrf.mxu0
        %v2427 = vadd.f32 0.0, %v2426
        %v2428 = vpop.f32.mrf.mxu0
        %2429 = vmatprep.mubr.f32.mxu0 %v2317
        %2430 = vmatmul.mubr.f32.gmra.mxu0 %v2286
        %v2431 = vpop.f32.mrf.mxu0
        %v2432 = vadd.f32 0.0, %v2431
        %v2433 = vpop.f32.mrf.mxu0
        %2434 = vmatprep.mubr.f32.mxu0 %v2320
        %2435 = vmatmul.mubr.f32.gmra.mxu0 %v2288
        %v2436 = vpop.f32.mrf.mxu0
        %v2437 = vadd.f32 0.0, %v2436
        %v2438 = vpop.f32.mrf.mxu0
        %2439 = vmatprep.mubr.f32.mxu0 %v2323
        %2440 = vmatmul.mubr.f32.gmra.mxu0 %v2290
        %v2441 = vpop.f32.mrf.mxu0
        %v2442 = vadd.f32 0.0, %v2441
        %v2443 = vpop.f32.mrf.mxu0
        %2444 = vdwg.mxu0
        %v2445 = vmax.f32 %v2216, %v2392
        %v2446 = vmax.f32 %v2221, %v2397
        %v2447 = vmax.f32 %v2226, %v2402
        %v2448 = vmax.f32 %v2231, %v2407
        %v2449 = vmax.f32 %v2236, %v2412
        %v2450 = vmax.f32 %v2241, %v2417
        %v2451 = vmax.f32 %v2246, %v2422
        %v2452 = vmax.f32 %v2251, %v2427
        %v2453 = vmax.f32 %v2256, %v2432
        %v2454 = vmax.f32 %v2261, %v2437
        %v2455 = vmax.f32 %v2266, %v2442
        %v2456 = vld [vmem:[%s4] sm:$0xff]
        %v2457 = vld [vmem:[%s4 + $0x8] sm:$0xff]
        %v2458 = vld [vmem:[%s4 + $0x10] sm:$0xff]
        %v2459 = vld [vmem:[%s4 + $0x18] sm:$0xf]
        %v2461 = vsel %vm586, %v2445, 0
        %v2464 = vsel %vm586, %v2446, 0
        %v2467 = vsel %vm586, %v2447, 0
        %v2470 = vsel %vm586, %v2448, 0
        %v2473 = vsel %vm586, %v2449, 0
        %v2476 = vsel %vm586, %v2450, 0
        %v2479 = vsel %vm586, %v2451, 0
        %v2482 = vsel %vm586, %v2452, 0
        %v2485 = vsel %vm586, %v2453, 0
        %v2488 = vsel %vm586, %v2454, 0
        %v2491 = vsel %vm586, %v2455, 0
        %v2494 = vsel %vm650, %v2459, 0
        %2496 = vmatprep.subr.mxu0 0.0
        %2497 = vmatpush1.msra.mxu0 0.0
        %2498 = vmatprep.subr.mxu0 0.0
        %2499 = vmatpush1.msra.mxu0 0.0
        %2500 = vmatprep.subr.mxu0 0.0
        %2501 = vmatpush1.msra.mxu0 0.0
        %2502 = vmatprep.subr.mxu0 0.0
        %2503 = vmatpush1.msra.mxu0 0.0
        %2504 = vmatprep.subr.mxu0 0.0
        %2505 = vmatpush1.msra.mxu0 0.0
        %2506 = vmatprep.subr.mxu0 0.0
        %2507 = vmatpush1.msra.mxu0 0.0
        %2508 = vmatprep.subr.mxu0 0.0
        %2509 = vmatpush1.msra.mxu0 0.0
        %2510 = vmatprep.subr.mxu0 0.0
        %2511 = vmatpush1.msra.mxu0 0.0
        %2512 = vmatprep.subr.mxu0 0.0
        %2513 = vmatpush1.msra.mxu0 0.0
        %2514 = vmatprep.subr.mxu0 0.0
        %2515 = vmatpush1.msra.mxu0 0.0
        %2516 = vmatprep.subr.mxu0 0.0
        %2517 = vmatpush1.msra.mxu0 0.0
        %2518 = vmatprep.subr.mxu0 0.0
        %2519 = vmatpush1.msra.mxu0 0.0
        %2520 = vmatprep.subr.mxu0 0.0
        %2521 = vmatpush1.msra.mxu0 %v2494
        %2522 = vmatprep.subr.mxu0 0.0
        %2523 = vmatpush1.msra.mxu0 %v2458
        %2524 = vmatprep.subr.mxu0 0.0
        %2525 = vmatpush1.msra.mxu0 %v2457
        %2526 = vmatprep.subr.mxu0 0.0
        %2527 = vmatpush1.msra.mxu0 %v2456
        %2528 = vmatprep.subr.mxu0 0.0
        %2529 = vmatpush2.msra.mxu0 0.0
        %2530 = vmatprep.subr.mxu0 0.0
        %2531 = vmatpush2.msra.mxu0 0.0
        %2532 = vmatprep.subr.mxu0 0.0
        %2533 = vmatpush2.msra.mxu0 0.0
        %2534 = vmatprep.subr.mxu0 0.0
        %2535 = vmatpush2.msra.mxu0 0.0
        %2536 = vmatprep.subr.mxu0 0.0
        %2537 = vmatpush2.msra.mxu0 0.0
        %2538 = vmatprep.subr.mxu0 0.0
        %2539 = vmatpush2.msra.mxu0 0.0
        %2540 = vmatprep.subr.mxu0 0.0
        %2541 = vmatpush2.msra.mxu0 0.0
        %2542 = vmatprep.subr.mxu0 0.0
        %2543 = vmatpush2.msra.mxu0 0.0
        %2544 = vmatprep.subr.mxu0 0.0
        %2545 = vmatpush2.msra.mxu0 0.0
        %2546 = vmatprep.subr.mxu0 0.0
        %2547 = vmatpush2.msra.mxu0 0.0
        %2548 = vmatprep.subr.mxu0 0.0
        %2549 = vmatpush2.msra.mxu0 0.0
        %2550 = vmatprep.subr.mxu0 0.0
        %2551 = vmatpush2.msra.mxu0 0.0
        %2552 = vmatprep.subr.mxu0 0.0
        %2553 = vmatpush2.msra.mxu0 0.0
        %2554 = vmatprep.subr.mxu0 0.0
        %2555 = vmatpush2.msra.mxu0 0.0
        %2556 = vmatprep.subr.mxu0 0.0
        %2557 = vmatpush2.msra.mxu0 0.0
        %2558 = vmatprep.subr.mxu0 0.0
        %2559 = vmatpush2.msra.mxu0 0.0
        %2560 = vmatprep.mubr.f32.mxu0 0.0
        %2561 = vmatmul.mubr.f32.gmra.mxu0 %v2461
        %v2562 = vpop.f32.mrf.mxu0
        %v2563 = vadd.f32 0.0, %v2562
        %v2564 = vpop.f32.mrf.mxu0
        %2565 = vmatprep.mubr.f32.mxu0 0.0
        %2566 = vmatmul.mubr.f32.gmra.mxu0 %v2464
        %v2567 = vpop.f32.mrf.mxu0
        %v2568 = vadd.f32 0.0, %v2567
        %v2569 = vpop.f32.mrf.mxu0
        %2570 = vmatprep.mubr.f32.mxu0 0.0
        %2571 = vmatmul.mubr.f32.gmra.mxu0 %v2467
        %v2572 = vpop.f32.mrf.mxu0
        %v2573 = vadd.f32 0.0, %v2572
        %v2574 = vpop.f32.mrf.mxu0
        %2575 = vmatprep.mubr.f32.mxu0 0.0
        %2576 = vmatmul.mubr.f32.gmra.mxu0 %v2470
        %v2577 = vpop.f32.mrf.mxu0
        %v2578 = vadd.f32 0.0, %v2577
        %v2579 = vpop.f32.mrf.mxu0
        %2580 = vmatprep.mubr.f32.mxu0 0.0
        %2581 = vmatmul.mubr.f32.gmra.mxu0 %v2473
        %v2582 = vpop.f32.mrf.mxu0
        %v2583 = vadd.f32 0.0, %v2582
        %v2584 = vpop.f32.mrf.mxu0
        %2585 = vmatprep.mubr.f32.mxu0 0.0
        %2586 = vmatmul.mubr.f32.gmra.mxu0 %v2476
        %v2587 = vpop.f32.mrf.mxu0
        %v2588 = vadd.f32 0.0, %v2587
        %v2589 = vpop.f32.mrf.mxu0
        %2590 = vmatprep.mubr.f32.mxu0 0.0
        %2591 = vmatmul.mubr.f32.gmra.mxu0 %v2479
        %v2592 = vpop.f32.mrf.mxu0
        %v2593 = vadd.f32 0.0, %v2592
        %v2594 = vpop.f32.mrf.mxu0
        %2595 = vmatprep.mubr.f32.mxu0 0.0
        %2596 = vmatmul.mubr.f32.gmra.mxu0 %v2482
        %v2597 = vpop.f32.mrf.mxu0
        %v2598 = vadd.f32 0.0, %v2597
        %v2599 = vpop.f32.mrf.mxu0
        %2600 = vmatprep.mubr.f32.mxu0 0.0
        %2601 = vmatmul.mubr.f32.gmra.mxu0 %v2485
        %v2602 = vpop.f32.mrf.mxu0
        %v2603 = vadd.f32 0.0, %v2602
        %v2604 = vpop.f32.mrf.mxu0
        %2605 = vmatprep.mubr.f32.mxu0 0.0
        %2606 = vmatmul.mubr.f32.gmra.mxu0 %v2488
        %v2607 = vpop.f32.mrf.mxu0
        %v2608 = vadd.f32 0.0, %v2607
        %v2609 = vpop.f32.mrf.mxu0
        %2610 = vmatprep.mubr.f32.mxu0 0.0
        %2611 = vmatmul.mubr.f32.gmra.mxu0 %v2491
        %v2612 = vpop.f32.mrf.mxu0
        %v2613 = vadd.f32 0.0, %v2612
        %v2614 = vpop.f32.mrf.mxu0
        %2615 = vdwg.mxu0
        %s2616 = scalar_lea.vmem %s4, 32
        %v2617 = vld [vmem:[%s2616] sm:$0xff]
        %v2618 = vld [vmem:[%s2616 + $0x8] sm:$0xff]
        %v2619 = vld [vmem:[%s2616 + $0x10] sm:$0xff]
        %v2620 = vld [vmem:[%s2616 + $0x18] sm:$0xf]
        %v2622 = vsel %vm650, %v2620, 0
        %2624 = vmatprep.subr.mxu0 0.0
        %2625 = vmatpush1.msra.mxu0 0.0
        %2626 = vmatprep.subr.mxu0 0.0
        %2627 = vmatpush1.msra.mxu0 0.0
        %2628 = vmatprep.subr.mxu0 0.0
        %2629 = vmatpush1.msra.mxu0 0.0
        %2630 = vmatprep.subr.mxu0 0.0
        %2631 = vmatpush1.msra.mxu0 0.0
        %2632 = vmatprep.subr.mxu0 0.0
        %2633 = vmatpush1.msra.mxu0 0.0
        %2634 = vmatprep.subr.mxu0 0.0
        %2635 = vmatpush1.msra.mxu0 0.0
        %2636 = vmatprep.subr.mxu0 0.0
        %2637 = vmatpush1.msra.mxu0 0.0
        %2638 = vmatprep.subr.mxu0 0.0
        %2639 = vmatpush1.msra.mxu0 0.0
        %2640 = vmatprep.subr.mxu0 0.0
        %2641 = vmatpush1.msra.mxu0 0.0
        %2642 = vmatprep.subr.mxu0 0.0
        %2643 = vmatpush1.msra.mxu0 0.0
        %2644 = vmatprep.subr.mxu0 0.0
        %2645 = vmatpush1.msra.mxu0 0.0
        %2646 = vmatprep.subr.mxu0 0.0
        %2647 = vmatpush1.msra.mxu0 0.0
        %2648 = vmatprep.subr.mxu0 0.0
        %2649 = vmatpush1.msra.mxu0 %v2622
        %2650 = vmatprep.subr.mxu0 0.0
        %2651 = vmatpush1.msra.mxu0 %v2619
        %2652 = vmatprep.subr.mxu0 0.0
        %2653 = vmatpush1.msra.mxu0 %v2618
        %2654 = vmatprep.subr.mxu0 0.0
        %2655 = vmatpush1.msra.mxu0 %v2617
        %2656 = vmatprep.subr.mxu0 0.0
        %2657 = vmatpush2.msra.mxu0 0.0
        %2658 = vmatprep.subr.mxu0 0.0
        %2659 = vmatpush2.msra.mxu0 0.0
        %2660 = vmatprep.subr.mxu0 0.0
        %2661 = vmatpush2.msra.mxu0 0.0
        %2662 = vmatprep.subr.mxu0 0.0
        %2663 = vmatpush2.msra.mxu0 0.0
        %2664 = vmatprep.subr.mxu0 0.0
        %2665 = vmatpush2.msra.mxu0 0.0
        %2666 = vmatprep.subr.mxu0 0.0
        %2667 = vmatpush2.msra.mxu0 0.0
        %2668 = vmatprep.subr.mxu0 0.0
        %2669 = vmatpush2.msra.mxu0 0.0
        %2670 = vmatprep.subr.mxu0 0.0
        %2671 = vmatpush2.msra.mxu0 0.0
        %2672 = vmatprep.subr.mxu0 0.0
        %2673 = vmatpush2.msra.mxu0 0.0
        %2674 = vmatprep.subr.mxu0 0.0
        %2675 = vmatpush2.msra.mxu0 0.0
        %2676 = vmatprep.subr.mxu0 0.0
        %2677 = vmatpush2.msra.mxu0 0.0
        %2678 = vmatprep.subr.mxu0 0.0
        %2679 = vmatpush2.msra.mxu0 0.0
        %2680 = vmatprep.subr.mxu0 0.0
        %2681 = vmatpush2.msra.mxu0 0.0
        %2682 = vmatprep.subr.mxu0 0.0
        %2683 = vmatpush2.msra.mxu0 0.0
        %2684 = vmatprep.subr.mxu0 0.0
        %2685 = vmatpush2.msra.mxu0 0.0
        %2686 = vmatprep.subr.mxu0 0.0
        %2687 = vmatpush2.msra.mxu0 0.0
        %2688 = vmatprep.mubr.f32.mxu0 0.0
        %2689 = vmatmul.mubr.f32.gmra.mxu0 %v2461
        %v2690 = vpop.f32.mrf.mxu0
        %v2691 = vadd.f32 0.0, %v2690
        %v2692 = vpop.f32.mrf.mxu0
        %2693 = vmatprep.mubr.f32.mxu0 0.0
        %2694 = vmatmul.mubr.f32.gmra.mxu0 %v2464
        %v2695 = vpop.f32.mrf.mxu0
        %v2696 = vadd.f32 0.0, %v2695
        %v2697 = vpop.f32.mrf.mxu0
        %2698 = vmatprep.mubr.f32.mxu0 0.0
        %2699 = vmatmul.mubr.f32.gmra.mxu0 %v2467
        %v2700 = vpop.f32.mrf.mxu0
        %v2701 = vadd.f32 0.0, %v2700
        %v2702 = vpop.f32.mrf.mxu0
        %2703 = vmatprep.mubr.f32.mxu0 0.0
        %2704 = vmatmul.mubr.f32.gmra.mxu0 %v2470
        %v2705 = vpop.f32.mrf.mxu0
        %v2706 = vadd.f32 0.0, %v2705
        %v2707 = vpop.f32.mrf.mxu0
        %2708 = vmatprep.mubr.f32.mxu0 0.0
        %2709 = vmatmul.mubr.f32.gmra.mxu0 %v2473
        %v2710 = vpop.f32.mrf.mxu0
        %v2711 = vadd.f32 0.0, %v2710
        %v2712 = vpop.f32.mrf.mxu0
        %2713 = vmatprep.mubr.f32.mxu0 0.0
        %2714 = vmatmul.mubr.f32.gmra.mxu0 %v2476
        %v2715 = vpop.f32.mrf.mxu0
        %v2716 = vadd.f32 0.0, %v2715
        %v2717 = vpop.f32.mrf.mxu0
        %2718 = vmatprep.mubr.f32.mxu0 0.0
        %2719 = vmatmul.mubr.f32.gmra.mxu0 %v2479
        %v2720 = vpop.f32.mrf.mxu0
        %v2721 = vadd.f32 0.0, %v2720
        %v2722 = vpop.f32.mrf.mxu0
        %2723 = vmatprep.mubr.f32.mxu0 0.0
        %2724 = vmatmul.mubr.f32.gmra.mxu0 %v2482
        %v2725 = vpop.f32.mrf.mxu0
        %v2726 = vadd.f32 0.0, %v2725
        %v2727 = vpop.f32.mrf.mxu0
        %2728 = vmatprep.mubr.f32.mxu0 0.0
        %2729 = vmatmul.mubr.f32.gmra.mxu0 %v2485
        %v2730 = vpop.f32.mrf.mxu0
        %v2731 = vadd.f32 0.0, %v2730
        %v2732 = vpop.f32.mrf.mxu0
        %2733 = vmatprep.mubr.f32.mxu0 0.0
        %2734 = vmatmul.mubr.f32.gmra.mxu0 %v2488
        %v2735 = vpop.f32.mrf.mxu0
        %v2736 = vadd.f32 0.0, %v2735
        %v2737 = vpop.f32.mrf.mxu0
        %2738 = vmatprep.mubr.f32.mxu0 0.0
        %2739 = vmatmul.mubr.f32.gmra.mxu0 %v2491
        %v2740 = vpop.f32.mrf.mxu0
        %v2741 = vadd.f32 0.0, %v2740
        %v2742 = vpop.f32.mrf.mxu0
        %2743 = vdwg.mxu0
        %v2744 = vmax.f32 %v2563, %v2691
        %v2745 = vmax.f32 %v2568, %v2696
        %v2746 = vmax.f32 %v2573, %v2701
        %v2747 = vmax.f32 %v2578, %v2706
        %v2748 = vmax.f32 %v2583, %v2711
        %v2749 = vmax.f32 %v2588, %v2716
        %v2750 = vmax.f32 %v2593, %v2721
        %v2751 = vmax.f32 %v2598, %v2726
        %v2752 = vmax.f32 %v2603, %v2731
        %v2753 = vmax.f32 %v2608, %v2736
        %v2754 = vmax.f32 %v2613, %v2741
        %v2755 = vld [vmem:[%s5] sm:$0xff]
        %v2756 = vld [vmem:[%s5 + $0x8] sm:$0xff]
        %v2757 = vld [vmem:[%s5 + $0x10] sm:$0xff]
        %v2758 = vld [vmem:[%s5 + $0x18] sm:$0xff]
        %v2759 = vld [vmem:[%s5 + $0x20] sm:$0xff]
        %v2760 = vld [vmem:[%s5 + $0x28] sm:$0xff]
        %v2761 = vld [vmem:[%s5 + $0x30] sm:$0xff]
        %v2762 = vld [vmem:[%s5 + $0x38] sm:$0xff]
        %v2763 = vld [vmem:[%s5 + $0x40] sm:$0xff]
        %v2764 = vld [vmem:[%s5 + $0x48] sm:$0xff]
        %v2765 = vld [vmem:[%s5 + $0x50] sm:$0xff]
        %v2766 = vld [vmem:[%s5 + $0x58] sm:$0xff]
        %v2767 = vld [vmem:[%s5 + $0x60] sm:$0xff]
        %v2768 = vld [vmem:[%s5 + $0x68] sm:$0xff]
        %v2769 = vld [vmem:[%s5 + $0x70] sm:$0xff]
        %v2770 = vld [vmem:[%s5 + $0x78] sm:$0xff]
        %v2771 = vld [vmem:[%s5 + $0x80] sm:$0xff]
        %v2772 = vld [vmem:[%s5 + $0x88] sm:$0xff]
        %v2773 = vld [vmem:[%s5 + $0x90] sm:$0xff]
        %v2774 = vld [vmem:[%s5 + $0x98] sm:$0xff]
        %s2775 = scalar_lea.vmem %s5, 160
        %v2776 = vld [vmem:[%s2775] sm:$0xff]
        %v2777 = vld [vmem:[%s2775 + $0x8] sm:$0xff]
        %v2778 = vld [vmem:[%s2775 + $0x10] sm:$0xff]
        %v2779 = vld [vmem:[%s2775 + $0x18] sm:$0xff]
        %v2780 = vld [vmem:[%s2775 + $0x20] sm:$0xff]
        %v2781 = vld [vmem:[%s2775 + $0x28] sm:$0xff]
        %v2782 = vld [vmem:[%s2775 + $0x30] sm:$0xff]
        %v2783 = vld [vmem:[%s2775 + $0x38] sm:$0xff]
        %v2784 = vld [vmem:[%s2775 + $0x40] sm:$0xff]
        %v2785 = vld [vmem:[%s2775 + $0x48] sm:$0xff]
        %v2786 = vld [vmem:[%s2775 + $0x50] sm:$0xff]
        %v2787 = vld [vmem:[%s2775 + $0x58] sm:$0xff]
        %v2788 = vld [vmem:[%s2775 + $0x60] sm:$0xff]
        %v2789 = vld [vmem:[%s2775 + $0x68] sm:$0xff]
        %v2790 = vld [vmem:[%s2775 + $0x70] sm:$0xff]
        %v2791 = vld [vmem:[%s2775 + $0x78] sm:$0xff]
        %v2792 = vld [vmem:[%s2775 + $0x80] sm:$0xff]
        %v2793 = vld [vmem:[%s2775 + $0x88] sm:$0xff]
        %v2794 = vld [vmem:[%s2775 + $0x90] sm:$0xff]
        %v2795 = vld [vmem:[%s2775 + $0x98] sm:$0xff]
        %2807 = vrot.lane.b32.xlu0 %v2744, 127
        %v2808 = vpop.permute.xlu0 %2807
        %2809 = vrot.lane.b32.xlu0 %v2745, 127
        %v2810 = vpop.permute.xlu0 %2809
        %2811 = vrot.lane.b32.xlu0 %v2746, 127
        %v2812 = vpop.permute.xlu0 %2811
        %2813 = vrot.lane.b32.xlu0 %v2747, 127
        %v2814 = vpop.permute.xlu0 %2813
        %2815 = vrot.lane.b32.xlu0 %v2748, 127
        %v2816 = vpop.permute.xlu0 %2815
        %2817 = vrot.lane.b32.xlu0 %v2749, 127
        %v2818 = vpop.permute.xlu0 %2817
        %2819 = vrot.lane.b32.xlu0 %v2750, 127
        %v2820 = vpop.permute.xlu0 %2819
        %2821 = vrot.lane.b32.xlu0 %v2751, 127
        %v2822 = vpop.permute.xlu0 %2821
        %2823 = vrot.lane.b32.xlu0 %v2752, 127
        %v2824 = vpop.permute.xlu0 %2823
        %2825 = vrot.lane.b32.xlu0 %v2753, 127
        %v2826 = vpop.permute.xlu0 %2825
        %2827 = vrot.lane.b32.xlu0 %v2754, 127
        %v2828 = vpop.permute.xlu0 %2827
        %vm2839 = vcmask 687104
        %v2841 = vsel %vm2839, %v2776, 0
        %v2844 = vsel %vm2839, %v2777, 0
        %v2847 = vsel %vm2839, %v2778, 0
        %v2850 = vsel %vm2839, %v2779, 0
        %v2853 = vsel %vm2839, %v2780, 0
        %v2856 = vsel %vm2839, %v2781, 0
        %v2859 = vsel %vm2839, %v2782, 0
        %v2862 = vsel %vm2839, %v2783, 0
        %v2865 = vsel %vm2839, %v2784, 0
        %v2868 = vsel %vm2839, %v2785, 0
        %v2871 = vsel %vm2839, %v2786, 0
        %v2874 = vsel %vm2839, %v2787, 0
        %v2877 = vsel %vm2839, %v2788, 0
        %v2880 = vsel %vm2839, %v2789, 0
        %v2883 = vsel %vm2839, %v2790, 0
        %v2886 = vsel %vm2839, %v2791, 0
        %v2889 = vsel %vm2839, %v2792, 0
        %v2892 = vsel %vm2839, %v2793, 0
        %v2895 = vsel %vm2839, %v2794, 0
        %v2898 = vsel %vm2839, %v2795, 0
        %v2900 = vsel %vm650, %v2828, 0
        %2902 = vmatprep.subr.mxu0 0.0
        %2903 = vmatpush1.msra.mxu0 0.0
        %2904 = vmatprep.subr.mxu0 0.0
        %2905 = vmatpush1.msra.mxu0 0.0
        %2906 = vmatprep.subr.mxu0 0.0
        %2907 = vmatpush1.msra.mxu0 0.0
        %2908 = vmatprep.subr.mxu0 0.0
        %2909 = vmatpush1.msra.mxu0 0.0
        %2910 = vmatprep.subr.mxu0 0.0
        %2911 = vmatpush1.msra.mxu0 0.0
        %2912 = vmatprep.subr.mxu0 0.0
        %2913 = vmatpush1.msra.mxu0 %v2900
        %2914 = vmatprep.subr.mxu0 0.0
        %2915 = vmatpush1.msra.mxu0 %v2826
        %2916 = vmatprep.subr.mxu0 0.0
        %2917 = vmatpush1.msra.mxu0 %v2824
        %2918 = vmatprep.subr.mxu0 0.0
        %2919 = vmatpush1.msra.mxu0 %v2822
        %2920 = vmatprep.subr.mxu0 0.0
        %2921 = vmatpush1.msra.mxu0 %v2820
        %2922 = vmatprep.subr.mxu0 0.0
        %2923 = vmatpush1.msra.mxu0 %v2818
        %2924 = vmatprep.subr.mxu0 0.0
        %2925 = vmatpush1.msra.mxu0 %v2816
        %2926 = vmatprep.subr.mxu0 0.0
        %2927 = vmatpush1.msra.mxu0 %v2814
        %2928 = vmatprep.subr.mxu0 0.0
        %2929 = vmatpush1.msra.mxu0 %v2812
        %2930 = vmatprep.subr.mxu0 0.0
        %2931 = vmatpush1.msra.mxu0 %v2810
        %2932 = vmatprep.subr.mxu0 0.0
        %2933 = vmatpush1.msra.mxu0 %v2808
        %2934 = vmatprep.subr.mxu0 0.0
        %2935 = vmatpush2.msra.mxu0 0.0
        %2936 = vmatprep.subr.mxu0 0.0
        %2937 = vmatpush2.msra.mxu0 0.0
        %2938 = vmatprep.subr.mxu0 0.0
        %2939 = vmatpush2.msra.mxu0 0.0
        %2940 = vmatprep.subr.mxu0 0.0
        %2941 = vmatpush2.msra.mxu0 0.0
        %2942 = vmatprep.subr.mxu0 0.0
        %2943 = vmatpush2.msra.mxu0 0.0
        %2944 = vmatprep.subr.mxu0 0.0
        %2945 = vmatpush2.msra.mxu0 0.0
        %2946 = vmatprep.subr.mxu0 0.0
        %2947 = vmatpush2.msra.mxu0 0.0
        %2948 = vmatprep.subr.mxu0 0.0
        %2949 = vmatpush2.msra.mxu0 0.0
        %2950 = vmatprep.subr.mxu0 0.0
        %2951 = vmatpush2.msra.mxu0 0.0
        %2952 = vmatprep.subr.mxu0 0.0
        %2953 = vmatpush2.msra.mxu0 0.0
        %2954 = vmatprep.subr.mxu0 0.0
        %2955 = vmatpush2.msra.mxu0 0.0
        %2956 = vmatprep.subr.mxu0 0.0
        %2957 = vmatpush2.msra.mxu0 0.0
        %2958 = vmatprep.subr.mxu0 0.0
        %2959 = vmatpush2.msra.mxu0 0.0
        %2960 = vmatprep.subr.mxu0 0.0
        %2961 = vmatpush2.msra.mxu0 0.0
        %2962 = vmatprep.subr.mxu0 0.0
        %2963 = vmatpush2.msra.mxu0 0.0
        %2964 = vmatprep.subr.mxu0 0.0
        %2965 = vmatpush2.msra.mxu0 0.0
        %2966 = vmatprep.mubr.f32.mxu0 0.0
        %2967 = vmatmul.mubr.f32.gmra.mxu0 %v2841
        %v2968 = vpop.f32.mrf.mxu0
        %v2969 = vadd.f32 0.0, %v2968
        %v2970 = vpop.f32.mrf.mxu0
        %2971 = vmatprep.mubr.f32.mxu0 0.0
        %2972 = vmatmul.mubr.f32.gmra.mxu0 %v2844
        %v2973 = vpop.f32.mrf.mxu0
        %v2974 = vadd.f32 0.0, %v2973
        %v2975 = vpop.f32.mrf.mxu0
        %2976 = vmatprep.mubr.f32.mxu0 0.0
        %2977 = vmatmul.mubr.f32.gmra.mxu0 %v2847
        %v2978 = vpop.f32.mrf.mxu0
        %v2979 = vadd.f32 0.0, %v2978
        %v2980 = vpop.f32.mrf.mxu0
        %2981 = vmatprep.mubr.f32.mxu0 0.0
        %2982 = vmatmul.mubr.f32.gmra.mxu0 %v2850
        %v2983 = vpop.f32.mrf.mxu0
        %v2984 = vadd.f32 0.0, %v2983
        %v2985 = vpop.f32.mrf.mxu0
        %2986 = vmatprep.mubr.f32.mxu0 0.0
        %2987 = vmatmul.mubr.f32.gmra.mxu0 %v2853
        %v2988 = vpop.f32.mrf.mxu0
        %v2989 = vadd.f32 0.0, %v2988
        %v2990 = vpop.f32.mrf.mxu0
        %2991 = vmatprep.mubr.f32.mxu0 0.0
        %2992 = vmatmul.mubr.f32.gmra.mxu0 %v2856
        %v2993 = vpop.f32.mrf.mxu0
        %v2994 = vadd.f32 0.0, %v2993
        %v2995 = vpop.f32.mrf.mxu0
        %2996 = vmatprep.mubr.f32.mxu0 0.0
        %2997 = vmatmul.mubr.f32.gmra.mxu0 %v2859
        %v2998 = vpop.f32.mrf.mxu0
        %v2999 = vadd.f32 0.0, %v2998
        %v3000 = vpop.f32.mrf.mxu0
        %3001 = vmatprep.mubr.f32.mxu0 0.0
        %3002 = vmatmul.mubr.f32.gmra.mxu0 %v2862
        %v3003 = vpop.f32.mrf.mxu0
        %v3004 = vadd.f32 0.0, %v3003
        %v3005 = vpop.f32.mrf.mxu0
        %3006 = vmatprep.mubr.f32.mxu0 0.0
        %3007 = vmatmul.mubr.f32.gmra.mxu0 %v2865
        %v3008 = vpop.f32.mrf.mxu0
        %v3009 = vadd.f32 0.0, %v3008
        %v3010 = vpop.f32.mrf.mxu0
        %3011 = vmatprep.mubr.f32.mxu0 0.0
        %3012 = vmatmul.mubr.f32.gmra.mxu0 %v2868
        %v3013 = vpop.f32.mrf.mxu0
        %v3014 = vadd.f32 0.0, %v3013
        %v3015 = vpop.f32.mrf.mxu0
        %3016 = vmatprep.mubr.f32.mxu0 0.0
        %3017 = vmatmul.mubr.f32.gmra.mxu0 %v2871
        %v3018 = vpop.f32.mrf.mxu0
        %v3019 = vadd.f32 0.0, %v3018
        %v3020 = vpop.f32.mrf.mxu0
        %3021 = vmatprep.mubr.f32.mxu0 0.0
        %3022 = vmatmul.mubr.f32.gmra.mxu0 %v2874
        %v3023 = vpop.f32.mrf.mxu0
        %v3024 = vadd.f32 0.0, %v3023
        %v3025 = vpop.f32.mrf.mxu0
        %3026 = vmatprep.mubr.f32.mxu0 0.0
        %3027 = vmatmul.mubr.f32.gmra.mxu0 %v2877
        %v3028 = vpop.f32.mrf.mxu0
        %v3029 = vadd.f32 0.0, %v3028
        %v3030 = vpop.f32.mrf.mxu0
        %3031 = vmatprep.mubr.f32.mxu0 0.0
        %3032 = vmatmul.mubr.f32.gmra.mxu0 %v2880
        %v3033 = vpop.f32.mrf.mxu0
        %v3034 = vadd.f32 0.0, %v3033
        %v3035 = vpop.f32.mrf.mxu0
        %3036 = vmatprep.mubr.f32.mxu0 0.0
        %3037 = vmatmul.mubr.f32.gmra.mxu0 %v2883
        %v3038 = vpop.f32.mrf.mxu0
        %v3039 = vadd.f32 0.0, %v3038
        %v3040 = vpop.f32.mrf.mxu0
        %3041 = vmatprep.mubr.f32.mxu0 0.0
        %3042 = vmatmul.mubr.f32.gmra.mxu0 %v2886
        %v3043 = vpop.f32.mrf.mxu0
        %v3044 = vadd.f32 0.0, %v3043
        %v3045 = vpop.f32.mrf.mxu0
        %3046 = vmatprep.mubr.f32.mxu0 0.0
        %3047 = vmatmul.mubr.f32.gmra.mxu0 %v2889
        %v3048 = vpop.f32.mrf.mxu0
        %v3049 = vadd.f32 0.0, %v3048
        %v3050 = vpop.f32.mrf.mxu0
        %3051 = vmatprep.mubr.f32.mxu0 0.0
        %3052 = vmatmul.mubr.f32.gmra.mxu0 %v2892
        %v3053 = vpop.f32.mrf.mxu0
        %v3054 = vadd.f32 0.0, %v3053
        %v3055 = vpop.f32.mrf.mxu0
        %3056 = vmatprep.mubr.f32.mxu0 0.0
        %3057 = vmatmul.mubr.f32.gmra.mxu0 %v2895
        %v3058 = vpop.f32.mrf.mxu0
        %v3059 = vadd.f32 0.0, %v3058
        %v3060 = vpop.f32.mrf.mxu0
        %3061 = vmatprep.mubr.f32.mxu0 0.0
        %3062 = vmatmul.mubr.f32.gmra.mxu0 %v2898
        %v3063 = vpop.f32.mrf.mxu0
        %v3064 = vadd.f32 0.0, %v3063
        %v3065 = vpop.f32.mrf.mxu0
        %3066 = vdwg.mxu0
        %v3068 = vsel %vm2839, %v2755, 0
        %v3071 = vsel %vm2839, %v2756, 0
        %v3074 = vsel %vm2839, %v2757, 0
        %v3077 = vsel %vm2839, %v2758, 0
        %v3080 = vsel %vm2839, %v2759, 0
        %v3083 = vsel %vm2839, %v2760, 0
        %v3086 = vsel %vm2839, %v2761, 0
        %v3089 = vsel %vm2839, %v2762, 0
        %v3092 = vsel %vm2839, %v2763, 0
        %v3095 = vsel %vm2839, %v2764, 0
        %v3098 = vsel %vm2839, %v2765, 0
        %v3101 = vsel %vm2839, %v2766, 0
        %v3104 = vsel %vm2839, %v2767, 0
        %v3107 = vsel %vm2839, %v2768, 0
        %v3110 = vsel %vm2839, %v2769, 0
        %v3113 = vsel %vm2839, %v2770, 0
        %v3116 = vsel %vm2839, %v2771, 0
        %v3119 = vsel %vm2839, %v2772, 0
        %v3122 = vsel %vm2839, %v2773, 0
        %v3125 = vsel %vm2839, %v2774, 0
        %v3127 = vsel %vm650, %v2754, 0
        %3129 = vmatprep.subr.mxu0 0.0
        %3130 = vmatpush1.msra.mxu0 0.0
        %3131 = vmatprep.subr.mxu0 0.0
        %3132 = vmatpush1.msra.mxu0 0.0
        %3133 = vmatprep.subr.mxu0 0.0
        %3134 = vmatpush1.msra.mxu0 0.0
        %3135 = vmatprep.subr.mxu0 0.0
        %3136 = vmatpush1.msra.mxu0 0.0
        %3137 = vmatprep.subr.mxu0 0.0
        %3138 = vmatpush1.msra.mxu0 0.0
        %3139 = vmatprep.subr.mxu0 0.0
        %3140 = vmatpush1.msra.mxu0 %v3127
        %3141 = vmatprep.subr.mxu0 0.0
        %3142 = vmatpush1.msra.mxu0 %v2753
        %3143 = vmatprep.subr.mxu0 0.0
        %3144 = vmatpush1.msra.mxu0 %v2752
        %3145 = vmatprep.subr.mxu0 0.0
        %3146 = vmatpush1.msra.mxu0 %v2751
        %3147 = vmatprep.subr.mxu0 0.0
        %3148 = vmatpush1.msra.mxu0 %v2750
        %3149 = vmatprep.subr.mxu0 0.0
        %3150 = vmatpush1.msra.mxu0 %v2749
        %3151 = vmatprep.subr.mxu0 0.0
        %3152 = vmatpush1.msra.mxu0 %v2748
        %3153 = vmatprep.subr.mxu0 0.0
        %3154 = vmatpush1.msra.mxu0 %v2747
        %3155 = vmatprep.subr.mxu0 0.0
        %3156 = vmatpush1.msra.mxu0 %v2746
        %3157 = vmatprep.subr.mxu0 0.0
        %3158 = vmatpush1.msra.mxu0 %v2745
        %3159 = vmatprep.subr.mxu0 0.0
        %3160 = vmatpush1.msra.mxu0 %v2744
        %3161 = vmatprep.subr.mxu0 0.0
        %3162 = vmatpush2.msra.mxu0 0.0
        %3163 = vmatprep.subr.mxu0 0.0
        %3164 = vmatpush2.msra.mxu0 0.0
        %3165 = vmatprep.subr.mxu0 0.0
        %3166 = vmatpush2.msra.mxu0 0.0
        %3167 = vmatprep.subr.mxu0 0.0
        %3168 = vmatpush2.msra.mxu0 0.0
        %3169 = vmatprep.subr.mxu0 0.0
        %3170 = vmatpush2.msra.mxu0 0.0
        %3171 = vmatprep.subr.mxu0 0.0
        %3172 = vmatpush2.msra.mxu0 0.0
        %3173 = vmatprep.subr.mxu0 0.0
        %3174 = vmatpush2.msra.mxu0 0.0
        %3175 = vmatprep.subr.mxu0 0.0
        %3176 = vmatpush2.msra.mxu0 0.0
        %3177 = vmatprep.subr.mxu0 0.0
        %3178 = vmatpush2.msra.mxu0 0.0
        %3179 = vmatprep.subr.mxu0 0.0
        %3180 = vmatpush2.msra.mxu0 0.0
        %3181 = vmatprep.subr.mxu0 0.0
        %3182 = vmatpush2.msra.mxu0 0.0
        %3183 = vmatprep.subr.mxu0 0.0
        %3184 = vmatpush2.msra.mxu0 0.0
        %3185 = vmatprep.subr.mxu0 0.0
        %3186 = vmatpush2.msra.mxu0 0.0
        %3187 = vmatprep.subr.mxu0 0.0
        %3188 = vmatpush2.msra.mxu0 0.0
        %3189 = vmatprep.subr.mxu0 0.0
        %3190 = vmatpush2.msra.mxu0 0.0
        %3191 = vmatprep.subr.mxu0 0.0
        %3192 = vmatpush2.msra.mxu0 0.0
        %3193 = vmatprep.mubr.f32.mxu0 0.0
        %3194 = vmatmul.mubr.f32.gmra.mxu0 %v3068
        %v3195 = vpop.f32.mrf.mxu0
        %v3196 = vadd.f32 %v2969, %v3195
        %v3197 = vpop.f32.mrf.mxu0
        %3198 = vmatprep.mubr.f32.mxu0 0.0
        %3199 = vmatmul.mubr.f32.gmra.mxu0 %v3071
        %v3200 = vpop.f32.mrf.mxu0
        %v3201 = vadd.f32 %v2974, %v3200
        %v3202 = vpop.f32.mrf.mxu0
        %3203 = vmatprep.mubr.f32.mxu0 0.0
        %3204 = vmatmul.mubr.f32.gmra.mxu0 %v3074
        %v3205 = vpop.f32.mrf.mxu0
        %v3206 = vadd.f32 %v2979, %v3205
        %v3207 = vpop.f32.mrf.mxu0
        %3208 = vmatprep.mubr.f32.mxu0 0.0
        %3209 = vmatmul.mubr.f32.gmra.mxu0 %v3077
        %v3210 = vpop.f32.mrf.mxu0
        %v3211 = vadd.f32 %v2984, %v3210
        %v3212 = vpop.f32.mrf.mxu0
        %3213 = vmatprep.mubr.f32.mxu0 0.0
        %3214 = vmatmul.mubr.f32.gmra.mxu0 %v3080
        %v3215 = vpop.f32.mrf.mxu0
        %v3216 = vadd.f32 %v2989, %v3215
        %v3217 = vpop.f32.mrf.mxu0
        %3218 = vmatprep.mubr.f32.mxu0 0.0
        %3219 = vmatmul.mubr.f32.gmra.mxu0 %v3083
        %v3220 = vpop.f32.mrf.mxu0
        %v3221 = vadd.f32 %v2994, %v3220
        %v3222 = vpop.f32.mrf.mxu0
        %3223 = vmatprep.mubr.f32.mxu0 0.0
        %3224 = vmatmul.mubr.f32.gmra.mxu0 %v3086
        %v3225 = vpop.f32.mrf.mxu0
        %v3226 = vadd.f32 %v2999, %v3225
        %v3227 = vpop.f32.mrf.mxu0
        %3228 = vmatprep.mubr.f32.mxu0 0.0
        %3229 = vmatmul.mubr.f32.gmra.mxu0 %v3089
        %v3230 = vpop.f32.mrf.mxu0
        %v3231 = vadd.f32 %v3004, %v3230
        %v3232 = vpop.f32.mrf.mxu0
        %3233 = vmatprep.mubr.f32.mxu0 0.0
        %3234 = vmatmul.mubr.f32.gmra.mxu0 %v3092
        %v3235 = vpop.f32.mrf.mxu0
        %v3236 = vadd.f32 %v3009, %v3235
        %v3237 = vpop.f32.mrf.mxu0
        %3238 = vmatprep.mubr.f32.mxu0 0.0
        %3239 = vmatmul.mubr.f32.gmra.mxu0 %v3095
        %v3240 = vpop.f32.mrf.mxu0
        %v3241 = vadd.f32 %v3014, %v3240
        %v3242 = vpop.f32.mrf.mxu0
        %3243 = vmatprep.mubr.f32.mxu0 0.0
        %3244 = vmatmul.mubr.f32.gmra.mxu0 %v3098
        %v3245 = vpop.f32.mrf.mxu0
        %v3246 = vadd.f32 %v3019, %v3245
        %v3247 = vpop.f32.mrf.mxu0
        %3248 = vmatprep.mubr.f32.mxu0 0.0
        %3249 = vmatmul.mubr.f32.gmra.mxu0 %v3101
        %v3250 = vpop.f32.mrf.mxu0
        %v3251 = vadd.f32 %v3024, %v3250
        %v3252 = vpop.f32.mrf.mxu0
        %3253 = vmatprep.mubr.f32.mxu0 0.0
        %3254 = vmatmul.mubr.f32.gmra.mxu0 %v3104
        %v3255 = vpop.f32.mrf.mxu0
        %v3256 = vadd.f32 %v3029, %v3255
        %v3257 = vpop.f32.mrf.mxu0
        %3258 = vmatprep.mubr.f32.mxu0 0.0
        %3259 = vmatmul.mubr.f32.gmra.mxu0 %v3107
        %v3260 = vpop.f32.mrf.mxu0
        %v3261 = vadd.f32 %v3034, %v3260
        %v3262 = vpop.f32.mrf.mxu0
        %3263 = vmatprep.mubr.f32.mxu0 0.0
        %3264 = vmatmul.mubr.f32.gmra.mxu0 %v3110
        %v3265 = vpop.f32.mrf.mxu0
        %v3266 = vadd.f32 %v3039, %v3265
        %v3267 = vpop.f32.mrf.mxu0
        %3268 = vmatprep.mubr.f32.mxu0 0.0
        %3269 = vmatmul.mubr.f32.gmra.mxu0 %v3113
        %v3270 = vpop.f32.mrf.mxu0
        %v3271 = vadd.f32 %v3044, %v3270
        %v3272 = vpop.f32.mrf.mxu0
        %3273 = vmatprep.mubr.f32.mxu0 0.0
        %3274 = vmatmul.mubr.f32.gmra.mxu0 %v3116
        %v3275 = vpop.f32.mrf.mxu0
        %v3276 = vadd.f32 %v3049, %v3275
        %v3277 = vpop.f32.mrf.mxu0
        %3278 = vmatprep.mubr.f32.mxu0 0.0
        %3279 = vmatmul.mubr.f32.gmra.mxu0 %v3119
        %v3280 = vpop.f32.mrf.mxu0
        %v3281 = vadd.f32 %v3054, %v3280
        %v3282 = vpop.f32.mrf.mxu0
        %3283 = vmatprep.mubr.f32.mxu0 0.0
        %3284 = vmatmul.mubr.f32.gmra.mxu0 %v3122
        %v3285 = vpop.f32.mrf.mxu0
        %v3286 = vadd.f32 %v3059, %v3285
        %v3287 = vpop.f32.mrf.mxu0
        %3288 = vmatprep.mubr.f32.mxu0 0.0
        %3289 = vmatmul.mubr.f32.gmra.mxu0 %v3125
        %v3290 = vpop.f32.mrf.mxu0
        %v3291 = vadd.f32 %v3064, %v3290
        %v3292 = vpop.f32.mrf.mxu0
        %3293 = vdwg.mxu0
        %s3294 = scalar_lea.vmem %s5, 320
        %v3295 = vld [vmem:[%s3294] sm:$0xff]
        %v3296 = vld [vmem:[%s3294 + $0x8] sm:$0xff]
        %v3297 = vld [vmem:[%s3294 + $0x10] sm:$0xff]
        %v3298 = vld [vmem:[%s3294 + $0x18] sm:$0xff]
        %v3299 = vld [vmem:[%s3294 + $0x20] sm:$0xff]
        %v3300 = vld [vmem:[%s3294 + $0x28] sm:$0xff]
        %v3301 = vld [vmem:[%s3294 + $0x30] sm:$0xff]
        %v3302 = vld [vmem:[%s3294 + $0x38] sm:$0xff]
        %v3303 = vld [vmem:[%s3294 + $0x40] sm:$0xff]
        %v3304 = vld [vmem:[%s3294 + $0x48] sm:$0xff]
        %v3305 = vld [vmem:[%s3294 + $0x50] sm:$0xff]
        %v3306 = vld [vmem:[%s3294 + $0x58] sm:$0xff]
        %v3307 = vld [vmem:[%s3294 + $0x60] sm:$0xff]
        %v3308 = vld [vmem:[%s3294 + $0x68] sm:$0xff]
        %v3309 = vld [vmem:[%s3294 + $0x70] sm:$0xff]
        %v3310 = vld [vmem:[%s3294 + $0x78] sm:$0xff]
        %v3311 = vld [vmem:[%s3294 + $0x80] sm:$0xff]
        %v3312 = vld [vmem:[%s3294 + $0x88] sm:$0xff]
        %v3313 = vld [vmem:[%s3294 + $0x90] sm:$0xff]
        %v3314 = vld [vmem:[%s3294 + $0x98] sm:$0xff]
        %3315 = vrot.lane.b32.xlu0 %v2744, 126
        %v3316 = vpop.permute.xlu0 %3315
        %3317 = vrot.lane.b32.xlu0 %v2745, 126
        %v3318 = vpop.permute.xlu0 %3317
        %3319 = vrot.lane.b32.xlu0 %v2746, 126
        %v3320 = vpop.permute.xlu0 %3319
        %3321 = vrot.lane.b32.xlu0 %v2747, 126
        %v3322 = vpop.permute.xlu0 %3321
        %3323 = vrot.lane.b32.xlu0 %v2748, 126
        %v3324 = vpop.permute.xlu0 %3323
        %3325 = vrot.lane.b32.xlu0 %v2749, 126
        %v3326 = vpop.permute.xlu0 %3325
        %3327 = vrot.lane.b32.xlu0 %v2750, 126
        %v3328 = vpop.permute.xlu0 %3327
        %3329 = vrot.lane.b32.xlu0 %v2751, 126
        %v3330 = vpop.permute.xlu0 %3329
        %3331 = vrot.lane.b32.xlu0 %v2752, 126
        %v3332 = vpop.permute.xlu0 %3331
        %3333 = vrot.lane.b32.xlu0 %v2753, 126
        %v3334 = vpop.permute.xlu0 %3333
        %3335 = vrot.lane.b32.xlu0 %v2754, 126
        %v3336 = vpop.permute.xlu0 %3335
        %v3348 = vsel %vm2839, %v3295, 0
        %v3351 = vsel %vm2839, %v3296, 0
        %v3354 = vsel %vm2839, %v3297, 0
        %v3357 = vsel %vm2839, %v3298, 0
        %v3360 = vsel %vm2839, %v3299, 0
        %v3363 = vsel %vm2839, %v3300, 0
        %v3366 = vsel %vm2839, %v3301, 0
        %v3369 = vsel %vm2839, %v3302, 0
        %v3372 = vsel %vm2839, %v3303, 0
        %v3375 = vsel %vm2839, %v3304, 0
        %v3378 = vsel %vm2839, %v3305, 0
        %v3381 = vsel %vm2839, %v3306, 0
        %v3384 = vsel %vm2839, %v3307, 0
        %v3387 = vsel %vm2839, %v3308, 0
        %v3390 = vsel %vm2839, %v3309, 0
        %v3393 = vsel %vm2839, %v3310, 0
        %v3396 = vsel %vm2839, %v3311, 0
        %v3399 = vsel %vm2839, %v3312, 0
        %v3402 = vsel %vm2839, %v3313, 0
        %v3405 = vsel %vm2839, %v3314, 0
        %v3407 = vsel %vm650, %v3336, 0
        %3409 = vmatprep.subr.mxu0 0.0
        %3410 = vmatpush1.msra.mxu0 0.0
        %3411 = vmatprep.subr.mxu0 0.0
        %3412 = vmatpush1.msra.mxu0 0.0
        %3413 = vmatprep.subr.mxu0 0.0
        %3414 = vmatpush1.msra.mxu0 0.0
        %3415 = vmatprep.subr.mxu0 0.0
        %3416 = vmatpush1.msra.mxu0 0.0
        %3417 = vmatprep.subr.mxu0 0.0
        %3418 = vmatpush1.msra.mxu0 0.0
        %3419 = vmatprep.subr.mxu0 0.0
        %3420 = vmatpush1.msra.mxu0 %v3407
        %3421 = vmatprep.subr.mxu0 0.0
        %3422 = vmatpush1.msra.mxu0 %v3334
        %3423 = vmatprep.subr.mxu0 0.0
        %3424 = vmatpush1.msra.mxu0 %v3332
        %3425 = vmatprep.subr.mxu0 0.0
        %3426 = vmatpush1.msra.mxu0 %v3330
        %3427 = vmatprep.subr.mxu0 0.0
        %3428 = vmatpush1.msra.mxu0 %v3328
        %3429 = vmatprep.subr.mxu0 0.0
        %3430 = vmatpush1.msra.mxu0 %v3326
        %3431 = vmatprep.subr.mxu0 0.0
        %3432 = vmatpush1.msra.mxu0 %v3324
        %3433 = vmatprep.subr.mxu0 0.0
        %3434 = vmatpush1.msra.mxu0 %v3322
        %3435 = vmatprep.subr.mxu0 0.0
        %3436 = vmatpush1.msra.mxu0 %v3320
        %3437 = vmatprep.subr.mxu0 0.0
        %3438 = vmatpush1.msra.mxu0 %v3318
        %3439 = vmatprep.subr.mxu0 0.0
        %3440 = vmatpush1.msra.mxu0 %v3316
        %3441 = vmatprep.subr.mxu0 0.0
        %3442 = vmatpush2.msra.mxu0 0.0
        %3443 = vmatprep.subr.mxu0 0.0
        %3444 = vmatpush2.msra.mxu0 0.0
        %3445 = vmatprep.subr.mxu0 0.0
        %3446 = vmatpush2.msra.mxu0 0.0
        %3447 = vmatprep.subr.mxu0 0.0
        %3448 = vmatpush2.msra.mxu0 0.0
        %3449 = vmatprep.subr.mxu0 0.0
        %3450 = vmatpush2.msra.mxu0 0.0
        %3451 = vmatprep.subr.mxu0 0.0
        %3452 = vmatpush2.msra.mxu0 0.0
        %3453 = vmatprep.subr.mxu0 0.0
        %3454 = vmatpush2.msra.mxu0 0.0
        %3455 = vmatprep.subr.mxu0 0.0
        %3456 = vmatpush2.msra.mxu0 0.0
        %3457 = vmatprep.subr.mxu0 0.0
        %3458 = vmatpush2.msra.mxu0 0.0
        %3459 = vmatprep.subr.mxu0 0.0
        %3460 = vmatpush2.msra.mxu0 0.0
        %3461 = vmatprep.subr.mxu0 0.0
        %3462 = vmatpush2.msra.mxu0 0.0
        %3463 = vmatprep.subr.mxu0 0.0
        %3464 = vmatpush2.msra.mxu0 0.0
        %3465 = vmatprep.subr.mxu0 0.0
        %3466 = vmatpush2.msra.mxu0 0.0
        %3467 = vmatprep.subr.mxu0 0.0
        %3468 = vmatpush2.msra.mxu0 0.0
        %3469 = vmatprep.subr.mxu0 0.0
        %3470 = vmatpush2.msra.mxu0 0.0
        %3471 = vmatprep.subr.mxu0 0.0
        %3472 = vmatpush2.msra.mxu0 0.0
        %3473 = vmatprep.mubr.f32.mxu0 0.0
        %3474 = vmatmul.mubr.f32.gmra.mxu0 %v3348
        %v3475 = vpop.f32.mrf.mxu0
        %v3476 = vadd.f32 0.0, %v3475
        %v3477 = vpop.f32.mrf.mxu0
        %3478 = vmatprep.mubr.f32.mxu0 0.0
        %3479 = vmatmul.mubr.f32.gmra.mxu0 %v3351
        %v3480 = vpop.f32.mrf.mxu0
        %v3481 = vadd.f32 0.0, %v3480
        %v3482 = vpop.f32.mrf.mxu0
        %3483 = vmatprep.mubr.f32.mxu0 0.0
        %3484 = vmatmul.mubr.f32.gmra.mxu0 %v3354
        %v3485 = vpop.f32.mrf.mxu0
        %v3486 = vadd.f32 0.0, %v3485
        %v3487 = vpop.f32.mrf.mxu0
        %3488 = vmatprep.mubr.f32.mxu0 0.0
        %3489 = vmatmul.mubr.f32.gmra.mxu0 %v3357
        %v3490 = vpop.f32.mrf.mxu0
        %v3491 = vadd.f32 0.0, %v3490
        %v3492 = vpop.f32.mrf.mxu0
        %3493 = vmatprep.mubr.f32.mxu0 0.0
        %3494 = vmatmul.mubr.f32.gmra.mxu0 %v3360
        %v3495 = vpop.f32.mrf.mxu0
        %v3496 = vadd.f32 0.0, %v3495
        %v3497 = vpop.f32.mrf.mxu0
        %3498 = vmatprep.mubr.f32.mxu0 0.0
        %3499 = vmatmul.mubr.f32.gmra.mxu0 %v3363
        %v3500 = vpop.f32.mrf.mxu0
        %v3501 = vadd.f32 0.0, %v3500
        %v3502 = vpop.f32.mrf.mxu0
        %3503 = vmatprep.mubr.f32.mxu0 0.0
        %3504 = vmatmul.mubr.f32.gmra.mxu0 %v3366
        %v3505 = vpop.f32.mrf.mxu0
        %v3506 = vadd.f32 0.0, %v3505
        %v3507 = vpop.f32.mrf.mxu0
        %3508 = vmatprep.mubr.f32.mxu0 0.0
        %3509 = vmatmul.mubr.f32.gmra.mxu0 %v3369
        %v3510 = vpop.f32.mrf.mxu0
        %v3511 = vadd.f32 0.0, %v3510
        %v3512 = vpop.f32.mrf.mxu0
        %3513 = vmatprep.mubr.f32.mxu0 0.0
        %3514 = vmatmul.mubr.f32.gmra.mxu0 %v3372
        %v3515 = vpop.f32.mrf.mxu0
        %v3516 = vadd.f32 0.0, %v3515
        %v3517 = vpop.f32.mrf.mxu0
        %3518 = vmatprep.mubr.f32.mxu0 0.0
        %3519 = vmatmul.mubr.f32.gmra.mxu0 %v3375
        %v3520 = vpop.f32.mrf.mxu0
        %v3521 = vadd.f32 0.0, %v3520
        %v3522 = vpop.f32.mrf.mxu0
        %3523 = vmatprep.mubr.f32.mxu0 0.0
        %3524 = vmatmul.mubr.f32.gmra.mxu0 %v3378
        %v3525 = vpop.f32.mrf.mxu0
        %v3526 = vadd.f32 0.0, %v3525
        %v3527 = vpop.f32.mrf.mxu0
        %3528 = vmatprep.mubr.f32.mxu0 0.0
        %3529 = vmatmul.mubr.f32.gmra.mxu0 %v3381
        %v3530 = vpop.f32.mrf.mxu0
        %v3531 = vadd.f32 0.0, %v3530
        %v3532 = vpop.f32.mrf.mxu0
        %3533 = vmatprep.mubr.f32.mxu0 0.0
        %3534 = vmatmul.mubr.f32.gmra.mxu0 %v3384
        %v3535 = vpop.f32.mrf.mxu0
        %v3536 = vadd.f32 0.0, %v3535
        %v3537 = vpop.f32.mrf.mxu0
        %3538 = vmatprep.mubr.f32.mxu0 0.0
        %3539 = vmatmul.mubr.f32.gmra.mxu0 %v3387
        %v3540 = vpop.f32.mrf.mxu0
        %v3541 = vadd.f32 0.0, %v3540
        %v3542 = vpop.f32.mrf.mxu0
        %3543 = vmatprep.mubr.f32.mxu0 0.0
        %3544 = vmatmul.mubr.f32.gmra.mxu0 %v3390
        %v3545 = vpop.f32.mrf.mxu0
        %v3546 = vadd.f32 0.0, %v3545
        %v3547 = vpop.f32.mrf.mxu0
        %3548 = vmatprep.mubr.f32.mxu0 0.0
        %3549 = vmatmul.mubr.f32.gmra.mxu0 %v3393
        %v3550 = vpop.f32.mrf.mxu0
        %v3551 = vadd.f32 0.0, %v3550
        %v3552 = vpop.f32.mrf.mxu0
        %3553 = vmatprep.mubr.f32.mxu0 0.0
        %3554 = vmatmul.mubr.f32.gmra.mxu0 %v3396
        %v3555 = vpop.f32.mrf.mxu0
        %v3556 = vadd.f32 0.0, %v3555
        %v3557 = vpop.f32.mrf.mxu0
        %3558 = vmatprep.mubr.f32.mxu0 0.0
        %3559 = vmatmul.mubr.f32.gmra.mxu0 %v3399
        %v3560 = vpop.f32.mrf.mxu0
        %v3561 = vadd.f32 0.0, %v3560
        %v3562 = vpop.f32.mrf.mxu0
        %3563 = vmatprep.mubr.f32.mxu0 0.0
        %3564 = vmatmul.mubr.f32.gmra.mxu0 %v3402
        %v3565 = vpop.f32.mrf.mxu0
        %v3566 = vadd.f32 0.0, %v3565
        %v3567 = vpop.f32.mrf.mxu0
        %3568 = vmatprep.mubr.f32.mxu0 0.0
        %3569 = vmatmul.mubr.f32.gmra.mxu0 %v3405
        %v3570 = vpop.f32.mrf.mxu0
        %v3571 = vadd.f32 0.0, %v3570
        %v3572 = vpop.f32.mrf.mxu0
        %3573 = vdwg.mxu0
        %v3574 = vadd.f32 %v3196, %v3476
        %v3575 = vadd.f32 %v3201, %v3481
        %v3576 = vadd.f32 %v3206, %v3486
        %v3577 = vadd.f32 %v3211, %v3491
        %v3578 = vadd.f32 %v3216, %v3496
        %v3579 = vadd.f32 %v3221, %v3501
        %v3580 = vadd.f32 %v3226, %v3506
        %v3581 = vadd.f32 %v3231, %v3511
        %v3582 = vadd.f32 %v3236, %v3516
        %v3583 = vadd.f32 %v3241, %v3521
        %v3584 = vadd.f32 %v3246, %v3526
        %v3585 = vadd.f32 %v3251, %v3531
        %v3586 = vadd.f32 %v3256, %v3536
        %v3587 = vadd.f32 %v3261, %v3541
        %v3588 = vadd.f32 %v3266, %v3546
        %v3589 = vadd.f32 %v3271, %v3551
        %v3590 = vadd.f32 %v3276, %v3556
        %v3591 = vadd.f32 %v3281, %v3561
        %v3592 = vadd.f32 %v3286, %v3566
        %v3593 = vadd.f32 %v3291, %v3571
        %s3594 = scalar_lea.vmem %s5, 480
        %v3595 = vld [vmem:[%s3594] sm:$0xff]
        %v3596 = vld [vmem:[%s3594 + $0x8] sm:$0xff]
        %v3597 = vld [vmem:[%s3594 + $0x10] sm:$0xff]
        %v3598 = vld [vmem:[%s3594 + $0x18] sm:$0xff]
        %v3599 = vld [vmem:[%s3594 + $0x20] sm:$0xff]
        %v3600 = vld [vmem:[%s3594 + $0x28] sm:$0xff]
        %v3601 = vld [vmem:[%s3594 + $0x30] sm:$0xff]
        %v3602 = vld [vmem:[%s3594 + $0x38] sm:$0xff]
        %v3603 = vld [vmem:[%s3594 + $0x40] sm:$0xff]
        %v3604 = vld [vmem:[%s3594 + $0x48] sm:$0xff]
        %v3605 = vld [vmem:[%s3594 + $0x50] sm:$0xff]
        %v3606 = vld [vmem:[%s3594 + $0x58] sm:$0xff]
        %v3607 = vld [vmem:[%s3594 + $0x60] sm:$0xff]
        %v3608 = vld [vmem:[%s3594 + $0x68] sm:$0xff]
        %v3609 = vld [vmem:[%s3594 + $0x70] sm:$0xff]
        %v3610 = vld [vmem:[%s3594 + $0x78] sm:$0xff]
        %v3611 = vld [vmem:[%s3594 + $0x80] sm:$0xff]
        %v3612 = vld [vmem:[%s3594 + $0x88] sm:$0xff]
        %v3613 = vld [vmem:[%s3594 + $0x90] sm:$0xff]
        %v3614 = vld [vmem:[%s3594 + $0x98] sm:$0xff]
        %3615 = vrot.lane.b32.xlu0 %v2744, 125
        %v3616 = vpop.permute.xlu0 %3615
        %3617 = vrot.lane.b32.xlu0 %v2745, 125
        %v3618 = vpop.permute.xlu0 %3617
        %3619 = vrot.lane.b32.xlu0 %v2746, 125
        %v3620 = vpop.permute.xlu0 %3619
        %3621 = vrot.lane.b32.xlu0 %v2747, 125
        %v3622 = vpop.permute.xlu0 %3621
        %3623 = vrot.lane.b32.xlu0 %v2748, 125
        %v3624 = vpop.permute.xlu0 %3623
        %3625 = vrot.lane.b32.xlu0 %v2749, 125
        %v3626 = vpop.permute.xlu0 %3625
        %3627 = vrot.lane.b32.xlu0 %v2750, 125
        %v3628 = vpop.permute.xlu0 %3627
        %3629 = vrot.lane.b32.xlu0 %v2751, 125
        %v3630 = vpop.permute.xlu0 %3629
        %3631 = vrot.lane.b32.xlu0 %v2752, 125
        %v3632 = vpop.permute.xlu0 %3631
        %3633 = vrot.lane.b32.xlu0 %v2753, 125
        %v3634 = vpop.permute.xlu0 %3633
        %3635 = vrot.lane.b32.xlu0 %v2754, 125
        %v3636 = vpop.permute.xlu0 %3635
        %v3648 = vsel %vm2839, %v3595, 0
        %v3651 = vsel %vm2839, %v3596, 0
        %v3654 = vsel %vm2839, %v3597, 0
        %v3657 = vsel %vm2839, %v3598, 0
        %v3660 = vsel %vm2839, %v3599, 0
        %v3663 = vsel %vm2839, %v3600, 0
        %v3666 = vsel %vm2839, %v3601, 0
        %v3669 = vsel %vm2839, %v3602, 0
        %v3672 = vsel %vm2839, %v3603, 0
        %v3675 = vsel %vm2839, %v3604, 0
        %v3678 = vsel %vm2839, %v3605, 0
        %v3681 = vsel %vm2839, %v3606, 0
        %v3684 = vsel %vm2839, %v3607, 0
        %v3687 = vsel %vm2839, %v3608, 0
        %v3690 = vsel %vm2839, %v3609, 0
        %v3693 = vsel %vm2839, %v3610, 0
        %v3696 = vsel %vm2839, %v3611, 0
        %v3699 = vsel %vm2839, %v3612, 0
        %v3702 = vsel %vm2839, %v3613, 0
        %v3705 = vsel %vm2839, %v3614, 0
        %v3707 = vsel %vm650, %v3636, 0
        %3709 = vmatprep.subr.mxu0 0.0
        %3710 = vmatpush1.msra.mxu0 0.0
        %3711 = vmatprep.subr.mxu0 0.0
        %3712 = vmatpush1.msra.mxu0 0.0
        %3713 = vmatprep.subr.mxu0 0.0
        %3714 = vmatpush1.msra.mxu0 0.0
        %3715 = vmatprep.subr.mxu0 0.0
        %3716 = vmatpush1.msra.mxu0 0.0
        %3717 = vmatprep.subr.mxu0 0.0
        %3718 = vmatpush1.msra.mxu0 0.0
        %3719 = vmatprep.subr.mxu0 0.0
        %3720 = vmatpush1.msra.mxu0 %v3707
        %3721 = vmatprep.subr.mxu0 0.0
        %3722 = vmatpush1.msra.mxu0 %v3634
        %3723 = vmatprep.subr.mxu0 0.0
        %3724 = vmatpush1.msra.mxu0 %v3632
        %3725 = vmatprep.subr.mxu0 0.0
        %3726 = vmatpush1.msra.mxu0 %v3630
        %3727 = vmatprep.subr.mxu0 0.0
        %3728 = vmatpush1.msra.mxu0 %v3628
        %3729 = vmatprep.subr.mxu0 0.0
        %3730 = vmatpush1.msra.mxu0 %v3626
        %3731 = vmatprep.subr.mxu0 0.0
        %3732 = vmatpush1.msra.mxu0 %v3624
        %3733 = vmatprep.subr.mxu0 0.0
        %3734 = vmatpush1.msra.mxu0 %v3622
        %3735 = vmatprep.subr.mxu0 0.0
        %3736 = vmatpush1.msra.mxu0 %v3620
        %3737 = vmatprep.subr.mxu0 0.0
        %3738 = vmatpush1.msra.mxu0 %v3618
        %3739 = vmatprep.subr.mxu0 0.0
        %3740 = vmatpush1.msra.mxu0 %v3616
        %3741 = vmatprep.subr.mxu0 0.0
        %3742 = vmatpush2.msra.mxu0 0.0
        %3743 = vmatprep.subr.mxu0 0.0
        %3744 = vmatpush2.msra.mxu0 0.0
        %3745 = vmatprep.subr.mxu0 0.0
        %3746 = vmatpush2.msra.mxu0 0.0
        %3747 = vmatprep.subr.mxu0 0.0
        %3748 = vmatpush2.msra.mxu0 0.0
        %3749 = vmatprep.subr.mxu0 0.0
        %3750 = vmatpush2.msra.mxu0 0.0
        %3751 = vmatprep.subr.mxu0 0.0
        %3752 = vmatpush2.msra.mxu0 0.0
        %3753 = vmatprep.subr.mxu0 0.0
        %3754 = vmatpush2.msra.mxu0 0.0
        %3755 = vmatprep.subr.mxu0 0.0
        %3756 = vmatpush2.msra.mxu0 0.0
        %3757 = vmatprep.subr.mxu0 0.0
        %3758 = vmatpush2.msra.mxu0 0.0
        %3759 = vmatprep.subr.mxu0 0.0
        %3760 = vmatpush2.msra.mxu0 0.0
        %3761 = vmatprep.subr.mxu0 0.0
        %3762 = vmatpush2.msra.mxu0 0.0
        %3763 = vmatprep.subr.mxu0 0.0
        %3764 = vmatpush2.msra.mxu0 0.0
        %3765 = vmatprep.subr.mxu0 0.0
        %3766 = vmatpush2.msra.mxu0 0.0
        %3767 = vmatprep.subr.mxu0 0.0
        %3768 = vmatpush2.msra.mxu0 0.0
        %3769 = vmatprep.subr.mxu0 0.0
        %3770 = vmatpush2.msra.mxu0 0.0
        %3771 = vmatprep.subr.mxu0 0.0
        %3772 = vmatpush2.msra.mxu0 0.0
        %3773 = vmatprep.mubr.f32.mxu0 0.0
        %3774 = vmatmul.mubr.f32.gmra.mxu0 %v3648
        %v3775 = vpop.f32.mrf.mxu0
        %v3776 = vadd.f32 0.0, %v3775
        %v3777 = vpop.f32.mrf.mxu0
        %3778 = vmatprep.mubr.f32.mxu0 0.0
        %3779 = vmatmul.mubr.f32.gmra.mxu0 %v3651
        %v3780 = vpop.f32.mrf.mxu0
        %v3781 = vadd.f32 0.0, %v3780
        %v3782 = vpop.f32.mrf.mxu0
        %3783 = vmatprep.mubr.f32.mxu0 0.0
        %3784 = vmatmul.mubr.f32.gmra.mxu0 %v3654
        %v3785 = vpop.f32.mrf.mxu0
        %v3786 = vadd.f32 0.0, %v3785
        %v3787 = vpop.f32.mrf.mxu0
        %3788 = vmatprep.mubr.f32.mxu0 0.0
        %3789 = vmatmul.mubr.f32.gmra.mxu0 %v3657
        %v3790 = vpop.f32.mrf.mxu0
        %v3791 = vadd.f32 0.0, %v3790
        %v3792 = vpop.f32.mrf.mxu0
        %3793 = vmatprep.mubr.f32.mxu0 0.0
        %3794 = vmatmul.mubr.f32.gmra.mxu0 %v3660
        %v3795 = vpop.f32.mrf.mxu0
        %v3796 = vadd.f32 0.0, %v3795
        %v3797 = vpop.f32.mrf.mxu0
        %3798 = vmatprep.mubr.f32.mxu0 0.0
        %3799 = vmatmul.mubr.f32.gmra.mxu0 %v3663
        %v3800 = vpop.f32.mrf.mxu0
        %v3801 = vadd.f32 0.0, %v3800
        %v3802 = vpop.f32.mrf.mxu0
        %3803 = vmatprep.mubr.f32.mxu0 0.0
        %3804 = vmatmul.mubr.f32.gmra.mxu0 %v3666
        %v3805 = vpop.f32.mrf.mxu0
        %v3806 = vadd.f32 0.0, %v3805
        %v3807 = vpop.f32.mrf.mxu0
        %3808 = vmatprep.mubr.f32.mxu0 0.0
        %3809 = vmatmul.mubr.f32.gmra.mxu0 %v3669
        %v3810 = vpop.f32.mrf.mxu0
        %v3811 = vadd.f32 0.0, %v3810
        %v3812 = vpop.f32.mrf.mxu0
        %3813 = vmatprep.mubr.f32.mxu0 0.0
        %3814 = vmatmul.mubr.f32.gmra.mxu0 %v3672
        %v3815 = vpop.f32.mrf.mxu0
        %v3816 = vadd.f32 0.0, %v3815
        %v3817 = vpop.f32.mrf.mxu0
        %3818 = vmatprep.mubr.f32.mxu0 0.0
        %3819 = vmatmul.mubr.f32.gmra.mxu0 %v3675
        %v3820 = vpop.f32.mrf.mxu0
        %v3821 = vadd.f32 0.0, %v3820
        %v3822 = vpop.f32.mrf.mxu0
        %3823 = vmatprep.mubr.f32.mxu0 0.0
        %3824 = vmatmul.mubr.f32.gmra.mxu0 %v3678
        %v3825 = vpop.f32.mrf.mxu0
        %v3826 = vadd.f32 0.0, %v3825
        %v3827 = vpop.f32.mrf.mxu0
        %3828 = vmatprep.mubr.f32.mxu0 0.0
        %3829 = vmatmul.mubr.f32.gmra.mxu0 %v3681
        %v3830 = vpop.f32.mrf.mxu0
        %v3831 = vadd.f32 0.0, %v3830
        %v3832 = vpop.f32.mrf.mxu0
        %3833 = vmatprep.mubr.f32.mxu0 0.0
        %3834 = vmatmul.mubr.f32.gmra.mxu0 %v3684
        %v3835 = vpop.f32.mrf.mxu0
        %v3836 = vadd.f32 0.0, %v3835
        %v3837 = vpop.f32.mrf.mxu0
        %3838 = vmatprep.mubr.f32.mxu0 0.0
        %3839 = vmatmul.mubr.f32.gmra.mxu0 %v3687
        %v3840 = vpop.f32.mrf.mxu0
        %v3841 = vadd.f32 0.0, %v3840
        %v3842 = vpop.f32.mrf.mxu0
        %3843 = vmatprep.mubr.f32.mxu0 0.0
        %3844 = vmatmul.mubr.f32.gmra.mxu0 %v3690
        %v3845 = vpop.f32.mrf.mxu0
        %v3846 = vadd.f32 0.0, %v3845
        %v3847 = vpop.f32.mrf.mxu0
        %3848 = vmatprep.mubr.f32.mxu0 0.0
        %3849 = vmatmul.mubr.f32.gmra.mxu0 %v3693
        %v3850 = vpop.f32.mrf.mxu0
        %v3851 = vadd.f32 0.0, %v3850
        %v3852 = vpop.f32.mrf.mxu0
        %3853 = vmatprep.mubr.f32.mxu0 0.0
        %3854 = vmatmul.mubr.f32.gmra.mxu0 %v3696
        %v3855 = vpop.f32.mrf.mxu0
        %v3856 = vadd.f32 0.0, %v3855
        %v3857 = vpop.f32.mrf.mxu0
        %3858 = vmatprep.mubr.f32.mxu0 0.0
        %3859 = vmatmul.mubr.f32.gmra.mxu0 %v3699
        %v3860 = vpop.f32.mrf.mxu0
        %v3861 = vadd.f32 0.0, %v3860
        %v3862 = vpop.f32.mrf.mxu0
        %3863 = vmatprep.mubr.f32.mxu0 0.0
        %3864 = vmatmul.mubr.f32.gmra.mxu0 %v3702
        %v3865 = vpop.f32.mrf.mxu0
        %v3866 = vadd.f32 0.0, %v3865
        %v3867 = vpop.f32.mrf.mxu0
        %3868 = vmatprep.mubr.f32.mxu0 0.0
        %3869 = vmatmul.mubr.f32.gmra.mxu0 %v3705
        %v3870 = vpop.f32.mrf.mxu0
        %v3871 = vadd.f32 0.0, %v3870
        %v3872 = vpop.f32.mrf.mxu0
        %3873 = vdwg.mxu0
        %v3874 = vadd.f32 %v3574, %v3776
        %v3875 = vadd.f32 %v3575, %v3781
        %v3876 = vadd.f32 %v3576, %v3786
        %v3877 = vadd.f32 %v3577, %v3791
        %v3878 = vadd.f32 %v3578, %v3796
        %v3879 = vadd.f32 %v3579, %v3801
        %v3880 = vadd.f32 %v3580, %v3806
        %v3881 = vadd.f32 %v3581, %v3811
        %v3882 = vadd.f32 %v3582, %v3816
        %v3883 = vadd.f32 %v3583, %v3821
        %v3884 = vadd.f32 %v3584, %v3826
        %v3885 = vadd.f32 %v3585, %v3831
        %v3886 = vadd.f32 %v3586, %v3836
        %v3887 = vadd.f32 %v3587, %v3841
        %v3888 = vadd.f32 %v3588, %v3846
        %v3889 = vadd.f32 %v3589, %v3851
        %v3890 = vadd.f32 %v3590, %v3856
        %v3891 = vadd.f32 %v3591, %v3861
        %v3892 = vadd.f32 %v3592, %v3866
        %v3893 = vadd.f32 %v3593, %v3871
        %s3894 = scalar_lea.vmem %s5, 640
        %v3895 = vld [vmem:[%s3894] sm:$0xff]
        %v3896 = vld [vmem:[%s3894 + $0x8] sm:$0xff]
        %v3897 = vld [vmem:[%s3894 + $0x10] sm:$0xff]
        %v3898 = vld [vmem:[%s3894 + $0x18] sm:$0xff]
        %v3899 = vld [vmem:[%s3894 + $0x20] sm:$0xff]
        %v3900 = vld [vmem:[%s3894 + $0x28] sm:$0xff]
        %v3901 = vld [vmem:[%s3894 + $0x30] sm:$0xff]
        %v3902 = vld [vmem:[%s3894 + $0x38] sm:$0xff]
        %v3903 = vld [vmem:[%s3894 + $0x40] sm:$0xff]
        %v3904 = vld [vmem:[%s3894 + $0x48] sm:$0xff]
        %v3905 = vld [vmem:[%s3894 + $0x50] sm:$0xff]
        %v3906 = vld [vmem:[%s3894 + $0x58] sm:$0xff]
        %v3907 = vld [vmem:[%s3894 + $0x60] sm:$0xff]
        %v3908 = vld [vmem:[%s3894 + $0x68] sm:$0xff]
        %v3909 = vld [vmem:[%s3894 + $0x70] sm:$0xff]
        %v3910 = vld [vmem:[%s3894 + $0x78] sm:$0xff]
        %v3911 = vld [vmem:[%s3894 + $0x80] sm:$0xff]
        %v3912 = vld [vmem:[%s3894 + $0x88] sm:$0xff]
        %v3913 = vld [vmem:[%s3894 + $0x90] sm:$0xff]
        %v3914 = vld [vmem:[%s3894 + $0x98] sm:$0xff]
        %3915 = vrot.lane.b32.xlu0 %v2744, 124
        %v3916 = vpop.permute.xlu0 %3915
        %3917 = vrot.lane.b32.xlu0 %v2745, 124
        %v3918 = vpop.permute.xlu0 %3917
        %3919 = vrot.lane.b32.xlu0 %v2746, 124
        %v3920 = vpop.permute.xlu0 %3919
        %3921 = vrot.lane.b32.xlu0 %v2747, 124
        %v3922 = vpop.permute.xlu0 %3921
        %3923 = vrot.lane.b32.xlu0 %v2748, 124
        %v3924 = vpop.permute.xlu0 %3923
        %3925 = vrot.lane.b32.xlu0 %v2749, 124
        %v3926 = vpop.permute.xlu0 %3925
        %3927 = vrot.lane.b32.xlu0 %v2750, 124
        %v3928 = vpop.permute.xlu0 %3927
        %3929 = vrot.lane.b32.xlu0 %v2751, 124
        %v3930 = vpop.permute.xlu0 %3929
        %3931 = vrot.lane.b32.xlu0 %v2752, 124
        %v3932 = vpop.permute.xlu0 %3931
        %3933 = vrot.lane.b32.xlu0 %v2753, 124
        %v3934 = vpop.permute.xlu0 %3933
        %3935 = vrot.lane.b32.xlu0 %v2754, 124
        %v3936 = vpop.permute.xlu0 %3935
        %v3948 = vsel %vm2839, %v3895, 0
        %v3951 = vsel %vm2839, %v3896, 0
        %v3954 = vsel %vm2839, %v3897, 0
        %v3957 = vsel %vm2839, %v3898, 0
        %v3960 = vsel %vm2839, %v3899, 0
        %v3963 = vsel %vm2839, %v3900, 0
        %v3966 = vsel %vm2839, %v3901, 0
        %v3969 = vsel %vm2839, %v3902, 0
        %v3972 = vsel %vm2839, %v3903, 0
        %v3975 = vsel %vm2839, %v3904, 0
        %v3978 = vsel %vm2839, %v3905, 0
        %v3981 = vsel %vm2839, %v3906, 0
        %v3984 = vsel %vm2839, %v3907, 0
        %v3987 = vsel %vm2839, %v3908, 0
        %v3990 = vsel %vm2839, %v3909, 0
        %v3993 = vsel %vm2839, %v3910, 0
        %v3996 = vsel %vm2839, %v3911, 0
        %v3999 = vsel %vm2839, %v3912, 0
        %v4002 = vsel %vm2839, %v3913, 0
        %v4005 = vsel %vm2839, %v3914, 0
        %v4007 = vsel %vm650, %v3936, 0
        %4009 = vmatprep.subr.mxu0 0.0
        %4010 = vmatpush1.msra.mxu0 0.0
        %4011 = vmatprep.subr.mxu0 0.0
        %4012 = vmatpush1.msra.mxu0 0.0
        %4013 = vmatprep.subr.mxu0 0.0
        %4014 = vmatpush1.msra.mxu0 0.0
        %4015 = vmatprep.subr.mxu0 0.0
        %4016 = vmatpush1.msra.mxu0 0.0
        %4017 = vmatprep.subr.mxu0 0.0
        %4018 = vmatpush1.msra.mxu0 0.0
        %4019 = vmatprep.subr.mxu0 0.0
        %4020 = vmatpush1.msra.mxu0 %v4007
        %4021 = vmatprep.subr.mxu0 0.0
        %4022 = vmatpush1.msra.mxu0 %v3934
        %4023 = vmatprep.subr.mxu0 0.0
        %4024 = vmatpush1.msra.mxu0 %v3932
        %4025 = vmatprep.subr.mxu0 0.0
        %4026 = vmatpush1.msra.mxu0 %v3930
        %4027 = vmatprep.subr.mxu0 0.0
        %4028 = vmatpush1.msra.mxu0 %v3928
        %4029 = vmatprep.subr.mxu0 0.0
        %4030 = vmatpush1.msra.mxu0 %v3926
        %4031 = vmatprep.subr.mxu0 0.0
        %4032 = vmatpush1.msra.mxu0 %v3924
        %4033 = vmatprep.subr.mxu0 0.0
        %4034 = vmatpush1.msra.mxu0 %v3922
        %4035 = vmatprep.subr.mxu0 0.0
        %4036 = vmatpush1.msra.mxu0 %v3920
        %4037 = vmatprep.subr.mxu0 0.0
        %4038 = vmatpush1.msra.mxu0 %v3918
        %4039 = vmatprep.subr.mxu0 0.0
        %4040 = vmatpush1.msra.mxu0 %v3916
        %4041 = vmatprep.subr.mxu0 0.0
        %4042 = vmatpush2.msra.mxu0 0.0
        %4043 = vmatprep.subr.mxu0 0.0
        %4044 = vmatpush2.msra.mxu0 0.0
        %4045 = vmatprep.subr.mxu0 0.0
        %4046 = vmatpush2.msra.mxu0 0.0
        %4047 = vmatprep.subr.mxu0 0.0
        %4048 = vmatpush2.msra.mxu0 0.0
        %4049 = vmatprep.subr.mxu0 0.0
        %4050 = vmatpush2.msra.mxu0 0.0
        %4051 = vmatprep.subr.mxu0 0.0
        %4052 = vmatpush2.msra.mxu0 0.0
        %4053 = vmatprep.subr.mxu0 0.0
        %4054 = vmatpush2.msra.mxu0 0.0
        %4055 = vmatprep.subr.mxu0 0.0
        %4056 = vmatpush2.msra.mxu0 0.0
        %4057 = vmatprep.subr.mxu0 0.0
        %4058 = vmatpush2.msra.mxu0 0.0
        %4059 = vmatprep.subr.mxu0 0.0
        %4060 = vmatpush2.msra.mxu0 0.0
        %4061 = vmatprep.subr.mxu0 0.0
        %4062 = vmatpush2.msra.mxu0 0.0
        %4063 = vmatprep.subr.mxu0 0.0
        %4064 = vmatpush2.msra.mxu0 0.0
        %4065 = vmatprep.subr.mxu0 0.0
        %4066 = vmatpush2.msra.mxu0 0.0
        %4067 = vmatprep.subr.mxu0 0.0
        %4068 = vmatpush2.msra.mxu0 0.0
        %4069 = vmatprep.subr.mxu0 0.0
        %4070 = vmatpush2.msra.mxu0 0.0
        %4071 = vmatprep.subr.mxu0 0.0
        %4072 = vmatpush2.msra.mxu0 0.0
        %4073 = vmatprep.mubr.f32.mxu0 0.0
        %4074 = vmatmul.mubr.f32.gmra.mxu0 %v3948
        %v4075 = vpop.f32.mrf.mxu0
        %v4076 = vadd.f32 0.0, %v4075
        %v4077 = vpop.f32.mrf.mxu0
        %4078 = vmatprep.mubr.f32.mxu0 0.0
        %4079 = vmatmul.mubr.f32.gmra.mxu0 %v3951
        %v4080 = vpop.f32.mrf.mxu0
        %v4081 = vadd.f32 0.0, %v4080
        %v4082 = vpop.f32.mrf.mxu0
        %4083 = vmatprep.mubr.f32.mxu0 0.0
        %4084 = vmatmul.mubr.f32.gmra.mxu0 %v3954
        %v4085 = vpop.f32.mrf.mxu0
        %v4086 = vadd.f32 0.0, %v4085
        %v4087 = vpop.f32.mrf.mxu0
        %4088 = vmatprep.mubr.f32.mxu0 0.0
        %4089 = vmatmul.mubr.f32.gmra.mxu0 %v3957
        %v4090 = vpop.f32.mrf.mxu0
        %v4091 = vadd.f32 0.0, %v4090
        %v4092 = vpop.f32.mrf.mxu0
        %4093 = vmatprep.mubr.f32.mxu0 0.0
        %4094 = vmatmul.mubr.f32.gmra.mxu0 %v3960
        %v4095 = vpop.f32.mrf.mxu0
        %v4096 = vadd.f32 0.0, %v4095
        %v4097 = vpop.f32.mrf.mxu0
        %4098 = vmatprep.mubr.f32.mxu0 0.0
        %4099 = vmatmul.mubr.f32.gmra.mxu0 %v3963
        %v4100 = vpop.f32.mrf.mxu0
        %v4101 = vadd.f32 0.0, %v4100
        %v4102 = vpop.f32.mrf.mxu0
        %4103 = vmatprep.mubr.f32.mxu0 0.0
        %4104 = vmatmul.mubr.f32.gmra.mxu0 %v3966
        %v4105 = vpop.f32.mrf.mxu0
        %v4106 = vadd.f32 0.0, %v4105
        %v4107 = vpop.f32.mrf.mxu0
        %4108 = vmatprep.mubr.f32.mxu0 0.0
        %4109 = vmatmul.mubr.f32.gmra.mxu0 %v3969
        %v4110 = vpop.f32.mrf.mxu0
        %v4111 = vadd.f32 0.0, %v4110
        %v4112 = vpop.f32.mrf.mxu0
        %4113 = vmatprep.mubr.f32.mxu0 0.0
        %4114 = vmatmul.mubr.f32.gmra.mxu0 %v3972
        %v4115 = vpop.f32.mrf.mxu0
        %v4116 = vadd.f32 0.0, %v4115
        %v4117 = vpop.f32.mrf.mxu0
        %4118 = vmatprep.mubr.f32.mxu0 0.0
        %4119 = vmatmul.mubr.f32.gmra.mxu0 %v3975
        %v4120 = vpop.f32.mrf.mxu0
        %v4121 = vadd.f32 0.0, %v4120
        %v4122 = vpop.f32.mrf.mxu0
        %4123 = vmatprep.mubr.f32.mxu0 0.0
        %4124 = vmatmul.mubr.f32.gmra.mxu0 %v3978
        %v4125 = vpop.f32.mrf.mxu0
        %v4126 = vadd.f32 0.0, %v4125
        %v4127 = vpop.f32.mrf.mxu0
        %4128 = vmatprep.mubr.f32.mxu0 0.0
        %4129 = vmatmul.mubr.f32.gmra.mxu0 %v3981
        %v4130 = vpop.f32.mrf.mxu0
        %v4131 = vadd.f32 0.0, %v4130
        %v4132 = vpop.f32.mrf.mxu0
        %4133 = vmatprep.mubr.f32.mxu0 0.0
        %4134 = vmatmul.mubr.f32.gmra.mxu0 %v3984
        %v4135 = vpop.f32.mrf.mxu0
        %v4136 = vadd.f32 0.0, %v4135
        %v4137 = vpop.f32.mrf.mxu0
        %4138 = vmatprep.mubr.f32.mxu0 0.0
        %4139 = vmatmul.mubr.f32.gmra.mxu0 %v3987
        %v4140 = vpop.f32.mrf.mxu0
        %v4141 = vadd.f32 0.0, %v4140
        %v4142 = vpop.f32.mrf.mxu0
        %4143 = vmatprep.mubr.f32.mxu0 0.0
        %4144 = vmatmul.mubr.f32.gmra.mxu0 %v3990
        %v4145 = vpop.f32.mrf.mxu0
        %v4146 = vadd.f32 0.0, %v4145
        %v4147 = vpop.f32.mrf.mxu0
        %4148 = vmatprep.mubr.f32.mxu0 0.0
        %4149 = vmatmul.mubr.f32.gmra.mxu0 %v3993
        %v4150 = vpop.f32.mrf.mxu0
        %v4151 = vadd.f32 0.0, %v4150
        %v4152 = vpop.f32.mrf.mxu0
        %4153 = vmatprep.mubr.f32.mxu0 0.0
        %4154 = vmatmul.mubr.f32.gmra.mxu0 %v3996
        %v4155 = vpop.f32.mrf.mxu0
        %v4156 = vadd.f32 0.0, %v4155
        %v4157 = vpop.f32.mrf.mxu0
        %4158 = vmatprep.mubr.f32.mxu0 0.0
        %4159 = vmatmul.mubr.f32.gmra.mxu0 %v3999
        %v4160 = vpop.f32.mrf.mxu0
        %v4161 = vadd.f32 0.0, %v4160
        %v4162 = vpop.f32.mrf.mxu0
        %4163 = vmatprep.mubr.f32.mxu0 0.0
        %4164 = vmatmul.mubr.f32.gmra.mxu0 %v4002
        %v4165 = vpop.f32.mrf.mxu0
        %v4166 = vadd.f32 0.0, %v4165
        %v4167 = vpop.f32.mrf.mxu0
        %4168 = vmatprep.mubr.f32.mxu0 0.0
        %4169 = vmatmul.mubr.f32.gmra.mxu0 %v4005
        %v4170 = vpop.f32.mrf.mxu0
        %v4171 = vadd.f32 0.0, %v4170
        %v4172 = vpop.f32.mrf.mxu0
        %4173 = vdwg.mxu0
        %v4174 = vadd.f32 %v3874, %v4076
        %v4175 = vadd.f32 %v3875, %v4081
        %v4176 = vadd.f32 %v3876, %v4086
        %v4177 = vadd.f32 %v3877, %v4091
        %v4178 = vadd.f32 %v3878, %v4096
        %v4179 = vadd.f32 %v3879, %v4101
        %v4180 = vadd.f32 %v3880, %v4106
        %v4181 = vadd.f32 %v3881, %v4111
        %v4182 = vadd.f32 %v3882, %v4116
        %v4183 = vadd.f32 %v3883, %v4121
        %v4184 = vadd.f32 %v3884, %v4126
        %v4185 = vadd.f32 %v3885, %v4131
        %v4186 = vadd.f32 %v3886, %v4136
        %v4187 = vadd.f32 %v3887, %v4141
        %v4188 = vadd.f32 %v3888, %v4146
        %v4189 = vadd.f32 %v3889, %v4151
        %v4190 = vadd.f32 %v3890, %v4156
        %v4191 = vadd.f32 %v3891, %v4161
        %v4192 = vadd.f32 %v3892, %v4166
        %v4193 = vadd.f32 %v3893, %v4171
        %v4194 = vld [vmem:[%s6] sm:$0xff]
        %v4195 = vld [vmem:[%s6 + $0x8] sm:$0xff]
        %v4196 = vld [vmem:[%s6 + $0x10] sm:$0xff]
        %v4197 = vld [vmem:[%s6 + $0x18] sm:$0xff]
        %v4198 = vld [vmem:[%s6 + $0x20] sm:$0xff]
        %v4199 = vld [vmem:[%s6 + $0x28] sm:$0xff]
        %v4200 = vld [vmem:[%s6 + $0x30] sm:$0xff]
        %v4201 = vld [vmem:[%s6 + $0x38] sm:$0xff]
        %v4202 = vld [vmem:[%s6 + $0x40] sm:$0xff]
        %v4203 = vld [vmem:[%s6 + $0x48] sm:$0xff]
        %v4204 = vld [vmem:[%s6 + $0x50] sm:$0xff]
        %v4205 = vld [vmem:[%s6 + $0x58] sm:$0xff]
        %v4206 = vld [vmem:[%s6 + $0x60] sm:$0xff]
        %v4207 = vld [vmem:[%s6 + $0x68] sm:$0xff]
        %v4208 = vld [vmem:[%s6 + $0x70] sm:$0xff]
        %v4209 = vld [vmem:[%s6 + $0x78] sm:$0xff]
        %v4210 = vld [vmem:[%s6 + $0x80] sm:$0xff]
        %v4211 = vld [vmem:[%s6 + $0x88] sm:$0xff]
        %v4212 = vld [vmem:[%s6 + $0x90] sm:$0xff]
        %v4213 = vld [vmem:[%s6 + $0x98] sm:$0xff]
        %4215 = vset.pattern.permute.xlu0 0
        %4216 = vperm.xlu0 %4215, %v4194
        %v4217 = vpop.permute.xlu0 %4216
        %4220 = vset.pattern.permute.xlu0 0
        %4221 = vperm.xlu0 %4220, %v4195
        %v4222 = vpop.permute.xlu0 %4221
        %4225 = vset.pattern.permute.xlu0 0
        %4226 = vperm.xlu0 %4225, %v4196
        %v4227 = vpop.permute.xlu0 %4226
        %4230 = vset.pattern.permute.xlu0 0
        %4231 = vperm.xlu0 %4230, %v4197
        %v4232 = vpop.permute.xlu0 %4231
        %4235 = vset.pattern.permute.xlu0 0
        %4236 = vperm.xlu0 %4235, %v4198
        %v4237 = vpop.permute.xlu0 %4236
        %4240 = vset.pattern.permute.xlu0 0
        %4241 = vperm.xlu0 %4240, %v4199
        %v4242 = vpop.permute.xlu0 %4241
        %4245 = vset.pattern.permute.xlu0 0
        %4246 = vperm.xlu0 %4245, %v4200
        %v4247 = vpop.permute.xlu0 %4246
        %4250 = vset.pattern.permute.xlu0 0
        %4251 = vperm.xlu0 %4250, %v4201
        %v4252 = vpop.permute.xlu0 %4251
        %4255 = vset.pattern.permute.xlu0 0
        %4256 = vperm.xlu0 %4255, %v4202
        %v4257 = vpop.permute.xlu0 %4256
        %4260 = vset.pattern.permute.xlu0 0
        %4261 = vperm.xlu0 %4260, %v4203
        %v4262 = vpop.permute.xlu0 %4261
        %4265 = vset.pattern.permute.xlu0 0
        %4266 = vperm.xlu0 %4265, %v4204
        %v4267 = vpop.permute.xlu0 %4266
        %4270 = vset.pattern.permute.xlu0 0
        %4271 = vperm.xlu0 %4270, %v4205
        %v4272 = vpop.permute.xlu0 %4271
        %4275 = vset.pattern.permute.xlu0 0
        %4276 = vperm.xlu0 %4275, %v4206
        %v4277 = vpop.permute.xlu0 %4276
        %4280 = vset.pattern.permute.xlu0 0
        %4281 = vperm.xlu0 %4280, %v4207
        %v4282 = vpop.permute.xlu0 %4281
        %4285 = vset.pattern.permute.xlu0 0
        %4286 = vperm.xlu0 %4285, %v4208
        %v4287 = vpop.permute.xlu0 %4286
        %4290 = vset.pattern.permute.xlu0 0
        %4291 = vperm.xlu0 %4290, %v4209
        %v4292 = vpop.permute.xlu0 %4291
        %4295 = vset.pattern.permute.xlu0 0
        %4296 = vperm.xlu0 %4295, %v4210
        %v4297 = vpop.permute.xlu0 %4296
        %4300 = vset.pattern.permute.xlu0 0
        %4301 = vperm.xlu0 %4300, %v4211
        %v4302 = vpop.permute.xlu0 %4301
        %4305 = vset.pattern.permute.xlu0 0
        %4306 = vperm.xlu0 %4305, %v4212
        %v4307 = vpop.permute.xlu0 %4306
        %4310 = vset.pattern.permute.xlu0 0
        %4311 = vperm.xlu0 %4310, %v4213
        %v4312 = vpop.permute.xlu0 %4311
        %v4314 = vadd.f32 %v4174, %v4217
        %v4315 = vadd.f32 %v4175, %v4222
        %v4316 = vadd.f32 %v4176, %v4227
        %v4317 = vadd.f32 %v4177, %v4232
        %v4318 = vadd.f32 %v4178, %v4237
        %v4319 = vadd.f32 %v4179, %v4242
        %v4320 = vadd.f32 %v4180, %v4247
        %v4321 = vadd.f32 %v4181, %v4252
        %v4322 = vadd.f32 %v4182, %v4257
        %v4323 = vadd.f32 %v4183, %v4262
        %v4324 = vadd.f32 %v4184, %v4267
        %v4325 = vadd.f32 %v4185, %v4272
        %v4326 = vadd.f32 %v4186, %v4277
        %v4327 = vadd.f32 %v4187, %v4282
        %v4328 = vadd.f32 %v4188, %v4287
        %v4329 = vadd.f32 %v4189, %v4292
        %v4330 = vadd.f32 %v4190, %v4297
        %v4331 = vadd.f32 %v4191, %v4302
        %v4332 = vadd.f32 %v4192, %v4307
        %v4333 = vadd.f32 %v4193, %v4312
        %v4334 = vmax.f32 %v4314, 0.0
        %v4335 = vmax.f32 %v4315, 0.0
        %v4336 = vmax.f32 %v4316, 0.0
        %v4337 = vmax.f32 %v4317, 0.0
        %v4338 = vmax.f32 %v4318, 0.0
        %v4339 = vmax.f32 %v4319, 0.0
        %v4340 = vmax.f32 %v4320, 0.0
        %v4341 = vmax.f32 %v4321, 0.0
        %v4342 = vmax.f32 %v4322, 0.0
        %v4343 = vmax.f32 %v4323, 0.0
        %v4344 = vmax.f32 %v4324, 0.0
        %v4345 = vmax.f32 %v4325, 0.0
        %v4346 = vmax.f32 %v4326, 0.0
        %v4347 = vmax.f32 %v4327, 0.0
        %v4348 = vmax.f32 %v4328, 0.0
        %v4349 = vmax.f32 %v4329, 0.0
        %v4350 = vmax.f32 %v4330, 0.0
        %v4351 = vmax.f32 %v4331, 0.0
        %v4352 = vmax.f32 %v4332, 0.0
        %v4353 = vmax.f32 %v4333, 0.0
        %v4354 = vld [vmem:[%s7] sm:$0xff]
        %v4355 = vld [vmem:[%s7 + $0x8] sm:$0xff]
        %v4356 = vld [vmem:[%s7 + $0x10] sm:$0xff]
        %v4357 = vld [vmem:[%s7 + $0x18] sm:$0xff]
        %v4358 = vld [vmem:[%s7 + $0x20] sm:$0xff]
        %v4359 = vld [vmem:[%s7 + $0x28] sm:$0xff]
        %v4360 = vld [vmem:[%s7 + $0x30] sm:$0xff]
        %v4361 = vld [vmem:[%s7 + $0x38] sm:$0xff]
        %v4362 = vld [vmem:[%s7 + $0x40] sm:$0xff]
        %v4363 = vld [vmem:[%s7 + $0x48] sm:$0xff]
        %v4364 = vld [vmem:[%s7 + $0x50] sm:$0xff]
        %v4365 = vld [vmem:[%s7 + $0x58] sm:$0xff]
        %v4366 = vld [vmem:[%s7 + $0x60] sm:$0xff]
        %v4367 = vld [vmem:[%s7 + $0x68] sm:$0xff]
        %v4368 = vld [vmem:[%s7 + $0x70] sm:$0xff]
        %v4369 = vld [vmem:[%s7 + $0x78] sm:$0xff]
        %v4370 = vld [vmem:[%s7 + $0x80] sm:$0xff]
        %v4371 = vld [vmem:[%s7 + $0x88] sm:$0xff]
        %v4372 = vld [vmem:[%s7 + $0x90] sm:$0xff]
        %v4373 = vld [vmem:[%s7 + $0x98] sm:$0xff]
        %v4375 = vsel %vm492, %v4355, 0
        %v4378 = vsel %vm492, %v4357, 0
        %v4381 = vsel %vm492, %v4359, 0
        %v4384 = vsel %vm492, %v4361, 0
        %v4387 = vsel %vm492, %v4363, 0
        %v4390 = vsel %vm492, %v4365, 0
        %v4393 = vsel %vm492, %v4367, 0
        %v4396 = vsel %vm492, %v4369, 0
        %v4399 = vsel %vm492, %v4371, 0
        %v4402 = vsel %vm492, %v4373, 0
        %4404 = vmatprep.subr.mxu0 0.0
        %4405 = vmatpush1.msra.mxu0 %v4349
        %4406 = vmatprep.subr.mxu0 0.0
        %4407 = vmatpush1.msra.mxu0 %v4348
        %4408 = vmatprep.subr.mxu0 0.0
        %4409 = vmatpush1.msra.mxu0 %v4347
        %4410 = vmatprep.subr.mxu0 0.0
        %4411 = vmatpush1.msra.mxu0 %v4346
        %4412 = vmatprep.subr.mxu0 0.0
        %4413 = vmatpush1.msra.mxu0 %v4345
        %4414 = vmatprep.subr.mxu0 0.0
        %4415 = vmatpush1.msra.mxu0 %v4344
        %4416 = vmatprep.subr.mxu0 0.0
        %4417 = vmatpush1.msra.mxu0 %v4343
        %4418 = vmatprep.subr.mxu0 0.0
        %4419 = vmatpush1.msra.mxu0 %v4342
        %4420 = vmatprep.subr.mxu0 0.0
        %4421 = vmatpush1.msra.mxu0 %v4341
        %4422 = vmatprep.subr.mxu0 0.0
        %4423 = vmatpush1.msra.mxu0 %v4340
        %4424 = vmatprep.subr.mxu0 0.0
        %4425 = vmatpush1.msra.mxu0 %v4339
        %4426 = vmatprep.subr.mxu0 0.0
        %4427 = vmatpush1.msra.mxu0 %v4338
        %4428 = vmatprep.subr.mxu0 0.0
        %4429 = vmatpush1.msra.mxu0 %v4337
        %4430 = vmatprep.subr.mxu0 0.0
        %4431 = vmatpush1.msra.mxu0 %v4336
        %4432 = vmatprep.subr.mxu0 0.0
        %4433 = vmatpush1.msra.mxu0 %v4335
        %4434 = vmatprep.subr.mxu0 0.0
        %4435 = vmatpush1.msra.mxu0 %v4334
        %4436 = vmatprep.subr.mxu0 0.0
        %4437 = vmatpush2.msra.mxu0 0.0
        %4438 = vmatprep.subr.mxu0 0.0
        %4439 = vmatpush2.msra.mxu0 0.0
        %4440 = vmatprep.subr.mxu0 0.0
        %4441 = vmatpush2.msra.mxu0 0.0
        %4442 = vmatprep.subr.mxu0 0.0
        %4443 = vmatpush2.msra.mxu0 0.0
        %4444 = vmatprep.subr.mxu0 0.0
        %4445 = vmatpush2.msra.mxu0 0.0
        %4446 = vmatprep.subr.mxu0 0.0
        %4447 = vmatpush2.msra.mxu0 0.0
        %4448 = vmatprep.subr.mxu0 0.0
        %4449 = vmatpush2.msra.mxu0 0.0
        %4450 = vmatprep.subr.mxu0 0.0
        %4451 = vmatpush2.msra.mxu0 0.0
        %4452 = vmatprep.subr.mxu0 0.0
        %4453 = vmatpush2.msra.mxu0 0.0
        %4454 = vmatprep.subr.mxu0 0.0
        %4455 = vmatpush2.msra.mxu0 0.0
        %4456 = vmatprep.subr.mxu0 0.0
        %4457 = vmatpush2.msra.mxu0 0.0
        %4458 = vmatprep.subr.mxu0 0.0
        %4459 = vmatpush2.msra.mxu0 0.0
        %4460 = vmatprep.subr.mxu0 0.0
        %4461 = vmatpush2.msra.mxu0 %v4353
        %4462 = vmatprep.subr.mxu0 0.0
        %4463 = vmatpush2.msra.mxu0 %v4352
        %4464 = vmatprep.subr.mxu0 0.0
        %4465 = vmatpush2.msra.mxu0 %v4351
        %4466 = vmatprep.subr.mxu0 0.0
        %4467 = vmatpush2.msra.mxu0 %v4350
        %4468 = vmatprep.mubr.f32.mxu0 %v4375
        %4469 = vmatmul.mubr.f32.gmra.mxu0 %v4354
        %v4470 = vpop.f32.mrf.mxu0
        %v4471 = vadd.f32 0.0, %v4470
        %v4472 = vpop.f32.mrf.mxu0
        %4473 = vmatprep.mubr.f32.mxu0 %v4378
        %4474 = vmatmul.mubr.f32.gmra.mxu0 %v4356
        %v4475 = vpop.f32.mrf.mxu0
        %v4476 = vadd.f32 0.0, %v4475
        %v4477 = vpop.f32.mrf.mxu0
        %4478 = vmatprep.mubr.f32.mxu0 %v4381
        %4479 = vmatmul.mubr.f32.gmra.mxu0 %v4358
        %v4480 = vpop.f32.mrf.mxu0
        %v4481 = vadd.f32 0.0, %v4480
        %v4482 = vpop.f32.mrf.mxu0
        %4483 = vmatprep.mubr.f32.mxu0 %v4384
        %4484 = vmatmul.mubr.f32.gmra.mxu0 %v4360
        %v4485 = vpop.f32.mrf.mxu0
        %v4486 = vadd.f32 0.0, %v4485
        %v4487 = vpop.f32.mrf.mxu0
        %4488 = vmatprep.mubr.f32.mxu0 %v4387
        %4489 = vmatmul.mubr.f32.gmra.mxu0 %v4362
        %v4490 = vpop.f32.mrf.mxu0
        %v4491 = vadd.f32 0.0, %v4490
        %v4492 = vpop.f32.mrf.mxu0
        %4493 = vmatprep.mubr.f32.mxu0 %v4390
        %4494 = vmatmul.mubr.f32.gmra.mxu0 %v4364
        %v4495 = vpop.f32.mrf.mxu0
        %v4496 = vadd.f32 0.0, %v4495
        %v4497 = vpop.f32.mrf.mxu0
        %4498 = vmatprep.mubr.f32.mxu0 %v4393
        %4499 = vmatmul.mubr.f32.gmra.mxu0 %v4366
        %v4500 = vpop.f32.mrf.mxu0
        %v4501 = vadd.f32 0.0, %v4500
        %v4502 = vpop.f32.mrf.mxu0
        %4503 = vmatprep.mubr.f32.mxu0 %v4396
        %4504 = vmatmul.mubr.f32.gmra.mxu0 %v4368
        %v4505 = vpop.f32.mrf.mxu0
        %v4506 = vadd.f32 0.0, %v4505
        %v4507 = vpop.f32.mrf.mxu0
        %4508 = vmatprep.mubr.f32.mxu0 %v4399
        %4509 = vmatmul.mubr.f32.gmra.mxu0 %v4370
        %v4510 = vpop.f32.mrf.mxu0
        %v4511 = vadd.f32 0.0, %v4510
        %v4512 = vpop.f32.mrf.mxu0
        %4513 = vmatprep.mubr.f32.mxu0 %v4402
        %4514 = vmatmul.mubr.f32.gmra.mxu0 %v4372
        %v4515 = vpop.f32.mrf.mxu0
        %v4516 = vadd.f32 0.0, %v4515
        %v4517 = vpop.f32.mrf.mxu0
        %4518 = vdwg.mxu0
        %s4519 = scalar_lea.vmem %s7, 160
        %v4520 = vld [vmem:[%s4519] sm:$0xff]
        %v4521 = vld [vmem:[%s4519 + $0x8] sm:$0xff]
        %v4522 = vld [vmem:[%s4519 + $0x10] sm:$0xff]
        %v4523 = vld [vmem:[%s4519 + $0x18] sm:$0xff]
        %v4524 = vld [vmem:[%s4519 + $0x20] sm:$0xff]
        %v4525 = vld [vmem:[%s4519 + $0x28] sm:$0xff]
        %v4526 = vld [vmem:[%s4519 + $0x30] sm:$0xff]
        %v4527 = vld [vmem:[%s4519 + $0x38] sm:$0xff]
        %v4528 = vld [vmem:[%s4519 + $0x40] sm:$0xff]
        %v4529 = vld [vmem:[%s4519 + $0x48] sm:$0xff]
        %v4530 = vld [vmem:[%s4519 + $0x50] sm:$0xff]
        %v4531 = vld [vmem:[%s4519 + $0x58] sm:$0xff]
        %v4532 = vld [vmem:[%s4519 + $0x60] sm:$0xff]
        %v4533 = vld [vmem:[%s4519 + $0x68] sm:$0xff]
        %v4534 = vld [vmem:[%s4519 + $0x70] sm:$0xff]
        %v4535 = vld [vmem:[%s4519 + $0x78] sm:$0xff]
        %v4536 = vld [vmem:[%s4519 + $0x80] sm:$0xff]
        %v4537 = vld [vmem:[%s4519 + $0x88] sm:$0xff]
        %v4538 = vld [vmem:[%s4519 + $0x90] sm:$0xff]
        %v4539 = vld [vmem:[%s4519 + $0x98] sm:$0xff]
        %v4541 = vsel %vm492, %v4521, 0
        %v4544 = vsel %vm492, %v4523, 0
        %v4547 = vsel %vm492, %v4525, 0
        %v4550 = vsel %vm492, %v4527, 0
        %v4553 = vsel %vm492, %v4529, 0
        %v4556 = vsel %vm492, %v4531, 0
        %v4559 = vsel %vm492, %v4533, 0
        %v4562 = vsel %vm492, %v4535, 0
        %v4565 = vsel %vm492, %v4537, 0
        %v4568 = vsel %vm492, %v4539, 0
        %4570 = vmatprep.subr.mxu0 0.0
        %4571 = vmatpush1.msra.mxu0 %v4349
        %4572 = vmatprep.subr.mxu0 0.0
        %4573 = vmatpush1.msra.mxu0 %v4348
        %4574 = vmatprep.subr.mxu0 0.0
        %4575 = vmatpush1.msra.mxu0 %v4347
        %4576 = vmatprep.subr.mxu0 0.0
        %4577 = vmatpush1.msra.mxu0 %v4346
        %4578 = vmatprep.subr.mxu0 0.0
        %4579 = vmatpush1.msra.mxu0 %v4345
        %4580 = vmatprep.subr.mxu0 0.0
        %4581 = vmatpush1.msra.mxu0 %v4344
        %4582 = vmatprep.subr.mxu0 0.0
        %4583 = vmatpush1.msra.mxu0 %v4343
        %4584 = vmatprep.subr.mxu0 0.0
        %4585 = vmatpush1.msra.mxu0 %v4342
        %4586 = vmatprep.subr.mxu0 0.0
        %4587 = vmatpush1.msra.mxu0 %v4341
        %4588 = vmatprep.subr.mxu0 0.0
        %4589 = vmatpush1.msra.mxu0 %v4340
        %4590 = vmatprep.subr.mxu0 0.0
        %4591 = vmatpush1.msra.mxu0 %v4339
        %4592 = vmatprep.subr.mxu0 0.0
        %4593 = vmatpush1.msra.mxu0 %v4338
        %4594 = vmatprep.subr.mxu0 0.0
        %4595 = vmatpush1.msra.mxu0 %v4337
        %4596 = vmatprep.subr.mxu0 0.0
        %4597 = vmatpush1.msra.mxu0 %v4336
        %4598 = vmatprep.subr.mxu0 0.0
        %4599 = vmatpush1.msra.mxu0 %v4335
        %4600 = vmatprep.subr.mxu0 0.0
        %4601 = vmatpush1.msra.mxu0 %v4334
        %4602 = vmatprep.subr.mxu0 0.0
        %4603 = vmatpush2.msra.mxu0 0.0
        %4604 = vmatprep.subr.mxu0 0.0
        %4605 = vmatpush2.msra.mxu0 0.0
        %4606 = vmatprep.subr.mxu0 0.0
        %4607 = vmatpush2.msra.mxu0 0.0
        %4608 = vmatprep.subr.mxu0 0.0
        %4609 = vmatpush2.msra.mxu0 0.0
        %4610 = vmatprep.subr.mxu0 0.0
        %4611 = vmatpush2.msra.mxu0 0.0
        %4612 = vmatprep.subr.mxu0 0.0
        %4613 = vmatpush2.msra.mxu0 0.0
        %4614 = vmatprep.subr.mxu0 0.0
        %4615 = vmatpush2.msra.mxu0 0.0
        %4616 = vmatprep.subr.mxu0 0.0
        %4617 = vmatpush2.msra.mxu0 0.0
        %4618 = vmatprep.subr.mxu0 0.0
        %4619 = vmatpush2.msra.mxu0 0.0
        %4620 = vmatprep.subr.mxu0 0.0
        %4621 = vmatpush2.msra.mxu0 0.0
        %4622 = vmatprep.subr.mxu0 0.0
        %4623 = vmatpush2.msra.mxu0 0.0
        %4624 = vmatprep.subr.mxu0 0.0
        %4625 = vmatpush2.msra.mxu0 0.0
        %4626 = vmatprep.subr.mxu0 0.0
        %4627 = vmatpush2.msra.mxu0 %v4353
        %4628 = vmatprep.subr.mxu0 0.0
        %4629 = vmatpush2.msra.mxu0 %v4352
        %4630 = vmatprep.subr.mxu0 0.0
        %4631 = vmatpush2.msra.mxu0 %v4351
        %4632 = vmatprep.subr.mxu0 0.0
        %4633 = vmatpush2.msra.mxu0 %v4350
        %4634 = vmatprep.mubr.f32.mxu0 %v4541
        %4635 = vmatmul.mubr.f32.gmra.mxu0 %v4520
        %v4636 = vpop.f32.mrf.mxu0
        %v4637 = vadd.f32 0.0, %v4636
        %v4638 = vpop.f32.mrf.mxu0
        %4639 = vmatprep.mubr.f32.mxu0 %v4544
        %4640 = vmatmul.mubr.f32.gmra.mxu0 %v4522
        %v4641 = vpop.f32.mrf.mxu0
        %v4642 = vadd.f32 0.0, %v4641
        %v4643 = vpop.f32.mrf.mxu0
        %4644 = vmatprep.mubr.f32.mxu0 %v4547
        %4645 = vmatmul.mubr.f32.gmra.mxu0 %v4524
        %v4646 = vpop.f32.mrf.mxu0
        %v4647 = vadd.f32 0.0, %v4646
        %v4648 = vpop.f32.mrf.mxu0
        %4649 = vmatprep.mubr.f32.mxu0 %v4550
        %4650 = vmatmul.mubr.f32.gmra.mxu0 %v4526
        %v4651 = vpop.f32.mrf.mxu0
        %v4652 = vadd.f32 0.0, %v4651
        %v4653 = vpop.f32.mrf.mxu0
        %4654 = vmatprep.mubr.f32.mxu0 %v4553
        %4655 = vmatmul.mubr.f32.gmra.mxu0 %v4528
        %v4656 = vpop.f32.mrf.mxu0
        %v4657 = vadd.f32 0.0, %v4656
        %v4658 = vpop.f32.mrf.mxu0
        %4659 = vmatprep.mubr.f32.mxu0 %v4556
        %4660 = vmatmul.mubr.f32.gmra.mxu0 %v4530
        %v4661 = vpop.f32.mrf.mxu0
        %v4662 = vadd.f32 0.0, %v4661
        %v4663 = vpop.f32.mrf.mxu0
        %4664 = vmatprep.mubr.f32.mxu0 %v4559
        %4665 = vmatmul.mubr.f32.gmra.mxu0 %v4532
        %v4666 = vpop.f32.mrf.mxu0
        %v4667 = vadd.f32 0.0, %v4666
        %v4668 = vpop.f32.mrf.mxu0
        %4669 = vmatprep.mubr.f32.mxu0 %v4562
        %4670 = vmatmul.mubr.f32.gmra.mxu0 %v4534
        %v4671 = vpop.f32.mrf.mxu0
        %v4672 = vadd.f32 0.0, %v4671
        %v4673 = vpop.f32.mrf.mxu0
        %4674 = vmatprep.mubr.f32.mxu0 %v4565
        %4675 = vmatmul.mubr.f32.gmra.mxu0 %v4536
        %v4676 = vpop.f32.mrf.mxu0
        %v4677 = vadd.f32 0.0, %v4676
        %v4678 = vpop.f32.mrf.mxu0
        %4679 = vmatprep.mubr.f32.mxu0 %v4568
        %4680 = vmatmul.mubr.f32.gmra.mxu0 %v4538
        %v4681 = vpop.f32.mrf.mxu0
        %v4682 = vadd.f32 0.0, %v4681
        %v4683 = vpop.f32.mrf.mxu0
        %4684 = vdwg.mxu0
        %v4685 = vmax.f32 %v4471, %v4637
        %v4686 = vmax.f32 %v4476, %v4642
        %v4687 = vmax.f32 %v4481, %v4647
        %v4688 = vmax.f32 %v4486, %v4652
        %v4689 = vmax.f32 %v4491, %v4657
        %v4690 = vmax.f32 %v4496, %v4662
        %v4691 = vmax.f32 %v4501, %v4667
        %v4692 = vmax.f32 %v4506, %v4672
        %v4693 = vmax.f32 %v4511, %v4677
        %v4694 = vmax.f32 %v4516, %v4682
        %v4695 = vld [vmem:[%s8] sm:$0xff]
        %v4696 = vld [vmem:[%s8 + $0x8] sm:$0x3]
        %vm4697 = vcmask 80896
        %v4699 = vsel %vm4697, %v4685, 0
        %v4702 = vsel %vm4697, %v4686, 0
        %v4705 = vsel %vm4697, %v4687, 0
        %v4708 = vsel %vm4697, %v4688, 0
        %v4711 = vsel %vm4697, %v4689, 0
        %v4714 = vsel %vm4697, %v4690, 0
        %v4717 = vsel %vm4697, %v4691, 0
        %v4720 = vsel %vm4697, %v4692, 0
        %v4723 = vsel %vm4697, %v4693, 0
        %v4726 = vsel %vm4697, %v4694, 0
        %vm4728 = vcmask 1041408
        %v4730 = vsel %vm4728, %v4696, 0
        %4732 = vmatprep.subr.mxu0 0.0
        %4733 = vmatpush1.msra.mxu0 0.0
        %4734 = vmatprep.subr.mxu0 0.0
        %4735 = vmatpush1.msra.mxu0 0.0
        %4736 = vmatprep.subr.mxu0 0.0
        %4737 = vmatpush1.msra.mxu0 0.0
        %4738 = vmatprep.subr.mxu0 0.0
        %4739 = vmatpush1.msra.mxu0 0.0
        %4740 = vmatprep.subr.mxu0 0.0
        %4741 = vmatpush1.msra.mxu0 0.0
        %4742 = vmatprep.subr.mxu0 0.0
        %4743 = vmatpush1.msra.mxu0 0.0
        %4744 = vmatprep.subr.mxu0 0.0
        %4745 = vmatpush1.msra.mxu0 0.0
        %4746 = vmatprep.subr.mxu0 0.0
        %4747 = vmatpush1.msra.mxu0 0.0
        %4748 = vmatprep.subr.mxu0 0.0
        %4749 = vmatpush1.msra.mxu0 0.0
        %4750 = vmatprep.subr.mxu0 0.0
        %4751 = vmatpush1.msra.mxu0 0.0
        %4752 = vmatprep.subr.mxu0 0.0
        %4753 = vmatpush1.msra.mxu0 0.0
        %4754 = vmatprep.subr.mxu0 0.0
        %4755 = vmatpush1.msra.mxu0 0.0
        %4756 = vmatprep.subr.mxu0 0.0
        %4757 = vmatpush1.msra.mxu0 0.0
        %4758 = vmatprep.subr.mxu0 0.0
        %4759 = vmatpush1.msra.mxu0 0.0
        %4760 = vmatprep.subr.mxu0 0.0
        %4761 = vmatpush1.msra.mxu0 %v4730
        %4762 = vmatprep.subr.mxu0 0.0
        %4763 = vmatpush1.msra.mxu0 %v4695
        %4764 = vmatprep.subr.mxu0 0.0
        %4765 = vmatpush2.msra.mxu0 0.0
        %4766 = vmatprep.subr.mxu0 0.0
        %4767 = vmatpush2.msra.mxu0 0.0
        %4768 = vmatprep.subr.mxu0 0.0
        %4769 = vmatpush2.msra.mxu0 0.0
        %4770 = vmatprep.subr.mxu0 0.0
        %4771 = vmatpush2.msra.mxu0 0.0
        %4772 = vmatprep.subr.mxu0 0.0
        %4773 = vmatpush2.msra.mxu0 0.0
        %4774 = vmatprep.subr.mxu0 0.0
        %4775 = vmatpush2.msra.mxu0 0.0
        %4776 = vmatprep.subr.mxu0 0.0
        %4777 = vmatpush2.msra.mxu0 0.0
        %4778 = vmatprep.subr.mxu0 0.0
        %4779 = vmatpush2.msra.mxu0 0.0
        %4780 = vmatprep.subr.mxu0 0.0
        %4781 = vmatpush2.msra.mxu0 0.0
        %4782 = vmatprep.subr.mxu0 0.0
        %4783 = vmatpush2.msra.mxu0 0.0
        %4784 = vmatprep.subr.mxu0 0.0
        %4785 = vmatpush2.msra.mxu0 0.0
        %4786 = vmatprep.subr.mxu0 0.0
        %4787 = vmatpush2.msra.mxu0 0.0
        %4788 = vmatprep.subr.mxu0 0.0
        %4789 = vmatpush2.msra.mxu0 0.0
        %4790 = vmatprep.subr.mxu0 0.0
        %4791 = vmatpush2.msra.mxu0 0.0
        %4792 = vmatprep.subr.mxu0 0.0
        %4793 = vmatpush2.msra.mxu0 0.0
        %4794 = vmatprep.subr.mxu0 0.0
        %4795 = vmatpush2.msra.mxu0 0.0
        %4796 = vmatprep.mubr.f32.mxu0 0.0
        %4797 = vmatmul.mubr.f32.gmra.mxu0 %v4699
        %v4798 = vpop.f32.mrf.mxu0
        %v4799 = vadd.f32 0.0, %v4798
        %v4800 = vpop.f32.mrf.mxu0
        %4801 = vmatprep.mubr.f32.mxu0 0.0
        %4802 = vmatmul.mubr.f32.gmra.mxu0 %v4702
        %v4803 = vpop.f32.mrf.mxu0
        %v4804 = vadd.f32 0.0, %v4803
        %v4805 = vpop.f32.mrf.mxu0
        %4806 = vmatprep.mubr.f32.mxu0 0.0
        %4807 = vmatmul.mubr.f32.gmra.mxu0 %v4705
        %v4808 = vpop.f32.mrf.mxu0
        %v4809 = vadd.f32 0.0, %v4808
        %v4810 = vpop.f32.mrf.mxu0
        %4811 = vmatprep.mubr.f32.mxu0 0.0
        %4812 = vmatmul.mubr.f32.gmra.mxu0 %v4708
        %v4813 = vpop.f32.mrf.mxu0
        %v4814 = vadd.f32 0.0, %v4813
        %v4815 = vpop.f32.mrf.mxu0
        %4816 = vmatprep.mubr.f32.mxu0 0.0
        %4817 = vmatmul.mubr.f32.gmra.mxu0 %v4711
        %v4818 = vpop.f32.mrf.mxu0
        %v4819 = vadd.f32 0.0, %v4818
        %v4820 = vpop.f32.mrf.mxu0
        %4821 = vmatprep.mubr.f32.mxu0 0.0
        %4822 = vmatmul.mubr.f32.gmra.mxu0 %v4714
        %v4823 = vpop.f32.mrf.mxu0
        %v4824 = vadd.f32 0.0, %v4823
        %v4825 = vpop.f32.mrf.mxu0
        %4826 = vmatprep.mubr.f32.mxu0 0.0
        %4827 = vmatmul.mubr.f32.gmra.mxu0 %v4717
        %v4828 = vpop.f32.mrf.mxu0
        %v4829 = vadd.f32 0.0, %v4828
        %v4830 = vpop.f32.mrf.mxu0
        %4831 = vmatprep.mubr.f32.mxu0 0.0
        %4832 = vmatmul.mubr.f32.gmra.mxu0 %v4720
        %v4833 = vpop.f32.mrf.mxu0
        %v4834 = vadd.f32 0.0, %v4833
        %v4835 = vpop.f32.mrf.mxu0
        %4836 = vmatprep.mubr.f32.mxu0 0.0
        %4837 = vmatmul.mubr.f32.gmra.mxu0 %v4723
        %v4838 = vpop.f32.mrf.mxu0
        %v4839 = vadd.f32 0.0, %v4838
        %v4840 = vpop.f32.mrf.mxu0
        %4841 = vmatprep.mubr.f32.mxu0 0.0
        %4842 = vmatmul.mubr.f32.gmra.mxu0 %v4726
        %v4843 = vpop.f32.mrf.mxu0
        %v4844 = vadd.f32 0.0, %v4843
        %v4845 = vpop.f32.mrf.mxu0
        %4846 = vdwg.mxu0
        %s4847 = scalar_lea.vmem %s8, 16
        %v4848 = vld [vmem:[%s4847] sm:$0xff]
        %v4849 = vld [vmem:[%s4847 + $0x8] sm:$0x3]
        %v4851 = vsel %vm4728, %v4849, 0
        %4853 = vmatprep.subr.mxu0 0.0
        %4854 = vmatpush1.msra.mxu0 0.0
        %4855 = vmatprep.subr.mxu0 0.0
        %4856 = vmatpush1.msra.mxu0 0.0
        %4857 = vmatprep.subr.mxu0 0.0
        %4858 = vmatpush1.msra.mxu0 0.0
        %4859 = vmatprep.subr.mxu0 0.0
        %4860 = vmatpush1.msra.mxu0 0.0
        %4861 = vmatprep.subr.mxu0 0.0
        %4862 = vmatpush1.msra.mxu0 0.0
        %4863 = vmatprep.subr.mxu0 0.0
        %4864 = vmatpush1.msra.mxu0 0.0
        %4865 = vmatprep.subr.mxu0 0.0
        %4866 = vmatpush1.msra.mxu0 0.0
        %4867 = vmatprep.subr.mxu0 0.0
        %4868 = vmatpush1.msra.mxu0 0.0
        %4869 = vmatprep.subr.mxu0 0.0
        %4870 = vmatpush1.msra.mxu0 0.0
        %4871 = vmatprep.subr.mxu0 0.0
        %4872 = vmatpush1.msra.mxu0 0.0
        %4873 = vmatprep.subr.mxu0 0.0
        %4874 = vmatpush1.msra.mxu0 0.0
        %4875 = vmatprep.subr.mxu0 0.0
        %4876 = vmatpush1.msra.mxu0 0.0
        %4877 = vmatprep.subr.mxu0 0.0
        %4878 = vmatpush1.msra.mxu0 0.0
        %4879 = vmatprep.subr.mxu0 0.0
        %4880 = vmatpush1.msra.mxu0 0.0
        %4881 = vmatprep.subr.mxu0 0.0
        %4882 = vmatpush1.msra.mxu0 %v4851
        %4883 = vmatprep.subr.mxu0 0.0
        %4884 = vmatpush1.msra.mxu0 %v4848
        %4885 = vmatprep.subr.mxu0 0.0
        %4886 = vmatpush2.msra.mxu0 0.0
        %4887 = vmatprep.subr.mxu0 0.0
        %4888 = vmatpush2.msra.mxu0 0.0
        %4889 = vmatprep.subr.mxu0 0.0
        %4890 = vmatpush2.msra.mxu0 0.0
        %4891 = vmatprep.subr.mxu0 0.0
        %4892 = vmatpush2.msra.mxu0 0.0
        %4893 = vmatprep.subr.mxu0 0.0
        %4894 = vmatpush2.msra.mxu0 0.0
        %4895 = vmatprep.subr.mxu0 0.0
        %4896 = vmatpush2.msra.mxu0 0.0
        %4897 = vmatprep.subr.mxu0 0.0
        %4898 = vmatpush2.msra.mxu0 0.0
        %4899 = vmatprep.subr.mxu0 0.0
        %4900 = vmatpush2.msra.mxu0 0.0
        %4901 = vmatprep.subr.mxu0 0.0
        %4902 = vmatpush2.msra.mxu0 0.0
        %4903 = vmatprep.subr.mxu0 0.0
        %4904 = vmatpush2.msra.mxu0 0.0
        %4905 = vmatprep.subr.mxu0 0.0
        %4906 = vmatpush2.msra.mxu0 0.0
        %4907 = vmatprep.subr.mxu0 0.0
        %4908 = vmatpush2.msra.mxu0 0.0
        %4909 = vmatprep.subr.mxu0 0.0
        %4910 = vmatpush2.msra.mxu0 0.0
        %4911 = vmatprep.subr.mxu0 0.0
        %4912 = vmatpush2.msra.mxu0 0.0
        %4913 = vmatprep.subr.mxu0 0.0
        %4914 = vmatpush2.msra.mxu0 0.0
        %4915 = vmatprep.subr.mxu0 0.0
        %4916 = vmatpush2.msra.mxu0 0.0
        %4917 = vmatprep.mubr.f32.mxu0 0.0
        %4918 = vmatmul.mubr.f32.gmra.mxu0 %v4699
        %v4919 = vpop.f32.mrf.mxu0
        %v4920 = vadd.f32 0.0, %v4919
        %v4921 = vpop.f32.mrf.mxu0
        %4922 = vmatprep.mubr.f32.mxu0 0.0
        %4923 = vmatmul.mubr.f32.gmra.mxu0 %v4702
        %v4924 = vpop.f32.mrf.mxu0
        %v4925 = vadd.f32 0.0, %v4924
        %v4926 = vpop.f32.mrf.mxu0
        %4927 = vmatprep.mubr.f32.mxu0 0.0
        %4928 = vmatmul.mubr.f32.gmra.mxu0 %v4705
        %v4929 = vpop.f32.mrf.mxu0
        %v4930 = vadd.f32 0.0, %v4929
        %v4931 = vpop.f32.mrf.mxu0
        %4932 = vmatprep.mubr.f32.mxu0 0.0
        %4933 = vmatmul.mubr.f32.gmra.mxu0 %v4708
        %v4934 = vpop.f32.mrf.mxu0
        %v4935 = vadd.f32 0.0, %v4934
        %v4936 = vpop.f32.mrf.mxu0
        %4937 = vmatprep.mubr.f32.mxu0 0.0
        %4938 = vmatmul.mubr.f32.gmra.mxu0 %v4711
        %v4939 = vpop.f32.mrf.mxu0
        %v4940 = vadd.f32 0.0, %v4939
        %v4941 = vpop.f32.mrf.mxu0
        %4942 = vmatprep.mubr.f32.mxu0 0.0
        %4943 = vmatmul.mubr.f32.gmra.mxu0 %v4714
        %v4944 = vpop.f32.mrf.mxu0
        %v4945 = vadd.f32 0.0, %v4944
        %v4946 = vpop.f32.mrf.mxu0
        %4947 = vmatprep.mubr.f32.mxu0 0.0
        %4948 = vmatmul.mubr.f32.gmra.mxu0 %v4717
        %v4949 = vpop.f32.mrf.mxu0
        %v4950 = vadd.f32 0.0, %v4949
        %v4951 = vpop.f32.mrf.mxu0
        %4952 = vmatprep.mubr.f32.mxu0 0.0
        %4953 = vmatmul.mubr.f32.gmra.mxu0 %v4720
        %v4954 = vpop.f32.mrf.mxu0
        %v4955 = vadd.f32 0.0, %v4954
        %v4956 = vpop.f32.mrf.mxu0
        %4957 = vmatprep.mubr.f32.mxu0 0.0
        %4958 = vmatmul.mubr.f32.gmra.mxu0 %v4723
        %v4959 = vpop.f32.mrf.mxu0
        %v4960 = vadd.f32 0.0, %v4959
        %v4961 = vpop.f32.mrf.mxu0
        %4962 = vmatprep.mubr.f32.mxu0 0.0
        %4963 = vmatmul.mubr.f32.gmra.mxu0 %v4726
        %v4964 = vpop.f32.mrf.mxu0
        %v4965 = vadd.f32 0.0, %v4964
        %v4966 = vpop.f32.mrf.mxu0
        %4967 = vdwg.mxu0
        %v4968 = vmax.f32 %v4799, %v4920
        %v4969 = vmax.f32 %v4804, %v4925
        %v4970 = vmax.f32 %v4809, %v4930
        %v4971 = vmax.f32 %v4814, %v4935
        %v4972 = vmax.f32 %v4819, %v4940
        %v4973 = vmax.f32 %v4824, %v4945
        %v4974 = vmax.f32 %v4829, %v4950
        %v4975 = vmax.f32 %v4834, %v4955
        %v4976 = vmax.f32 %v4839, %v4960
        %v4977 = vmax.f32 %v4844, %v4965
        %4978 = vxpose.xlu0.b32.start [1/16] %v4968, 128
        %4979 = vxpose.xlu0.b32.cont [2/16] %v4969, 128
        %4980 = vxpose.xlu0.b32.cont [3/16] %v4970, 128
        %4981 = vxpose.xlu0.b32.cont [4/16] %v4971, 128
        %4982 = vxpose.xlu0.b32.cont [5/16] %v4972, 128
        %4983 = vxpose.xlu0.b32.cont [6/16] %v4973, 128
        %4984 = vxpose.xlu0.b32.cont [7/16] %v4974, 128
        %4985 = vxpose.xlu0.b32.cont [8/16] %v4975, 128
        %4986 = vxpose.xlu0.b32.cont [9/16] %v4976, 128
        %4987 = vxpose.xlu0.b32.cont [10/16] %v4977, 128
        %4988 = vxpose.xlu0.b32.cont [11/16] 0.0, 128
        %4989 = vxpose.xlu0.b32.cont [12/16] 0.0, 128
        %4990 = vxpose.xlu0.b32.cont [13/16] 0.0, 128
        %4991 = vxpose.xlu0.b32.cont [14/16] 0.0, 128
        %4992 = vxpose.xlu0.b32.cont [15/16] 0.0, 128
        %4993 = vxpose.xlu0.b32.end [16/16] 0.0, 128
        %v4994 = vpop.trf.xlu0
        %v4995 = vpop.trf.xlu0
        %v4996 = vpop.trf.xlu0
        %v4997 = vpop.trf.xlu0
        %v4998 = vpop.trf.xlu0
        %v4999 = vpop.trf.xlu0
        %v5000 = vpop.trf.xlu0
        %v5001 = vpop.trf.xlu0
        %v5002 = vpop.trf.xlu0
        %v5003 = vpop.trf.xlu0
        %v5004 = vpop.trf.xlu0
        %v5005 = vpop.trf.xlu0
        %v5006 = vpop.trf.xlu0
        %v5007 = vpop.trf.xlu0
        %v5008 = vpop.trf.xlu0
        %v5009 = vpop.trf.xlu0
        %v5010 = vld [vmem:[%s9] sm:$0xff]
        %v5011 = vld [vmem:[%s9 + $0x8] sm:$0xff]
        %v5012 = vld [vmem:[%s9 + $0x10] sm:$0xff]
        %v5013 = vld [vmem:[%s9 + $0x18] sm:$0xff]
        %v5014 = vld [vmem:[%s9 + $0x20] sm:$0xff]
        %v5015 = vld [vmem:[%s9 + $0x28] sm:$0xff]
        %v5016 = vld [vmem:[%s9 + $0x30] sm:$0xff]
        %v5017 = vld [vmem:[%s9 + $0x38] sm:$0xff]
        %v5018 = vld [vmem:[%s9 + $0x40] sm:$0xff]
        %v5019 = vld [vmem:[%s9 + $0x48] sm:$0xff]
        %s5020 = scalar_lea.vmem %s9, 80
        %v5021 = vld [vmem:[%s5020] sm:$0xff]
        %v5022 = vld [vmem:[%s5020 + $0x8] sm:$0xff]
        %v5023 = vld [vmem:[%s5020 + $0x10] sm:$0xff]
        %v5024 = vld [vmem:[%s5020 + $0x18] sm:$0xff]
        %v5025 = vld [vmem:[%s5020 + $0x20] sm:$0xff]
        %v5026 = vld [vmem:[%s5020 + $0x28] sm:$0xff]
        %v5027 = vld [vmem:[%s5020 + $0x30] sm:$0xff]
        %v5028 = vld [vmem:[%s5020 + $0x38] sm:$0xff]
        %v5029 = vld [vmem:[%s5020 + $0x40] sm:$0xff]
        %v5030 = vld [vmem:[%s5020 + $0x48] sm:$0xff]
        %v5032 = vrot.slane %v4994, 1
        %vm5033 = vcmask 654336
        %v5034 = vsel %vm5033, %v5032, 0
        %5036 = vmatprep.subr.mxu0 0.0
        %5037 = vmatpush1.msra.mxu0 0.0
        %5038 = vmatprep.subr.mxu0 0.0
        %5039 = vmatpush1.msra.mxu0 0.0
        %5040 = vmatprep.subr.mxu0 0.0
        %5041 = vmatpush1.msra.mxu0 0.0
        %5042 = vmatprep.subr.mxu0 0.0
        %5043 = vmatpush1.msra.mxu0 0.0
        %5044 = vmatprep.subr.mxu0 0.0
        %5045 = vmatpush1.msra.mxu0 0.0
        %5046 = vmatprep.subr.mxu0 0.0
        %5047 = vmatpush1.msra.mxu0 0.0
        %5048 = vmatprep.subr.mxu0 0.0
        %5049 = vmatpush1.msra.mxu0 %v5030
        %5050 = vmatprep.subr.mxu0 0.0
        %5051 = vmatpush1.msra.mxu0 %v5029
        %5052 = vmatprep.subr.mxu0 0.0
        %5053 = vmatpush1.msra.mxu0 %v5028
        %5054 = vmatprep.subr.mxu0 0.0
        %5055 = vmatpush1.msra.mxu0 %v5027
        %5056 = vmatprep.subr.mxu0 0.0
        %5057 = vmatpush1.msra.mxu0 %v5026
        %5058 = vmatprep.subr.mxu0 0.0
        %5059 = vmatpush1.msra.mxu0 %v5025
        %5060 = vmatprep.subr.mxu0 0.0
        %5061 = vmatpush1.msra.mxu0 %v5024
        %5062 = vmatprep.subr.mxu0 0.0
        %5063 = vmatpush1.msra.mxu0 %v5023
        %5064 = vmatprep.subr.mxu0 0.0
        %5065 = vmatpush1.msra.mxu0 %v5022
        %5066 = vmatprep.subr.mxu0 0.0
        %5067 = vmatpush1.msra.mxu0 %v5021
        %5068 = vmatprep.subr.mxu0 0.0
        %5069 = vmatpush2.msra.mxu0 0.0
        %5070 = vmatprep.subr.mxu0 0.0
        %5071 = vmatpush2.msra.mxu0 0.0
        %5072 = vmatprep.subr.mxu0 0.0
        %5073 = vmatpush2.msra.mxu0 0.0
        %5074 = vmatprep.subr.mxu0 0.0
        %5075 = vmatpush2.msra.mxu0 0.0
        %5076 = vmatprep.subr.mxu0 0.0
        %5077 = vmatpush2.msra.mxu0 0.0
        %5078 = vmatprep.subr.mxu0 0.0
        %5079 = vmatpush2.msra.mxu0 0.0
        %5080 = vmatprep.subr.mxu0 0.0
        %5081 = vmatpush2.msra.mxu0 0.0
        %5082 = vmatprep.subr.mxu0 0.0
        %5083 = vmatpush2.msra.mxu0 0.0
        %5084 = vmatprep.subr.mxu0 0.0
        %5085 = vmatpush2.msra.mxu0 0.0
        %5086 = vmatprep.subr.mxu0 0.0
        %5087 = vmatpush2.msra.mxu0 0.0
        %5088 = vmatprep.subr.mxu0 0.0
        %5089 = vmatpush2.msra.mxu0 0.0
        %5090 = vmatprep.subr.mxu0 0.0
        %5091 = vmatpush2.msra.mxu0 0.0
        %5092 = vmatprep.subr.mxu0 0.0
        %5093 = vmatpush2.msra.mxu0 0.0
        %5094 = vmatprep.subr.mxu0 0.0
        %5095 = vmatpush2.msra.mxu0 0.0
        %5096 = vmatprep.subr.mxu0 0.0
        %5097 = vmatpush2.msra.mxu0 0.0
        %5098 = vmatprep.subr.mxu0 0.0
        %5099 = vmatpush2.msra.mxu0 0.0
        %5100 = vmatprep.mubr.f32.mxu0 0.0
        %5101 = vmatmul.mubr.f32.gmra.mxu0 %v5034
        %v5102 = vpop.f32.mrf.mxu0
        %v5103 = vadd.f32 0.0, %v5102
        %v5104 = vpop.f32.mrf.mxu0
        %5105 = vdwg.mxu0
        %v5106 = vsel %vm5033, %v4994, 0
        %5108 = vmatprep.subr.mxu0 0.0
        %5109 = vmatpush1.msra.mxu0 0.0
        %5110 = vmatprep.subr.mxu0 0.0
        %5111 = vmatpush1.msra.mxu0 0.0
        %5112 = vmatprep.subr.mxu0 0.0
        %5113 = vmatpush1.msra.mxu0 0.0
        %5114 = vmatprep.subr.mxu0 0.0
        %5115 = vmatpush1.msra.mxu0 0.0
        %5116 = vmatprep.subr.mxu0 0.0
        %5117 = vmatpush1.msra.mxu0 0.0
        %5118 = vmatprep.subr.mxu0 0.0
        %5119 = vmatpush1.msra.mxu0 0.0
        %5120 = vmatprep.subr.mxu0 0.0
        %5121 = vmatpush1.msra.mxu0 %v5019
        %5122 = vmatprep.subr.mxu0 0.0
        %5123 = vmatpush1.msra.mxu0 %v5018
        %5124 = vmatprep.subr.mxu0 0.0
        %5125 = vmatpush1.msra.mxu0 %v5017
        %5126 = vmatprep.subr.mxu0 0.0
        %5127 = vmatpush1.msra.mxu0 %v5016
        %5128 = vmatprep.subr.mxu0 0.0
        %5129 = vmatpush1.msra.mxu0 %v5015
        %5130 = vmatprep.subr.mxu0 0.0
        %5131 = vmatpush1.msra.mxu0 %v5014
        %5132 = vmatprep.subr.mxu0 0.0
        %5133 = vmatpush1.msra.mxu0 %v5013
        %5134 = vmatprep.subr.mxu0 0.0
        %5135 = vmatpush1.msra.mxu0 %v5012
        %5136 = vmatprep.subr.mxu0 0.0
        %5137 = vmatpush1.msra.mxu0 %v5011
        %5138 = vmatprep.subr.mxu0 0.0
        %5139 = vmatpush1.msra.mxu0 %v5010
        %5140 = vmatprep.subr.mxu0 0.0
        %5141 = vmatpush2.msra.mxu0 0.0
        %5142 = vmatprep.subr.mxu0 0.0
        %5143 = vmatpush2.msra.mxu0 0.0
        %5144 = vmatprep.subr.mxu0 0.0
        %5145 = vmatpush2.msra.mxu0 0.0
        %5146 = vmatprep.subr.mxu0 0.0
        %5147 = vmatpush2.msra.mxu0 0.0
        %5148 = vmatprep.subr.mxu0 0.0
        %5149 = vmatpush2.msra.mxu0 0.0
        %5150 = vmatprep.subr.mxu0 0.0
        %5151 = vmatpush2.msra.mxu0 0.0
        %5152 = vmatprep.subr.mxu0 0.0
        %5153 = vmatpush2.msra.mxu0 0.0
        %5154 = vmatprep.subr.mxu0 0.0
        %5155 = vmatpush2.msra.mxu0 0.0
        %5156 = vmatprep.subr.mxu0 0.0
        %5157 = vmatpush2.msra.mxu0 0.0
        %5158 = vmatprep.subr.mxu0 0.0
        %5159 = vmatpush2.msra.mxu0 0.0
        %5160 = vmatprep.subr.mxu0 0.0
        %5161 = vmatpush2.msra.mxu0 0.0
        %5162 = vmatprep.subr.mxu0 0.0
        %5163 = vmatpush2.msra.mxu0 0.0
        %5164 = vmatprep.subr.mxu0 0.0
        %5165 = vmatpush2.msra.mxu0 0.0
        %5166 = vmatprep.subr.mxu0 0.0
        %5167 = vmatpush2.msra.mxu0 0.0
        %5168 = vmatprep.subr.mxu0 0.0
        %5169 = vmatpush2.msra.mxu0 0.0
        %5170 = vmatprep.subr.mxu0 0.0
        %5171 = vmatpush2.msra.mxu0 0.0
        %5172 = vmatprep.mubr.f32.mxu0 0.0
        %5173 = vmatmul.mubr.f32.gmra.mxu0 %v5106
        %v5174 = vpop.f32.mrf.mxu0
        %v5175 = vadd.f32 %v5103, %v5174
        %v5176 = vpop.f32.mrf.mxu0
        %5177 = vdwg.mxu0
        %s5178 = scalar_lea.vmem %s9, 160
        %v5179 = vld [vmem:[%s5178] sm:$0xff]
        %v5180 = vld [vmem:[%s5178 + $0x8] sm:$0xff]
        %v5181 = vld [vmem:[%s5178 + $0x10] sm:$0xff]
        %v5182 = vld [vmem:[%s5178 + $0x18] sm:$0xff]
        %v5183 = vld [vmem:[%s5178 + $0x20] sm:$0xff]
        %v5184 = vld [vmem:[%s5178 + $0x28] sm:$0xff]
        %v5185 = vld [vmem:[%s5178 + $0x30] sm:$0xff]
        %v5186 = vld [vmem:[%s5178 + $0x38] sm:$0xff]
        %v5187 = vld [vmem:[%s5178 + $0x40] sm:$0xff]
        %v5188 = vld [vmem:[%s5178 + $0x48] sm:$0xff]
        %v5189 = vrot.slane %v4994, 2
        %v5190 = vsel %vm5033, %v5189, 0
        %5192 = vmatprep.subr.mxu0 0.0
        %5193 = vmatpush1.msra.mxu0 0.0
        %5194 = vmatprep.subr.mxu0 0.0
        %5195 = vmatpush1.msra.mxu0 0.0
        %5196 = vmatprep.subr.mxu0 0.0
        %5197 = vmatpush1.msra.mxu0 0.0
        %5198 = vmatprep.subr.mxu0 0.0
        %5199 = vmatpush1.msra.mxu0 0.0
        %5200 = vmatprep.subr.mxu0 0.0
        %5201 = vmatpush1.msra.mxu0 0.0
        %5202 = vmatprep.subr.mxu0 0.0
        %5203 = vmatpush1.msra.mxu0 0.0
        %5204 = vmatprep.subr.mxu0 0.0
        %5205 = vmatpush1.msra.mxu0 %v5188
        %5206 = vmatprep.subr.mxu0 0.0
        %5207 = vmatpush1.msra.mxu0 %v5187
        %5208 = vmatprep.subr.mxu0 0.0
        %5209 = vmatpush1.msra.mxu0 %v5186
        %5210 = vmatprep.subr.mxu0 0.0
        %5211 = vmatpush1.msra.mxu0 %v5185
        %5212 = vmatprep.subr.mxu0 0.0
        %5213 = vmatpush1.msra.mxu0 %v5184
        %5214 = vmatprep.subr.mxu0 0.0
        %5215 = vmatpush1.msra.mxu0 %v5183
        %5216 = vmatprep.subr.mxu0 0.0
        %5217 = vmatpush1.msra.mxu0 %v5182
        %5218 = vmatprep.subr.mxu0 0.0
        %5219 = vmatpush1.msra.mxu0 %v5181
        %5220 = vmatprep.subr.mxu0 0.0
        %5221 = vmatpush1.msra.mxu0 %v5180
        %5222 = vmatprep.subr.mxu0 0.0
        %5223 = vmatpush1.msra.mxu0 %v5179
        %5224 = vmatprep.subr.mxu0 0.0
        %5225 = vmatpush2.msra.mxu0 0.0
        %5226 = vmatprep.subr.mxu0 0.0
        %5227 = vmatpush2.msra.mxu0 0.0
        %5228 = vmatprep.subr.mxu0 0.0
        %5229 = vmatpush2.msra.mxu0 0.0
        %5230 = vmatprep.subr.mxu0 0.0
        %5231 = vmatpush2.msra.mxu0 0.0
        %5232 = vmatprep.subr.mxu0 0.0
        %5233 = vmatpush2.msra.mxu0 0.0
        %5234 = vmatprep.subr.mxu0 0.0
        %5235 = vmatpush2.msra.mxu0 0.0
        %5236 = vmatprep.subr.mxu0 0.0
        %5237 = vmatpush2.msra.mxu0 0.0
        %5238 = vmatprep.subr.mxu0 0.0
        %5239 = vmatpush2.msra.mxu0 0.0
        %5240 = vmatprep.subr.mxu0 0.0
        %5241 = vmatpush2.msra.mxu0 0.0
        %5242 = vmatprep.subr.mxu0 0.0
        %5243 = vmatpush2.msra.mxu0 0.0
        %5244 = vmatprep.subr.mxu0 0.0
        %5245 = vmatpush2.msra.mxu0 0.0
        %5246 = vmatprep.subr.mxu0 0.0
        %5247 = vmatpush2.msra.mxu0 0.0
        %5248 = vmatprep.subr.mxu0 0.0
        %5249 = vmatpush2.msra.mxu0 0.0
        %5250 = vmatprep.subr.mxu0 0.0
        %5251 = vmatpush2.msra.mxu0 0.0
        %5252 = vmatprep.subr.mxu0 0.0
        %5253 = vmatpush2.msra.mxu0 0.0
        %5254 = vmatprep.subr.mxu0 0.0
        %5255 = vmatpush2.msra.mxu0 0.0
        %5256 = vmatprep.mubr.f32.mxu0 0.0
        %5257 = vmatmul.mubr.f32.gmra.mxu0 %v5190
        %v5258 = vpop.f32.mrf.mxu0
        %v5259 = vadd.f32 0.0, %v5258
        %v5260 = vpop.f32.mrf.mxu0
        %5261 = vdwg.mxu0
        %v5262 = vadd.f32 %v5175, %v5259
        %s5263 = scalar_lea.vmem %s9, 240
        %v5264 = vld [vmem:[%s5263] sm:$0xff]
        %v5265 = vld [vmem:[%s5263 + $0x8] sm:$0xff]
        %v5266 = vld [vmem:[%s5263 + $0x10] sm:$0xff]
        %v5267 = vld [vmem:[%s5263 + $0x18] sm:$0xff]
        %v5268 = vld [vmem:[%s5263 + $0x20] sm:$0xff]
        %v5269 = vld [vmem:[%s5263 + $0x28] sm:$0xff]
        %v5270 = vld [vmem:[%s5263 + $0x30] sm:$0xff]
        %v5271 = vld [vmem:[%s5263 + $0x38] sm:$0xff]
        %v5272 = vld [vmem:[%s5263 + $0x40] sm:$0xff]
        %v5273 = vld [vmem:[%s5263 + $0x48] sm:$0xff]
        %v5274 = vrot.slane %v4994, 3
        %v5275 = vsel %vm5033, %v5274, 0
        %5277 = vmatprep.subr.mxu0 0.0
        %5278 = vmatpush1.msra.mxu0 0.0
        %5279 = vmatprep.subr.mxu0 0.0
        %5280 = vmatpush1.msra.mxu0 0.0
        %5281 = vmatprep.subr.mxu0 0.0
        %5282 = vmatpush1.msra.mxu0 0.0
        %5283 = vmatprep.subr.mxu0 0.0
        %5284 = vmatpush1.msra.mxu0 0.0
        %5285 = vmatprep.subr.mxu0 0.0
        %5286 = vmatpush1.msra.mxu0 0.0
        %5287 = vmatprep.subr.mxu0 0.0
        %5288 = vmatpush1.msra.mxu0 0.0
        %5289 = vmatprep.subr.mxu0 0.0
        %5290 = vmatpush1.msra.mxu0 %v5273
        %5291 = vmatprep.subr.mxu0 0.0
        %5292 = vmatpush1.msra.mxu0 %v5272
        %5293 = vmatprep.subr.mxu0 0.0
        %5294 = vmatpush1.msra.mxu0 %v5271
        %5295 = vmatprep.subr.mxu0 0.0
        %5296 = vmatpush1.msra.mxu0 %v5270
        %5297 = vmatprep.subr.mxu0 0.0
        %5298 = vmatpush1.msra.mxu0 %v5269
        %5299 = vmatprep.subr.mxu0 0.0
        %5300 = vmatpush1.msra.mxu0 %v5268
        %5301 = vmatprep.subr.mxu0 0.0
        %5302 = vmatpush1.msra.mxu0 %v5267
        %5303 = vmatprep.subr.mxu0 0.0
        %5304 = vmatpush1.msra.mxu0 %v5266
        %5305 = vmatprep.subr.mxu0 0.0
        %5306 = vmatpush1.msra.mxu0 %v5265
        %5307 = vmatprep.subr.mxu0 0.0
        %5308 = vmatpush1.msra.mxu0 %v5264
        %5309 = vmatprep.subr.mxu0 0.0
        %5310 = vmatpush2.msra.mxu0 0.0
        %5311 = vmatprep.subr.mxu0 0.0
        %5312 = vmatpush2.msra.mxu0 0.0
        %5313 = vmatprep.subr.mxu0 0.0
        %5314 = vmatpush2.msra.mxu0 0.0
        %5315 = vmatprep.subr.mxu0 0.0
        %5316 = vmatpush2.msra.mxu0 0.0
        %5317 = vmatprep.subr.mxu0 0.0
        %5318 = vmatpush2.msra.mxu0 0.0
        %5319 = vmatprep.subr.mxu0 0.0
        %5320 = vmatpush2.msra.mxu0 0.0
        %5321 = vmatprep.subr.mxu0 0.0
        %5322 = vmatpush2.msra.mxu0 0.0
        %5323 = vmatprep.subr.mxu0 0.0
        %5324 = vmatpush2.msra.mxu0 0.0
        %5325 = vmatprep.subr.mxu0 0.0
        %5326 = vmatpush2.msra.mxu0 0.0
        %5327 = vmatprep.subr.mxu0 0.0
        %5328 = vmatpush2.msra.mxu0 0.0
        %5329 = vmatprep.subr.mxu0 0.0
        %5330 = vmatpush2.msra.mxu0 0.0
        %5331 = vmatprep.subr.mxu0 0.0
        %5332 = vmatpush2.msra.mxu0 0.0
        %5333 = vmatprep.subr.mxu0 0.0
        %5334 = vmatpush2.msra.mxu0 0.0
        %5335 = vmatprep.subr.mxu0 0.0
        %5336 = vmatpush2.msra.mxu0 0.0
        %5337 = vmatprep.subr.mxu0 0.0
        %5338 = vmatpush2.msra.mxu0 0.0
        %5339 = vmatprep.subr.mxu0 0.0
        %5340 = vmatpush2.msra.mxu0 0.0
        %5341 = vmatprep.mubr.f32.mxu0 0.0
        %5342 = vmatmul.mubr.f32.gmra.mxu0 %v5275
        %v5343 = vpop.f32.mrf.mxu0
        %v5344 = vadd.f32 0.0, %v5343
        %v5345 = vpop.f32.mrf.mxu0
        %5346 = vdwg.mxu0
        %v5347 = vadd.f32 %v5262, %v5344
        %s5348 = scalar_lea.vmem %s9, 320
        %v5349 = vld [vmem:[%s5348] sm:$0xff]
        %v5350 = vld [vmem:[%s5348 + $0x8] sm:$0xff]
        %v5351 = vld [vmem:[%s5348 + $0x10] sm:$0xff]
        %v5352 = vld [vmem:[%s5348 + $0x18] sm:$0xff]
        %v5353 = vld [vmem:[%s5348 + $0x20] sm:$0xff]
        %v5354 = vld [vmem:[%s5348 + $0x28] sm:$0xff]
        %v5355 = vld [vmem:[%s5348 + $0x30] sm:$0xff]
        %v5356 = vld [vmem:[%s5348 + $0x38] sm:$0xff]
        %v5357 = vld [vmem:[%s5348 + $0x40] sm:$0xff]
        %v5358 = vld [vmem:[%s5348 + $0x48] sm:$0xff]
        %v5359 = vrot.slane %v4994, 4
        %v5360 = vsel %vm5033, %v5359, 0
        %5362 = vmatprep.subr.mxu0 0.0
        %5363 = vmatpush1.msra.mxu0 0.0
        %5364 = vmatprep.subr.mxu0 0.0
        %5365 = vmatpush1.msra.mxu0 0.0
        %5366 = vmatprep.subr.mxu0 0.0
        %5367 = vmatpush1.msra.mxu0 0.0
        %5368 = vmatprep.subr.mxu0 0.0
        %5369 = vmatpush1.msra.mxu0 0.0
        %5370 = vmatprep.subr.mxu0 0.0
        %5371 = vmatpush1.msra.mxu0 0.0
        %5372 = vmatprep.subr.mxu0 0.0
        %5373 = vmatpush1.msra.mxu0 0.0
        %5374 = vmatprep.subr.mxu0 0.0
        %5375 = vmatpush1.msra.mxu0 %v5358
        %5376 = vmatprep.subr.mxu0 0.0
        %5377 = vmatpush1.msra.mxu0 %v5357
        %5378 = vmatprep.subr.mxu0 0.0
        %5379 = vmatpush1.msra.mxu0 %v5356
        %5380 = vmatprep.subr.mxu0 0.0
        %5381 = vmatpush1.msra.mxu0 %v5355
        %5382 = vmatprep.subr.mxu0 0.0
        %5383 = vmatpush1.msra.mxu0 %v5354
        %5384 = vmatprep.subr.mxu0 0.0
        %5385 = vmatpush1.msra.mxu0 %v5353
        %5386 = vmatprep.subr.mxu0 0.0
        %5387 = vmatpush1.msra.mxu0 %v5352
        %5388 = vmatprep.subr.mxu0 0.0
        %5389 = vmatpush1.msra.mxu0 %v5351
        %5390 = vmatprep.subr.mxu0 0.0
        %5391 = vmatpush1.msra.mxu0 %v5350
        %5392 = vmatprep.subr.mxu0 0.0
        %5393 = vmatpush1.msra.mxu0 %v5349
        %5394 = vmatprep.subr.mxu0 0.0
        %5395 = vmatpush2.msra.mxu0 0.0
        %5396 = vmatprep.subr.mxu0 0.0
        %5397 = vmatpush2.msra.mxu0 0.0
        %5398 = vmatprep.subr.mxu0 0.0
        %5399 = vmatpush2.msra.mxu0 0.0
        %5400 = vmatprep.subr.mxu0 0.0
        %5401 = vmatpush2.msra.mxu0 0.0
        %5402 = vmatprep.subr.mxu0 0.0
        %5403 = vmatpush2.msra.mxu0 0.0
        %5404 = vmatprep.subr.mxu0 0.0
        %5405 = vmatpush2.msra.mxu0 0.0
        %5406 = vmatprep.subr.mxu0 0.0
        %5407 = vmatpush2.msra.mxu0 0.0
        %5408 = vmatprep.subr.mxu0 0.0
        %5409 = vmatpush2.msra.mxu0 0.0
        %5410 = vmatprep.subr.mxu0 0.0
        %5411 = vmatpush2.msra.mxu0 0.0
        %5412 = vmatprep.subr.mxu0 0.0
        %5413 = vmatpush2.msra.mxu0 0.0
        %5414 = vmatprep.subr.mxu0 0.0
        %5415 = vmatpush2.msra.mxu0 0.0
        %5416 = vmatprep.subr.mxu0 0.0
        %5417 = vmatpush2.msra.mxu0 0.0
        %5418 = vmatprep.subr.mxu0 0.0
        %5419 = vmatpush2.msra.mxu0 0.0
        %5420 = vmatprep.subr.mxu0 0.0
        %5421 = vmatpush2.msra.mxu0 0.0
        %5422 = vmatprep.subr.mxu0 0.0
        %5423 = vmatpush2.msra.mxu0 0.0
        %5424 = vmatprep.subr.mxu0 0.0
        %5425 = vmatpush2.msra.mxu0 0.0
        %5426 = vmatprep.mubr.f32.mxu0 0.0
        %5427 = vmatmul.mubr.f32.gmra.mxu0 %v5360
        %v5428 = vpop.f32.mrf.mxu0
        %v5429 = vadd.f32 0.0, %v5428
        %v5430 = vpop.f32.mrf.mxu0
        %5431 = vdwg.mxu0
        %v5432 = vadd.f32 %v5347, %v5429
        %v5433 = vld [vmem:[%s10] sm:$0x1]
        %v5434 = vadd.f32 %v5432, %v5433
        %v5435 = vmax.f32 %v5434, 0.0
        %v5436 = vld [vmem:[%s11] sm:$0xff]
        %v5437 = vld [vmem:[%s11 + $0x8] sm:$0xff]
        %v5438 = vld [vmem:[%s11 + $0x10] sm:$0xff]
        %v5439 = vld [vmem:[%s11 + $0x18] sm:$0xff]
        %v5440 = vld [vmem:[%s11 + $0x20] sm:$0xff]
        %v5441 = vld [vmem:[%s11 + $0x28] sm:$0xff]
        %v5442 = vld [vmem:[%s11 + $0x30] sm:$0xff]
        %v5443 = vld [vmem:[%s11 + $0x38] sm:$0xff]
        %v5444 = vld [vmem:[%s11 + $0x40] sm:$0xff]
        %v5445 = vld [vmem:[%s11 + $0x48] sm:$0xff]
        %v5446 = vld [vmem:[%s11 + $0x50] sm:$0xff]
        %v5447 = vld [vmem:[%s11 + $0x58] sm:$0xff]
        %v5448 = vld [vmem:[%s11 + $0x60] sm:$0xff]
        %v5449 = vld [vmem:[%s11 + $0x68] sm:$0xff]
        %v5450 = vld [vmem:[%s11 + $0x70] sm:$0xff]
        %v5451 = vld [vmem:[%s12] sm:$0x1]
        %vm5452 = vcmask 982016
        %v5454 = vsel %vm5452, %v5435, 0
        %5456 = vmatprep.subr.mxu0 0.0
        %5457 = vmatpush1.msra.mxu0 0.0
        %5458 = vmatprep.subr.mxu0 0.0
        %5459 = vmatpush1.msra.mxu0 %v5450
        %5460 = vmatprep.subr.mxu0 0.0
        %5461 = vmatpush1.msra.mxu0 %v5449
        %5462 = vmatprep.subr.mxu0 0.0
        %5463 = vmatpush1.msra.mxu0 %v5448
        %5464 = vmatprep.subr.mxu0 0.0
        %5465 = vmatpush1.msra.mxu0 %v5447
        %5466 = vmatprep.subr.mxu0 0.0
        %5467 = vmatpush1.msra.mxu0 %v5446
        %5468 = vmatprep.subr.mxu0 0.0
        %5469 = vmatpush1.msra.mxu0 %v5445
        %5470 = vmatprep.subr.mxu0 0.0
        %5471 = vmatpush1.msra.mxu0 %v5444
        %5472 = vmatprep.subr.mxu0 0.0
        %5473 = vmatpush1.msra.mxu0 %v5443
        %5474 = vmatprep.subr.mxu0 0.0
        %5475 = vmatpush1.msra.mxu0 %v5442
        %5476 = vmatprep.subr.mxu0 0.0
        %5477 = vmatpush1.msra.mxu0 %v5441
        %5478 = vmatprep.subr.mxu0 0.0
        %5479 = vmatpush1.msra.mxu0 %v5440
        %5480 = vmatprep.subr.mxu0 0.0
        %5481 = vmatpush1.msra.mxu0 %v5439
        %5482 = vmatprep.subr.mxu0 0.0
        %5483 = vmatpush1.msra.mxu0 %v5438
        %5484 = vmatprep.subr.mxu0 0.0
        %5485 = vmatpush1.msra.mxu0 %v5437
        %5486 = vmatprep.subr.mxu0 0.0
        %5487 = vmatpush1.msra.mxu0 %v5436
        %5488 = vmatprep.subr.mxu0 0.0
        %5489 = vmatpush2.msra.mxu0 0.0
        %5490 = vmatprep.subr.mxu0 0.0
        %5491 = vmatpush2.msra.mxu0 0.0
        %5492 = vmatprep.subr.mxu0 0.0
        %5493 = vmatpush2.msra.mxu0 0.0
        %5494 = vmatprep.subr.mxu0 0.0
        %5495 = vmatpush2.msra.mxu0 0.0
        %5496 = vmatprep.subr.mxu0 0.0
        %5497 = vmatpush2.msra.mxu0 0.0
        %5498 = vmatprep.subr.mxu0 0.0
        %5499 = vmatpush2.msra.mxu0 0.0
        %5500 = vmatprep.subr.mxu0 0.0
        %5501 = vmatpush2.msra.mxu0 0.0
        %5502 = vmatprep.subr.mxu0 0.0
        %5503 = vmatpush2.msra.mxu0 0.0
        %5504 = vmatprep.subr.mxu0 0.0
        %5505 = vmatpush2.msra.mxu0 0.0
        %5506 = vmatprep.subr.mxu0 0.0
        %5507 = vmatpush2.msra.mxu0 0.0
        %5508 = vmatprep.subr.mxu0 0.0
        %5509 = vmatpush2.msra.mxu0 0.0
        %5510 = vmatprep.subr.mxu0 0.0
        %5511 = vmatpush2.msra.mxu0 0.0
        %5512 = vmatprep.subr.mxu0 0.0
        %5513 = vmatpush2.msra.mxu0 0.0
        %5514 = vmatprep.subr.mxu0 0.0
        %5515 = vmatpush2.msra.mxu0 0.0
        %5516 = vmatprep.subr.mxu0 0.0
        %5517 = vmatpush2.msra.mxu0 0.0
        %5518 = vmatprep.subr.mxu0 0.0
        %5519 = vmatpush2.msra.mxu0 0.0
        %5520 = vmatprep.mubr.f32.mxu0 0.0
        %5521 = vmatmul.mubr.f32.gmra.mxu0 %v5454
        %v5522 = vpop.f32.mrf.mxu0
        %v5523 = vadd.f32 %v5451, %v5522
        %v5524 = vpop.f32.mrf.mxu0
        %5525 = vdwg.mxu0
        %v5526 = vmax.f32 %v5523, 0.0
        %v5527 = vld [vmem:[%s13] sm:$0xff]
        %v5528 = vld [vmem:[%s13 + $0x8] sm:$0xff]
        %v5529 = vld [vmem:[%s13 + $0x10] sm:$0xff]
        %v5530 = vld [vmem:[%s13 + $0x18] sm:$0xff]
        %v5531 = vld [vmem:[%s13 + $0x20] sm:$0xff]
        %v5532 = vld [vmem:[%s13 + $0x28] sm:$0xff]
        %v5533 = vld [vmem:[%s13 + $0x30] sm:$0xff]
        %v5534 = vld [vmem:[%s13 + $0x38] sm:$0xff]
        %v5535 = vld [vmem:[%s13 + $0x40] sm:$0xff]
        %v5536 = vld [vmem:[%s13 + $0x48] sm:$0xff]
        %v5537 = vld [vmem:[%s13 + $0x50] sm:$0xf]
        %v5538 = vld [vmem:[%s14] sm:$0x1]
        %v5540 = vsel %vm2839, %v5526, 0
        %v5543 = vsel %vm650, %v5537, 0
        %5545 = vmatprep.subr.mxu0 0.0
        %5546 = vmatpush1.msra.mxu0 0.0
        %5547 = vmatprep.subr.mxu0 0.0
        %5548 = vmatpush1.msra.mxu0 0.0
        %5549 = vmatprep.subr.mxu0 0.0
        %5550 = vmatpush1.msra.mxu0 0.0
        %5551 = vmatprep.subr.mxu0 0.0
        %5552 = vmatpush1.msra.mxu0 0.0
        %5553 = vmatprep.subr.mxu0 0.0
        %5554 = vmatpush1.msra.mxu0 0.0
        %5555 = vmatprep.subr.mxu0 0.0
        %5556 = vmatpush1.msra.mxu0 %v5543
        %5557 = vmatprep.subr.mxu0 0.0
        %5558 = vmatpush1.msra.mxu0 %v5536
        %5559 = vmatprep.subr.mxu0 0.0
        %5560 = vmatpush1.msra.mxu0 %v5535
        %5561 = vmatprep.subr.mxu0 0.0
        %5562 = vmatpush1.msra.mxu0 %v5534
        %5563 = vmatprep.subr.mxu0 0.0
        %5564 = vmatpush1.msra.mxu0 %v5533
        %5565 = vmatprep.subr.mxu0 0.0
        %5566 = vmatpush1.msra.mxu0 %v5532
        %5567 = vmatprep.subr.mxu0 0.0
        %5568 = vmatpush1.msra.mxu0 %v5531
        %5569 = vmatprep.subr.mxu0 0.0
        %5570 = vmatpush1.msra.mxu0 %v5530
        %5571 = vmatprep.subr.mxu0 0.0
        %5572 = vmatpush1.msra.mxu0 %v5529
        %5573 = vmatprep.subr.mxu0 0.0
        %5574 = vmatpush1.msra.mxu0 %v5528
        %5575 = vmatprep.subr.mxu0 0.0
        %5576 = vmatpush1.msra.mxu0 %v5527
        %5577 = vmatprep.subr.mxu0 0.0
        %5578 = vmatpush2.msra.mxu0 0.0
        %5579 = vmatprep.subr.mxu0 0.0
        %5580 = vmatpush2.msra.mxu0 0.0
        %5581 = vmatprep.subr.mxu0 0.0
        %5582 = vmatpush2.msra.mxu0 0.0
        %5583 = vmatprep.subr.mxu0 0.0
        %5584 = vmatpush2.msra.mxu0 0.0
        %5585 = vmatprep.subr.mxu0 0.0
        %5586 = vmatpush2.msra.mxu0 0.0
        %5587 = vmatprep.subr.mxu0 0.0
        %5588 = vmatpush2.msra.mxu0 0.0
        %5589 = vmatprep.subr.mxu0 0.0
        %5590 = vmatpush2.msra.mxu0 0.0
        %5591 = vmatprep.subr.mxu0 0.0
        %5592 = vmatpush2.msra.mxu0 0.0
        %5593 = vmatprep.subr.mxu0 0.0
        %5594 = vmatpush2.msra.mxu0 0.0
        %5595 = vmatprep.subr.mxu0 0.0
        %5596 = vmatpush2.msra.mxu0 0.0
        %5597 = vmatprep.subr.mxu0 0.0
        %5598 = vmatpush2.msra.mxu0 0.0
        %5599 = vmatprep.subr.mxu0 0.0
        %5600 = vmatpush2.msra.mxu0 0.0
        %5601 = vmatprep.subr.mxu0 0.0
        %5602 = vmatpush2.msra.mxu0 0.0
        %5603 = vmatprep.subr.mxu0 0.0
        %5604 = vmatpush2.msra.mxu0 0.0
        %5605 = vmatprep.subr.mxu0 0.0
        %5606 = vmatpush2.msra.mxu0 0.0
        %5607 = vmatprep.subr.mxu0 0.0
        %5608 = vmatpush2.msra.mxu0 0.0
        %5609 = vmatprep.mubr.f32.mxu0 0.0
        %5610 = vmatmul.mubr.f32.gmra.mxu0 %v5540
        %v5611 = vpop.f32.mrf.mxu0
        %v5612 = vadd.f32 %v5538, %v5611
        %v5613 = vpop.f32.mrf.mxu0
        %5614 = vdwg.mxu0
        %vm5615 = vcmask 73728
        %5616 = vst.msk [vmem:[%s486] sm:$0x1] %vm5615, %v5612
        %s5617 = sand.u32 %s357, 1
        %s5618 = scalar_lea.sflag [#allocation4], %s5617
        %s5619 = sand.u32 %s357, 1
        %s5620 = scalar_lea.vmem [#allocation3], %s5619
        // Predicated region
        $region81: #{lenet_forward.1} parent=79 // pred_check
          %p5621 = pneg %p367
        $region82: #{lenet_forward.1} parent=79 // pred_check_branch
          %5623 = sbr.rel (%p5621) target = $region84
        $region83: #{lenet_forward.1} parent=79 // pred_region
          %s5625 = ssub.s32 16, 16
          %5626 = vsyncadd %s5618, %s5625
          %s5627 = smul.addr %s29, 16
          %s5628 = scalar_lea.hbm %s15, %s5627
          %s5630 = sshll.u32 %s5620, 4
          %s5631 = int_to_ptr.vmem [resolvable:$true] %s5630
          %5633 = dma.vmem_to_hbm [thread:$0]  %s5631, 16, %s5628, %s5618
        $region84: #{lenet_forward.1} parent=79 // pred_fallthru
          _
      $region80: #{lenet_forward.1} parent=5 // pred_fallthru
        _
      %p5634 = scmp.le.s32.totalorder 2, %s24
      // Predicated region
      $region85: #{lenet_forward.1} parent=5 // pred_check
        %p5635 = pneg %p5634
      $region86: #{lenet_forward.1} parent=5 // pred_check_branch
        %5637 = sbr.rel (%p5635) target = $region88
      $region87: #{lenet_forward.1} parent=5 // pred_region
        %s5638 = ssub.s32 %s24, 2
        // Predicated region
        $region89: #{lenet_forward.1} parent=87 // pred_check
          %p5639 = pneg %p373
        $region90: #{lenet_forward.1} parent=87 // pred_check_branch
          %5641 = sbr.rel (%p5639) target = $region92
        $region91: #{lenet_forward.1} parent=87 // pred_region
          %s5642 = sand.u32 %s358, 1
          %s5643 = scalar_lea.sflag [#allocation4], %s5642
          %s5644 = sand.u32 %s358, 1
          %s5645 = scalar_lea.vmem [#allocation3], %s5644
          %5646 = dma.done %s5643, 16
        $region92: #{lenet_forward.1} parent=87 // pred_fallthru
          _
      $region88: #{lenet_forward.1} parent=5 // pred_fallthru
        _
    $region6: #{lenet_forward.1} parent=1 // loop_footer
      %s28 = sadd.s32 1, %s24
    $region7: #{lenet_forward.1} parent=1 // loop_footer_branch
      %23 = sbr.rel target = $region3
    $region8: #{lenet_forward.1} parent=1 // loop_exit
      _
    %5647 = vsyncpa [#allocation4], 1
    %s5648 = scalar_lea.sflag [#allocation4], 1
    %5649 = vsyncpa %s5648, 1

</llo_original>
